<compile_context>
chip_gen: v6e
topology: v6e:2x2x1
jax: 0.10.0
libtpu: 0.0.40
codegen_flags: <defaults>
</compile_context>

<pallas_src>
import jax
import jax.numpy as jnp
from jax.experimental import pallas as pl
from jax.experimental.pallas import tpu as pltpu


# layer sizes (from the PyTorch module)
H1 = 4608
H2 = 2048
H3 = 128

# fc2 tiling: grid = (H2 // TN2,) = (2,) over the output (N) axis only.
NBLK = 2
TN2 = H2 // NBLK          # 1024
CK = 1152                 # in-kernel K chunk for dequantization (H1 // 4)


# ----------------------------------------------------------------------------
# Kernel A: fused  h1 = relu(x @ w1 + b1) ;  h2 = relu((h1 @ deq(w2q)) * s2 + b2)
#           w2 streamed as contiguous int8 N-blocks; f32 accumulation.
# ----------------------------------------------------------------------------
def _fc12_kernel(x_ref, w1_ref, b1_ref, w2q_ref, s2_ref, b2_ref, o_ref, h1_ref):
    # fc1 is tiny -> recompute per N block so the N axis can be sharded across
    # TensorCores (v7x megacore) with no cross-block dependence.
    a1 = jnp.dot(x_ref[...], w1_ref[...], preferred_element_type=jnp.float32)
    h1_ref[...] = jnp.maximum(a1 + b1_ref[...], 0.0).astype(h1_ref.dtype)

    def body(c, acc):
        start = pl.multiple_of(c * CK, 128)
        # int8 -> f32 -> bf16 is exact for |q| <= 127; chunked so the dequant
        # intermediate stays a few MiB of VMEM.
        w = w2q_ref[pl.ds(start, CK), :].astype(jnp.float32).astype(jnp.bfloat16)
        hs = h1_ref[:, pl.ds(start, CK)]
        return acc + jnp.dot(hs, w, preferred_element_type=jnp.float32)

    acc = jax.lax.fori_loop(0, H1 // CK, body, jnp.zeros(o_ref.shape, jnp.float32))
    # per-output-column dequant scale applied to the f32 dot result
    a2 = acc * s2_ref[...] + b2_ref[...]
    o_ref[...] = jnp.maximum(a2, 0.0).astype(o_ref.dtype)


def fc12(x, w1, b1, w2q, s2, b2):
    B, K1 = x.shape
    assert w1.shape == (K1, H1)
    assert w2q.shape == (NBLK, H1, TN2) and w2q.dtype == jnp.int8

    flops = 2 * B * (K1 * H1 + H1 * H2)
    bytes_accessed = (w2q.size            # int8 weights
                      + w1.size * 2       # bf16
                      + (b1.size + b2.size + s2.size) * 4
                      + x.size * 2 + B * H2 * 2)

    return pl.pallas_call(
        _fc12_kernel,
        out_shape=jax.ShapeDtypeStruct((B, H2), jnp.bfloat16),
        grid_spec=pltpu.PrefetchScalarGridSpec(
            num_scalar_prefetch=0,
            grid=(NBLK,),
            in_specs=[
                pl.BlockSpec((B, K1), lambda j: (0, 0)),          # x   (resident)
                pl.BlockSpec((K1, H1), lambda j: (0, 0)),         # w1  (resident)
                pl.BlockSpec((1, H1), lambda j: (0, 0)),          # b1  (resident)
                pl.BlockSpec((None, H1, TN2), lambda j: (j, 0, 0)),  # w2q (contiguous stream)
                pl.BlockSpec((1, TN2), lambda j: (0, j)),         # s2  (dequant scales)
                pl.BlockSpec((1, TN2), lambda j: (0, j)),         # b2
            ],
            out_specs=pl.BlockSpec((B, TN2), lambda j: (0, j)),
            scratch_shapes=[
                pltpu.VMEM((B, H1), jnp.bfloat16),                # h1 activations
            ],
        ),
        compiler_params=pltpu.CompilerParams(
            dimension_semantics=("parallel",),
            vmem_limit_bytes=40 * 1024 * 1024,
        ),
        cost_estimate=pl.CostEstimate(
            flops=flops, bytes_accessed=bytes_accessed, transcendentals=0),
    )(x, w1, b1, w2q, s2, b2)


# ----------------------------------------------------------------------------
# Kernel B: fused  h3 = h2 @ w3 + b3 ;  l2 = h3 * rsqrt(sum(h3^2)) ;
#           loss = mean(|1 - diag(l2 @ y^T)|)
# ----------------------------------------------------------------------------
def _fc3_norm_loss_kernel(h2_ref, w3_ref, b3_ref, y_ref, l2_ref, loss_ref):
    a3 = jnp.dot(h2_ref[...], w3_ref[...], preferred_element_type=jnp.float32)
    a3 = a3 + b3_ref[...]
    sumsq = jnp.sum(a3 * a3, axis=1, keepdims=True)               # (B, 1)
    inv_norm = jax.lax.rsqrt(jnp.maximum(sumsq, 1e-24))           # EUP; eps guard
    l2 = a3 * inv_norm
    l2_ref[...] = l2
    diag = jnp.sum(l2 * y_ref[...], axis=1, keepdims=True)        # diag(l2 @ y^T)
    loss_ref[...] = jnp.sum(jnp.abs(1.0 - diag), axis=0, keepdims=True) / a3.shape[0]


def fc3_norm_loss(h2, w3, b3, y):
    B = h2.shape[0]
    flops = 2 * B * H2 * H3 + 8 * B * H3
    bytes_accessed = w3.size * 2 + h2.size * 2 + (b3.size + y.size) * 4 + B * H3 * 4 + 4
    vmem = pl.BlockSpec(memory_space=pltpu.MemorySpace.VMEM)
    l2, loss = pl.pallas_call(
        _fc3_norm_loss_kernel,
        out_shape=(
            jax.ShapeDtypeStruct((B, H3), jnp.float32),
            jax.ShapeDtypeStruct((1, 1), jnp.float32),
        ),
        in_specs=[vmem, vmem, vmem, vmem],
        out_specs=(vmem, vmem),
        cost_estimate=pl.CostEstimate(
            flops=flops, bytes_accessed=bytes_accessed, transcendentals=B),
    )(h2, w3, b3, y)
    return loss[0, 0], l2


# ----------------------------------------------------------------------------
# Full network
# ----------------------------------------------------------------------------
def net_forward(x, y, params):
    B = x.shape[0]
    x = x.reshape(B, -1).astype(jnp.bfloat16)            # x.view(B, -1)
    # drop1 / drop2: identity (eval mode)
    h2 = fc12(x, params["w1"], params["b1"], params["w2q"], params["s2"], params["b2"])
    loss, l2_norm = fc3_norm_loss(h2, params["w3"], params["b3"], y)
    return loss, l2_norm


def net_reference(x, y, params):
    """Pure-JAX f32 reference using the SAME effective (quantized) weights."""
    B = x.shape[0]
    x = x.reshape(B, -1).astype(jnp.float32)
    w1 = params["w1"].astype(jnp.float32)
    w2 = (params["w2q"].astype(jnp.float32)
          .transpose(1, 0, 2).reshape(H1, H2)) * params["s2"]
    w3 = params["w3"].astype(jnp.float32)
    h1 = jnp.maximum(x @ w1 + params["b1"], 0.0)
    h2 = jnp.maximum(h1 @ w2 + params["b2"], 0.0)
    h3 = h2 @ w3 + params["b3"]
    norm = jnp.maximum(jnp.linalg.norm(h3, axis=1, keepdims=True), 1e-12)
    l2 = h3 / norm
    diag = jnp.sum(l2 * y, axis=1)
    loss = jnp.mean(jnp.abs(1.0 - diag))
    return loss, l2


def init_params(key, posebit_count):
    ks = jax.random.split(key, 6)

    def lin_f32(kw, kb, fan_in, fan_out):
        scale = 1.0 / jnp.sqrt(jnp.float32(fan_in))
        w = jax.random.normal(kw, (fan_in, fan_out), jnp.float32) * scale
        b = jax.random.normal(kb, (1, fan_out), jnp.float32) * scale
        return w, b

    w1, b1 = lin_f32(ks[0], ks[1], posebit_count, H1)
    w2, b2 = lin_f32(ks[2], ks[3], H1, H2)
    w3, b3 = lin_f32(ks[4], ks[5], H2, H3)

    # int8 symmetric per-output-column quantization of w2 (dominant HBM bytes)
    absmax = jnp.max(jnp.abs(w2), axis=0, keepdims=True)          # (1, H2)
    s2 = jnp.maximum(absmax, 1e-12) / 127.0                        # (1, H2) f32
    w2q = jnp.clip(jnp.round(w2 / s2), -127, 127).astype(jnp.int8)  # (H1, H2)
    # relayout to (NBLK, H1, TN2) so each N block is one contiguous HBM region
    w2q = w2q.reshape(H1, NBLK, TN2).transpose(1, 0, 2)

    return dict(
        w1=w1.astype(jnp.bfloat16), b1=b1,
        w2q=w2q, s2=s2, b2=b2,
        w3=w3.astype(jnp.bfloat16), b3=b3,
    )


if __name__ == "__main__":
    B = 2
    POSEBIT_COUNT = 32

    key = jax.random.PRNGKey(0)
    k_x, k_y, k_p = jax.random.split(key, 3)

    x = jax.random.normal(k_x, (B, POSEBIT_COUNT), jnp.float32)
    y = jax.random.normal(k_y, (B, H3), jnp.float32)
    # normalise targets so the cosine loss is meaningful (not required for correctness)
    y = y / jnp.linalg.norm(y, axis=1, keepdims=True)

    params = init_params(k_p, POSEBIT_COUNT)

    loss, l2_norm = jax.jit(net_forward)(x, y, params)
    jax.block_until_ready((loss, l2_norm))

    # correctness check vs pure-JAX reference (same quantized weights;
    # generous tolerance for bf16 activations / bf16 w1,w3)
    ref_loss, ref_l2 = net_reference(x, y, params)

    assert l2_norm.shape == (B, H3)
    assert loss.shape == ()
    assert bool(jnp.isfinite(loss))
    assert bool(jnp.max(jnp.abs(l2_norm - ref_l2)) < 5e-2)
    assert bool(jnp.abs(loss - ref_loss) < 5e-2)
    print("KERNEL_OK")
</pallas_src>

<mosaic_0001>
module attributes {stable_mosaic.version = 11 : i64} {
  func.func @_fc12_kernel(%arg0: i32, %arg1: memref<2x32xbf16, #tpu.memory_space<vmem>>, %arg2: memref<32x4608xbf16, #tpu.memory_space<vmem>>, %arg3: memref<1x4608xf32, #tpu.memory_space<vmem>>, %arg4: memref<1x4608x1024xi8, #tpu.memory_space<vmem>>, %arg5: memref<1x1024xf32, #tpu.memory_space<vmem>>, %arg6: memref<1x1024xf32, #tpu.memory_space<vmem>>, %arg7: memref<2x1024xbf16, #tpu.memory_space<vmem>>, %arg8: memref<2x4608xbf16, #tpu.memory_space<vmem>>) attributes {dimension_semantics = [#tpu.dimension_semantics<parallel>], iteration_bounds = array<i64: 2>, scalar_prefetch = 0 : i64, scratch_operands = 1 : i64, tpu.core_type = #tpu.core_type<tc>, window_params = [{pipeline_mode = #tpu.pipeline_mode<synchronous>, transform_indices = @transform_0, window_bounds = array<i64: 2, 32>}, {pipeline_mode = #tpu.pipeline_mode<synchronous>, transform_indices = @transform_1, window_bounds = array<i64: 32, 4608>}, {pipeline_mode = #tpu.pipeline_mode<synchronous>, transform_indices = @transform_2, window_bounds = array<i64: 1, 4608>}, {transform_indices = @transform_3, window_bounds = array<i64: 1, 4608, 1024>}, {transform_indices = @transform_4, window_bounds = array<i64: 1, 1024>}, {transform_indices = @transform_5, window_bounds = array<i64: 1, 1024>}, {transform_indices = @transform_6, window_bounds = array<i64: 2, 1024>}]} {
    %c0 = arith.constant 0 : index
    %c0_0 = arith.constant 0 : index
    %0 = vector.load %arg1[%c0, %c0_0] : memref<2x32xbf16, #tpu.memory_space<vmem>>, vector<2x32xbf16>
    %c0_1 = arith.constant 0 : index
    %c0_2 = arith.constant 0 : index
    %1 = vector.load %arg2[%c0_1, %c0_2] : memref<32x4608xbf16, #tpu.memory_space<vmem>>, vector<32x4608xbf16>
    %cst = arith.constant dense<0.000000e+00> : vector<2x4608xf32>
    %2 = tpu.matmul %0, %1, %cst {dimension_numbers = #tpu.dot_dimension_numbers<[1], [0], [0], [1], [0, 0, 1, 1], [], []>} : vector<2x32xbf16>, vector<32x4608xbf16>, vector<2x4608xf32> -> vector<2x4608xf32>
    %c0_3 = arith.constant 0 : index
    %c0_4 = arith.constant 0 : index
    %3 = vector.load %arg3[%c0_3, %c0_4] : memref<1x4608xf32, #tpu.memory_space<vmem>>, vector<1x4608xf32>
    %4 = vector.broadcast %3 : vector<1x4608xf32> to vector<2x4608xf32>
    %5 = arith.addf %2, %4 : vector<2x4608xf32>
    %cst_5 = arith.constant 0.000000e+00 : f32
    %6 = vector.broadcast %cst_5 : f32 to vector<2x4608xf32>
    %7 = arith.maximumf %5, %6 : vector<2x4608xf32>
    %8 = arith.truncf %7 : vector<2x4608xf32> to vector<2x4608xbf16>
    %c0_6 = arith.constant 0 : index
    %c0_7 = arith.constant 0 : index
    %9 = vector.load %arg8[%c0_6, %c0_7] : memref<2x4608xbf16, #tpu.memory_space<vmem>>, vector<2x4608xbf16>
    tpu.vector_store %arg8[%c0_6, %c0_7], %8 {strides = array<i32>} : memref<2x4608xbf16, #tpu.memory_space<vmem>>, vector<2x4608xbf16>,
    %cst_8 = arith.constant 0.000000e+00 : f32
    %10 = vector.broadcast %cst_8 : f32 to vector<2x1024xf32>
    %c0_i32 = arith.constant 0 : i32
    %c4_i32 = arith.constant 4 : i32
    %11 = arith.addi %c0_i32, %c4_i32 : i32
    %c1_i32 = arith.constant 1 : i32
    %12 = scf.for %arg9 = %c0_i32 to %11 step %c1_i32 iter_args(%arg10 = %10) -> (vector<2x1024xf32>)  : i32 {
      %c1152_i32 = arith.constant 1152 : i32
      %23 = arith.muli %arg9, %c1152_i32 : i32
      %24 = tpu.assume_multiple %23, 128 : i32
      %c0_17 = arith.constant 0 : index
      %25 = arith.index_cast %24 : i32 to index
      %c0_18 = arith.constant 0 : index
      %26 = vector.load %arg4[%c0_17, %25, %c0_18] : memref<1x4608x1024xi8, #tpu.memory_space<vmem>>, vector<1x1152x1024xi8>
      %27 = vector.shape_cast %26 : vector<1x1152x1024xi8> to vector<1152x1024xi8>
      %28 = arith.sitofp %27 : vector<1152x1024xi8> to vector<1152x1024xf32>
      %29 = arith.truncf %28 : vector<1152x1024xf32> to vector<1152x1024xbf16>
      %c0_19 = arith.constant 0 : index
      %30 = arith.index_cast %24 : i32 to index
      %31 = vector.load %arg8[%c0_19, %30] : memref<2x4608xbf16, #tpu.memory_space<vmem>>, vector<2x1152xbf16>
      %cst_20 = arith.constant dense<0.000000e+00> : vector<2x1024xf32>
      %32 = tpu.matmul %31, %29, %cst_20 {dimension_numbers = #tpu.dot_dimension_numbers<[1], [0], [0], [1], [0, 0, 1, 1], [], []>} : vector<2x1152xbf16>, vector<1152x1024xbf16>, vector<2x1024xf32> -> vector<2x1024xf32>
      %33 = arith.addf %arg10, %32 : vector<2x1024xf32>
      scf.yield %33 : vector<2x1024xf32>
    }
    %c4_i32_9 = arith.constant 4 : i32
    %c0_10 = arith.constant 0 : index
    %c0_11 = arith.constant 0 : index
    %13 = vector.load %arg5[%c0_10, %c0_11] : memref<1x1024xf32, #tpu.memory_space<vmem>>, vector<1x1024xf32>
    %14 = vector.broadcast %13 : vector<1x1024xf32> to vector<2x1024xf32>
    %15 = arith.mulf %12, %14 : vector<2x1024xf32>
    %c0_12 = arith.constant 0 : index
    %c0_13 = arith.constant 0 : index
    %16 = vector.load %arg6[%c0_12, %c0_13] : memref<1x1024xf32, #tpu.memory_space<vmem>>, vector<1x1024xf32>
    %17 = vector.broadcast %16 : vector<1x1024xf32> to vector<2x1024xf32>
    %18 = arith.addf %15, %17 : vector<2x1024xf32>
    %cst_14 = arith.constant 0.000000e+00 : f32
    %19 = vector.broadcast %cst_14 : f32 to vector<2x1024xf32>
    %20 = arith.maximumf %18, %19 : vector<2x1024xf32>
    %21 = arith.truncf %20 : vector<2x1024xf32> to vector<2x1024xbf16>
    %c0_15 = arith.constant 0 : index
    %c0_16 = arith.constant 0 : index
    %22 = vector.load %arg7[%c0_15, %c0_16] : memref<2x1024xbf16, #tpu.memory_space<vmem>>, vector<2x1024xbf16>
    tpu.vector_store %arg7[%c0_15, %c0_16], %21 {strides = array<i32>} : memref<2x1024xbf16, #tpu.memory_space<vmem>>, vector<2x1024xbf16>,
    return
  }
  func.func @transform_0(%arg0: i32) -> (i32, i32) {
    %c0_i32 = arith.constant 0 : i32
    %c0_i32_0 = arith.constant 0 : i32
    %c0_i32_1 = arith.constant 0 : i32
    return %c0_i32, %c0_i32_0 : i32, i32
  }
  func.func @transform_1(%arg0: i32) -> (i32, i32) {
    %c0_i32 = arith.constant 0 : i32
    %c0_i32_0 = arith.constant 0 : i32
    %c0_i32_1 = arith.constant 0 : i32
    return %c0_i32, %c0_i32_0 : i32, i32
  }
  func.func @transform_2(%arg0: i32) -> (i32, i32) {
    %c0_i32 = arith.constant 0 : i32
    %c0_i32_0 = arith.constant 0 : i32
    %c0_i32_1 = arith.constant 0 : i32
    return %c0_i32, %c0_i32_0 : i32, i32
  }
  func.func @transform_3(%arg0: i32) -> (i32, i32, i32) {
    %c0_i32 = arith.constant 0 : i32
    %c0_i32_0 = arith.constant 0 : i32
    %c0_i32_1 = arith.constant 0 : i32
    return %arg0, %c0_i32, %c0_i32_0 : i32, i32, i32
  }
  func.func @transform_4(%arg0: i32) -> (i32, i32) {
    %c0_i32 = arith.constant 0 : i32
    %c0_i32_0 = arith.constant 0 : i32
    return %c0_i32, %arg0 : i32, i32
  }
  func.func @transform_5(%arg0: i32) -> (i32, i32) {
    %c0_i32 = arith.constant 0 : i32
    %c0_i32_0 = arith.constant 0 : i32
    return %c0_i32, %arg0 : i32, i32
  }
  func.func @transform_6(%arg0: i32) -> (i32, i32) {
    %c0_i32 = arith.constant 0 : i32
    %c0_i32_0 = arith.constant 0 : i32
    return %c0_i32, %arg0 : i32, i32
  }
}

module attributes {stable_mosaic.version = 11 : i64} {
  func.func @_fc3_norm_loss_kernel(%arg0: memref<2x2048xbf16, #tpu.memory_space<vmem>>, %arg1: memref<2048x128xbf16, #tpu.memory_space<vmem>>, %arg2: memref<1x128xf32, #tpu.memory_space<vmem>>, %arg3: memref<2x128xf32, #tpu.memory_space<vmem>>, %arg4: memref<2x128xf32, #tpu.memory_space<vmem>>, %arg5: memref<1x1xf32, #tpu.memory_space<vmem>>) attributes {dimension_semantics = [], scalar_prefetch = 0 : i64, scratch_operands = 0 : i64, tpu.core_type = #tpu.core_type<tc>} {
    %c0 = arith.constant 0 : index
    %c0_0 = arith.constant 0 : index
    %0 = vector.load %arg0[%c0, %c0_0] : memref<2x2048xbf16, #tpu.memory_space<vmem>>, vector<2x2048xbf16>
    %c0_1 = arith.constant 0 : index
    %c0_2 = arith.constant 0 : index
    %1 = vector.load %arg1[%c0_1, %c0_2] : memref<2048x128xbf16, #tpu.memory_space<vmem>>, vector<2048x128xbf16>
    %cst = arith.constant dense<0.000000e+00> : vector<2x128xf32>
    %2 = tpu.matmul %0, %1, %cst {dimension_numbers = #tpu.dot_dimension_numbers<[1], [0], [0], [1], [0, 0, 1, 1], [], []>} : vector<2x2048xbf16>, vector<2048x128xbf16>, vector<2x128xf32> -> vector<2x128xf32>
    %c0_3 = arith.constant 0 : index
    %c0_4 = arith.constant 0 : index
    %3 = vector.load %arg2[%c0_3, %c0_4] : memref<1x128xf32, #tpu.memory_space<vmem>>, vector<1x128xf32>
    %4 = vector.broadcast %3 : vector<1x128xf32> to vector<2x128xf32>
    %5 = arith.addf %2, %4 : vector<2x128xf32>
    %6 = arith.mulf %5, %5 : vector<2x128xf32>
    %cst_5 = arith.constant dense<0.000000e+00> : vector<2xf32>
    %7 = vector.multi_reduction <add>, %6, %cst_5 [1] : vector<2x128xf32> to vector<2xf32>
    %8 = vector.shape_cast %7 : vector<2xf32> to vector<2x1xf32>
    %cst_6 = arith.constant 1.000000e-24 : f32
    %9 = vector.broadcast %cst_6 : f32 to vector<2x1xf32>
    %10 = arith.maximumf %8, %9 : vector<2x1xf32>
    %11 = math.rsqrt %10 : vector<2x1xf32>
    %12 = vector.broadcast %11 : vector<2x1xf32> to vector<2x128xf32>
    %13 = arith.mulf %5, %12 : vector<2x128xf32>
    %c0_7 = arith.constant 0 : index
    %c0_8 = arith.constant 0 : index
    %14 = vector.load %arg4[%c0_7, %c0_8] : memref<2x128xf32, #tpu.memory_space<vmem>>, vector<2x128xf32>
    tpu.vector_store %arg4[%c0_7, %c0_8], %13 {strides = array<i32>} : memref<2x128xf32, #tpu.memory_space<vmem>>, vector<2x128xf32>,
    %c0_9 = arith.constant 0 : index
    %c0_10 = arith.constant 0 : index
    %15 = vector.load %arg3[%c0_9, %c0_10] : memref<2x128xf32, #tpu.memory_space<vmem>>, vector<2x128xf32>
    %16 = arith.mulf %13, %15 : vector<2x128xf32>
    %cst_11 = arith.constant dense<0.000000e+00> : vector<2xf32>
    %17 = vector.multi_reduction <add>, %16, %cst_11 [1] : vector<2x128xf32> to vector<2xf32>
    %18 = vector.shape_cast %17 : vector<2xf32> to vector<2x1xf32>
    %cst_12 = arith.constant 1.000000e+00 : f32
    %19 = vector.broadcast %cst_12 : f32 to vector<2x1xf32>
    %20 = arith.subf %19, %18 : vector<2x1xf32>
    %21 = math.absf %20 : vector<2x1xf32>
    %cst_13 = arith.constant dense<0.000000e+00> : vector<1xf32>
    %22 = vector.multi_reduction <add>, %21, %cst_13 [0] : vector<2x1xf32> to vector<1xf32>
    %23 = vector.shape_cast %22 : vector<1xf32> to vector<1x1xf32>
    %cst_14 = arith.constant 2.000000e+00 : f32
    %24 = vector.broadcast %cst_14 : f32 to vector<1x1xf32>
    %25 = arith.divf %23, %24 : vector<1x1xf32>
    %c0_15 = arith.constant 0 : index
    %c0_16 = arith.constant 0 : index
    %26 = vector.load %arg5[%c0_15, %c0_16] : memref<1x1xf32, #tpu.memory_space<vmem>>, vector<1x1xf32>
    tpu.vector_store %arg5[%c0_15, %c0_16], %25 {strides = array<i32>} : memref<1x1xf32, #tpu.memory_space<vmem>>, vector<1x1xf32>,
    return
  }
}

</mosaic_0001>

<llo_original>
// kernel: net_forward.3
$region0: #{net_forward.3}
  #allocation0 [shape = 'u32[]', space=smem, size = 0x4, offset = 0x4, fixed_abs, tag = 'smem constant byte address 0x4 - core index']
  #allocation1 [shape = 'u32[144,128]{1,0:T(1,128)}', space=vmem, size = 0x12000, scoped, tag = 'internal scratch']
  %s0 = inlined_call_operand.vmem [shape: bf16[2,2048], index: 0, kind: input, shape index: {}]
  %s1 = inlined_call_operand.vmem [shape: bf16[2048,128], index: 1, kind: input, shape index: {}]
  %s2 = inlined_call_operand.vmem [shape: f32[1,128], index: 2, kind: input, shape index: {}]
  %s3 = inlined_call_operand.vmem [shape: f32[2,128], index: 3, kind: input, shape index: {}]
  %s4 = inlined_call_operand.hbm [shape: f32[2,128], index: 4, kind: output, shape index: {0}]
  %s5 = inlined_call_operand.hbm [shape: f32[1,1], index: 5, kind: output, shape index: {1}]
  %6 = xla_tuple %s4, %s5
  %s7 = sld [smem:[#allocation0]]
  $region34: #{net_forward.3} parent=0
    _
  %s9 = ssub.s32 1, %s7
  %s10 = scalar_select 0, %s9, %s7
  $region1: #{net_forward.3} parent=0
    #allocation2 [shape = 'u8[1024]{0}', space=vmem, size = 0x400, scoped, tag = 'output window, operand 0, single buffered']
    #allocation3 [shape = 's32[1]{0}', space=sflag, size = 0x4, scoped, tag = 'scoped memory for net_forward.3']
    #allocation4 [shape = 'u8[512]{0}', space=vmem, size = 0x400, scoped, tag = 'output window, operand 1, single buffered']
    #allocation5 [shape = 's32[1]{0}', space=sflag, size = 0x4, scoped, tag = 'scoped memory for net_forward.3']
    %11 = vsyncpa [#allocation3], 0
    %12 = vsyncpa [#allocation5], 0
    // Predicated region
    $region2: #{net_forward.3} parent=1 // pred_check
      _
    $region3: #{net_forward.3} parent=1 // pred_check_branch
      %14 = sbr.rel (0) target = $region5
    $region4: #{net_forward.3} parent=1 // pred_region
      _
    $region5: #{net_forward.3} parent=1 // pred_fallthru
      _
    // Predicated region
    $region6: #{net_forward.3} parent=1 // pred_check
      _
    $region7: #{net_forward.3} parent=1 // pred_check_branch
      %16 = sbr.rel (0) target = $region9
    $region8: #{net_forward.3} parent=1 // pred_region
      _
    $region9: #{net_forward.3} parent=1 // pred_fallthru
      _
    // Predicated region
    $region10: #{net_forward.3} parent=1 // pred_check
      _
    $region11: #{net_forward.3} parent=1 // pred_check_branch
      %18 = sbr.rel (0) target = $region13
    $region12: #{net_forward.3} parent=1 // pred_region
      _
    $region13: #{net_forward.3} parent=1 // pred_fallthru
      _
    // Predicated region
    $region14: #{net_forward.3} parent=1 // pred_check
      _
    $region15: #{net_forward.3} parent=1 // pred_check_branch
      %20 = sbr.rel (0) target = $region17
    $region16: #{net_forward.3} parent=1 // pred_region
      _
    $region17: #{net_forward.3} parent=1 // pred_fallthru
      _
    %v22 = vld [vmem:[%s0] sm:$0xff]
    %v23 = vld [vmem:[%s0 + $0x8] sm:$0xff]
    %v24 = vld [vmem:[%s1] sm:$0xf]
    %v25 = vld [vmem:[%s1 + $0x4] sm:$0xf]
    %v26 = vld [vmem:[%s1 + $0x8] sm:$0xf]
    %v27 = vld [vmem:[%s1 + $0xc] sm:$0xf]
    %v28 = vld [vmem:[%s1 + $0x10] sm:$0xf]
    %v29 = vld [vmem:[%s1 + $0x14] sm:$0xf]
    %v30 = vld [vmem:[%s1 + $0x18] sm:$0xf]
    %v31 = vld [vmem:[%s1 + $0x1c] sm:$0xf]
    %v32 = vld [vmem:[%s1 + $0x20] sm:$0xf]
    %v33 = vld [vmem:[%s1 + $0x24] sm:$0xf]
    %v34 = vld [vmem:[%s1 + $0x28] sm:$0xf]
    %v35 = vld [vmem:[%s1 + $0x2c] sm:$0xf]
    %v36 = vld [vmem:[%s1 + $0x30] sm:$0xf]
    %v37 = vld [vmem:[%s1 + $0x34] sm:$0xf]
    %v38 = vld [vmem:[%s1 + $0x38] sm:$0xf]
    %v39 = vld [vmem:[%s1 + $0x3c] sm:$0xf]
    %v40 = vld [vmem:[%s1 + $0x40] sm:$0xf]
    %v41 = vld [vmem:[%s1 + $0x44] sm:$0xf]
    %v42 = vld [vmem:[%s1 + $0x48] sm:$0xf]
    %v43 = vld [vmem:[%s1 + $0x4c] sm:$0xf]
    %v44 = vld [vmem:[%s1 + $0x50] sm:$0xf]
    %v45 = vld [vmem:[%s1 + $0x54] sm:$0xf]
    %v46 = vld [vmem:[%s1 + $0x58] sm:$0xf]
    %v47 = vld [vmem:[%s1 + $0x5c] sm:$0xf]
    %v48 = vld [vmem:[%s1 + $0x60] sm:$0xf]
    %v49 = vld [vmem:[%s1 + $0x64] sm:$0xf]
    %v50 = vld [vmem:[%s1 + $0x68] sm:$0xf]
    %v51 = vld [vmem:[%s1 + $0x6c] sm:$0xf]
    %v52 = vld [vmem:[%s1 + $0x70] sm:$0xf]
    %v53 = vld [vmem:[%s1 + $0x74] sm:$0xf]
    %v54 = vld [vmem:[%s1 + $0x78] sm:$0xf]
    %v55 = vld [vmem:[%s1 + $0x7c] sm:$0xf]
    %v56 = vld [vmem:[%s1 + $0x80] sm:$0xf]
    %v57 = vld [vmem:[%s1 + $0x84] sm:$0xf]
    %v58 = vld [vmem:[%s1 + $0x88] sm:$0xf]
    %v59 = vld [vmem:[%s1 + $0x8c] sm:$0xf]
    %v60 = vld [vmem:[%s1 + $0x90] sm:$0xf]
    %v61 = vld [vmem:[%s1 + $0x94] sm:$0xf]
    %v62 = vld [vmem:[%s1 + $0x98] sm:$0xf]
    %v63 = vld [vmem:[%s1 + $0x9c] sm:$0xf]
    %v64 = vld [vmem:[%s1 + $0xa0] sm:$0xf]
    %v65 = vld [vmem:[%s1 + $0xa4] sm:$0xf]
    %v66 = vld [vmem:[%s1 + $0xa8] sm:$0xf]
    %v67 = vld [vmem:[%s1 + $0xac] sm:$0xf]
    %v68 = vld [vmem:[%s1 + $0xb0] sm:$0xf]
    %v69 = vld [vmem:[%s1 + $0xb4] sm:$0xf]
    %v70 = vld [vmem:[%s1 + $0xb8] sm:$0xf]
    %v71 = vld [vmem:[%s1 + $0xbc] sm:$0xf]
    %v72 = vld [vmem:[%s1 + $0xc0] sm:$0xf]
    %v73 = vld [vmem:[%s1 + $0xc4] sm:$0xf]
    %v74 = vld [vmem:[%s1 + $0xc8] sm:$0xf]
    %v75 = vld [vmem:[%s1 + $0xcc] sm:$0xf]
    %v76 = vld [vmem:[%s1 + $0xd0] sm:$0xf]
    %v77 = vld [vmem:[%s1 + $0xd4] sm:$0xf]
    %v78 = vld [vmem:[%s1 + $0xd8] sm:$0xf]
    %v79 = vld [vmem:[%s1 + $0xdc] sm:$0xf]
    %v80 = vld [vmem:[%s1 + $0xe0] sm:$0xf]
    %v81 = vld [vmem:[%s1 + $0xe4] sm:$0xf]
    %v82 = vld [vmem:[%s1 + $0xe8] sm:$0xf]
    %v83 = vld [vmem:[%s1 + $0xec] sm:$0xf]
    %v84 = vld [vmem:[%s1 + $0xf0] sm:$0xf]
    %v85 = vld [vmem:[%s1 + $0xf4] sm:$0xf]
    %v86 = vld [vmem:[%s1 + $0xf8] sm:$0xf]
    %v87 = vld [vmem:[%s1 + $0xfc] sm:$0xf]
    %v88 = vld [vmem:[%s1 + $0x100] sm:$0xf]
    %v89 = vld [vmem:[%s1 + $0x104] sm:$0xf]
    %v90 = vld [vmem:[%s1 + $0x108] sm:$0xf]
    %v91 = vld [vmem:[%s1 + $0x10c] sm:$0xf]
    %v92 = vld [vmem:[%s1 + $0x110] sm:$0xf]
    %v93 = vld [vmem:[%s1 + $0x114] sm:$0xf]
    %v94 = vld [vmem:[%s1 + $0x118] sm:$0xf]
    %v95 = vld [vmem:[%s1 + $0x11c] sm:$0xf]
    %v96 = vld [vmem:[%s1 + $0x120] sm:$0xf]
    %v97 = vld [vmem:[%s1 + $0x124] sm:$0xf]
    %v98 = vld [vmem:[%s1 + $0x128] sm:$0xf]
    %v99 = vld [vmem:[%s1 + $0x12c] sm:$0xf]
    %v100 = vld [vmem:[%s1 + $0x130] sm:$0xf]
    %v101 = vld [vmem:[%s1 + $0x134] sm:$0xf]
    %v102 = vld [vmem:[%s1 + $0x138] sm:$0xf]
    %v103 = vld [vmem:[%s1 + $0x13c] sm:$0xf]
    %v104 = vld [vmem:[%s1 + $0x140] sm:$0xf]
    %v105 = vld [vmem:[%s1 + $0x144] sm:$0xf]
    %v106 = vld [vmem:[%s1 + $0x148] sm:$0xf]
    %v107 = vld [vmem:[%s1 + $0x14c] sm:$0xf]
    %v108 = vld [vmem:[%s1 + $0x150] sm:$0xf]
    %v109 = vld [vmem:[%s1 + $0x154] sm:$0xf]
    %v110 = vld [vmem:[%s1 + $0x158] sm:$0xf]
    %v111 = vld [vmem:[%s1 + $0x15c] sm:$0xf]
    %v112 = vld [vmem:[%s1 + $0x160] sm:$0xf]
    %v113 = vld [vmem:[%s1 + $0x164] sm:$0xf]
    %v114 = vld [vmem:[%s1 + $0x168] sm:$0xf]
    %v115 = vld [vmem:[%s1 + $0x16c] sm:$0xf]
    %v116 = vld [vmem:[%s1 + $0x170] sm:$0xf]
    %v117 = vld [vmem:[%s1 + $0x174] sm:$0xf]
    %v118 = vld [vmem:[%s1 + $0x178] sm:$0xf]
    %v119 = vld [vmem:[%s1 + $0x17c] sm:$0xf]
    %v120 = vld [vmem:[%s1 + $0x180] sm:$0xf]
    %v121 = vld [vmem:[%s1 + $0x184] sm:$0xf]
    %v122 = vld [vmem:[%s1 + $0x188] sm:$0xf]
    %v123 = vld [vmem:[%s1 + $0x18c] sm:$0xf]
    %v124 = vld [vmem:[%s1 + $0x190] sm:$0xf]
    %v125 = vld [vmem:[%s1 + $0x194] sm:$0xf]
    %v126 = vld [vmem:[%s1 + $0x198] sm:$0xf]
    %v127 = vld [vmem:[%s1 + $0x19c] sm:$0xf]
    %v128 = vld [vmem:[%s1 + $0x1a0] sm:$0xf]
    %v129 = vld [vmem:[%s1 + $0x1a4] sm:$0xf]
    %v130 = vld [vmem:[%s1 + $0x1a8] sm:$0xf]
    %v131 = vld [vmem:[%s1 + $0x1ac] sm:$0xf]
    %v132 = vld [vmem:[%s1 + $0x1b0] sm:$0xf]
    %v133 = vld [vmem:[%s1 + $0x1b4] sm:$0xf]
    %v134 = vld [vmem:[%s1 + $0x1b8] sm:$0xf]
    %v135 = vld [vmem:[%s1 + $0x1bc] sm:$0xf]
    %v136 = vld [vmem:[%s1 + $0x1c0] sm:$0xf]
    %v137 = vld [vmem:[%s1 + $0x1c4] sm:$0xf]
    %v138 = vld [vmem:[%s1 + $0x1c8] sm:$0xf]
    %v139 = vld [vmem:[%s1 + $0x1cc] sm:$0xf]
    %v140 = vld [vmem:[%s1 + $0x1d0] sm:$0xf]
    %v141 = vld [vmem:[%s1 + $0x1d4] sm:$0xf]
    %v142 = vld [vmem:[%s1 + $0x1d8] sm:$0xf]
    %v143 = vld [vmem:[%s1 + $0x1dc] sm:$0xf]
    %v144 = vld [vmem:[%s1 + $0x1e0] sm:$0xf]
    %v145 = vld [vmem:[%s1 + $0x1e4] sm:$0xf]
    %v146 = vld [vmem:[%s1 + $0x1e8] sm:$0xf]
    %v147 = vld [vmem:[%s1 + $0x1ec] sm:$0xf]
    %v148 = vld [vmem:[%s1 + $0x1f0] sm:$0xf]
    %v149 = vld [vmem:[%s1 + $0x1f4] sm:$0xf]
    %v150 = vld [vmem:[%s1 + $0x1f8] sm:$0xf]
    %v151 = vld [vmem:[%s1 + $0x1fc] sm:$0xf]
    %v152 = vld [vmem:[%s1 + $0x200] sm:$0xf]
    %v153 = vld [vmem:[%s1 + $0x204] sm:$0xf]
    %v154 = vld [vmem:[%s1 + $0x208] sm:$0xf]
    %v155 = vld [vmem:[%s1 + $0x20c] sm:$0xf]
    %v156 = vld [vmem:[%s1 + $0x210] sm:$0xf]
    %v157 = vld [vmem:[%s1 + $0x214] sm:$0xf]
    %v158 = vld [vmem:[%s1 + $0x218] sm:$0xf]
    %v159 = vld [vmem:[%s1 + $0x21c] sm:$0xf]
    %v160 = vld [vmem:[%s1 + $0x220] sm:$0xf]
    %v161 = vld [vmem:[%s1 + $0x224] sm:$0xf]
    %v162 = vld [vmem:[%s1 + $0x228] sm:$0xf]
    %v163 = vld [vmem:[%s1 + $0x22c] sm:$0xf]
    %v164 = vld [vmem:[%s1 + $0x230] sm:$0xf]
    %v165 = vld [vmem:[%s1 + $0x234] sm:$0xf]
    %v166 = vld [vmem:[%s1 + $0x238] sm:$0xf]
    %v167 = vld [vmem:[%s1 + $0x23c] sm:$0xf]
    %v168 = vld [vmem:[%s1 + $0x240] sm:$0xf]
    %v169 = vld [vmem:[%s1 + $0x244] sm:$0xf]
    %v170 = vld [vmem:[%s1 + $0x248] sm:$0xf]
    %v171 = vld [vmem:[%s1 + $0x24c] sm:$0xf]
    %v172 = vld [vmem:[%s1 + $0x250] sm:$0xf]
    %v173 = vld [vmem:[%s1 + $0x254] sm:$0xf]
    %v174 = vld [vmem:[%s1 + $0x258] sm:$0xf]
    %v175 = vld [vmem:[%s1 + $0x25c] sm:$0xf]
    %v176 = vld [vmem:[%s1 + $0x260] sm:$0xf]
    %v177 = vld [vmem:[%s1 + $0x264] sm:$0xf]
    %v178 = vld [vmem:[%s1 + $0x268] sm:$0xf]
    %v179 = vld [vmem:[%s1 + $0x26c] sm:$0xf]
    %v180 = vld [vmem:[%s1 + $0x270] sm:$0xf]
    %v181 = vld [vmem:[%s1 + $0x274] sm:$0xf]
    %v182 = vld [vmem:[%s1 + $0x278] sm:$0xf]
    %v183 = vld [vmem:[%s1 + $0x27c] sm:$0xf]
    %v184 = vld [vmem:[%s1 + $0x280] sm:$0xf]
    %v185 = vld [vmem:[%s1 + $0x284] sm:$0xf]
    %v186 = vld [vmem:[%s1 + $0x288] sm:$0xf]
    %v187 = vld [vmem:[%s1 + $0x28c] sm:$0xf]
    %v188 = vld [vmem:[%s1 + $0x290] sm:$0xf]
    %v189 = vld [vmem:[%s1 + $0x294] sm:$0xf]
    %v190 = vld [vmem:[%s1 + $0x298] sm:$0xf]
    %v191 = vld [vmem:[%s1 + $0x29c] sm:$0xf]
    %v192 = vld [vmem:[%s1 + $0x2a0] sm:$0xf]
    %v193 = vld [vmem:[%s1 + $0x2a4] sm:$0xf]
    %v194 = vld [vmem:[%s1 + $0x2a8] sm:$0xf]
    %v195 = vld [vmem:[%s1 + $0x2ac] sm:$0xf]
    %v196 = vld [vmem:[%s1 + $0x2b0] sm:$0xf]
    %v197 = vld [vmem:[%s1 + $0x2b4] sm:$0xf]
    %v198 = vld [vmem:[%s1 + $0x2b8] sm:$0xf]
    %v199 = vld [vmem:[%s1 + $0x2bc] sm:$0xf]
    %v200 = vld [vmem:[%s1 + $0x2c0] sm:$0xf]
    %v201 = vld [vmem:[%s1 + $0x2c4] sm:$0xf]
    %v202 = vld [vmem:[%s1 + $0x2c8] sm:$0xf]
    %v203 = vld [vmem:[%s1 + $0x2cc] sm:$0xf]
    %v204 = vld [vmem:[%s1 + $0x2d0] sm:$0xf]
    %v205 = vld [vmem:[%s1 + $0x2d4] sm:$0xf]
    %v206 = vld [vmem:[%s1 + $0x2d8] sm:$0xf]
    %v207 = vld [vmem:[%s1 + $0x2dc] sm:$0xf]
    %v208 = vld [vmem:[%s1 + $0x2e0] sm:$0xf]
    %v209 = vld [vmem:[%s1 + $0x2e4] sm:$0xf]
    %v210 = vld [vmem:[%s1 + $0x2e8] sm:$0xf]
    %v211 = vld [vmem:[%s1 + $0x2ec] sm:$0xf]
    %v212 = vld [vmem:[%s1 + $0x2f0] sm:$0xf]
    %v213 = vld [vmem:[%s1 + $0x2f4] sm:$0xf]
    %v214 = vld [vmem:[%s1 + $0x2f8] sm:$0xf]
    %v215 = vld [vmem:[%s1 + $0x2fc] sm:$0xf]
    %v216 = vld [vmem:[%s1 + $0x300] sm:$0xf]
    %v217 = vld [vmem:[%s1 + $0x304] sm:$0xf]
    %v218 = vld [vmem:[%s1 + $0x308] sm:$0xf]
    %v219 = vld [vmem:[%s1 + $0x30c] sm:$0xf]
    %v220 = vld [vmem:[%s1 + $0x310] sm:$0xf]
    %v221 = vld [vmem:[%s1 + $0x314] sm:$0xf]
    %v222 = vld [vmem:[%s1 + $0x318] sm:$0xf]
    %v223 = vld [vmem:[%s1 + $0x31c] sm:$0xf]
    %v224 = vld [vmem:[%s1 + $0x320] sm:$0xf]
    %v225 = vld [vmem:[%s1 + $0x324] sm:$0xf]
    %v226 = vld [vmem:[%s1 + $0x328] sm:$0xf]
    %v227 = vld [vmem:[%s1 + $0x32c] sm:$0xf]
    %v228 = vld [vmem:[%s1 + $0x330] sm:$0xf]
    %v229 = vld [vmem:[%s1 + $0x334] sm:$0xf]
    %v230 = vld [vmem:[%s1 + $0x338] sm:$0xf]
    %v231 = vld [vmem:[%s1 + $0x33c] sm:$0xf]
    %v232 = vld [vmem:[%s1 + $0x340] sm:$0xf]
    %v233 = vld [vmem:[%s1 + $0x344] sm:$0xf]
    %v234 = vld [vmem:[%s1 + $0x348] sm:$0xf]
    %v235 = vld [vmem:[%s1 + $0x34c] sm:$0xf]
    %v236 = vld [vmem:[%s1 + $0x350] sm:$0xf]
    %v237 = vld [vmem:[%s1 + $0x354] sm:$0xf]
    %v238 = vld [vmem:[%s1 + $0x358] sm:$0xf]
    %v239 = vld [vmem:[%s1 + $0x35c] sm:$0xf]
    %v240 = vld [vmem:[%s1 + $0x360] sm:$0xf]
    %v241 = vld [vmem:[%s1 + $0x364] sm:$0xf]
    %v242 = vld [vmem:[%s1 + $0x368] sm:$0xf]
    %v243 = vld [vmem:[%s1 + $0x36c] sm:$0xf]
    %v244 = vld [vmem:[%s1 + $0x370] sm:$0xf]
    %v245 = vld [vmem:[%s1 + $0x374] sm:$0xf]
    %v246 = vld [vmem:[%s1 + $0x378] sm:$0xf]
    %v247 = vld [vmem:[%s1 + $0x37c] sm:$0xf]
    %v248 = vld [vmem:[%s1 + $0x380] sm:$0xf]
    %v249 = vld [vmem:[%s1 + $0x384] sm:$0xf]
    %v250 = vld [vmem:[%s1 + $0x388] sm:$0xf]
    %v251 = vld [vmem:[%s1 + $0x38c] sm:$0xf]
    %v252 = vld [vmem:[%s1 + $0x390] sm:$0xf]
    %v253 = vld [vmem:[%s1 + $0x394] sm:$0xf]
    %v254 = vld [vmem:[%s1 + $0x398] sm:$0xf]
    %v255 = vld [vmem:[%s1 + $0x39c] sm:$0xf]
    %v256 = vld [vmem:[%s1 + $0x3a0] sm:$0xf]
    %v257 = vld [vmem:[%s1 + $0x3a4] sm:$0xf]
    %v258 = vld [vmem:[%s1 + $0x3a8] sm:$0xf]
    %v259 = vld [vmem:[%s1 + $0x3ac] sm:$0xf]
    %v260 = vld [vmem:[%s1 + $0x3b0] sm:$0xf]
    %v261 = vld [vmem:[%s1 + $0x3b4] sm:$0xf]
    %v262 = vld [vmem:[%s1 + $0x3b8] sm:$0xf]
    %v263 = vld [vmem:[%s1 + $0x3bc] sm:$0xf]
    %v264 = vld [vmem:[%s1 + $0x3c0] sm:$0xf]
    %v265 = vld [vmem:[%s1 + $0x3c4] sm:$0xf]
    %v266 = vld [vmem:[%s1 + $0x3c8] sm:$0xf]
    %v267 = vld [vmem:[%s1 + $0x3cc] sm:$0xf]
    %v268 = vld [vmem:[%s1 + $0x3d0] sm:$0xf]
    %v269 = vld [vmem:[%s1 + $0x3d4] sm:$0xf]
    %v270 = vld [vmem:[%s1 + $0x3d8] sm:$0xf]
    %v271 = vld [vmem:[%s1 + $0x3dc] sm:$0xf]
    %v272 = vld [vmem:[%s1 + $0x3e0] sm:$0xf]
    %v273 = vld [vmem:[%s1 + $0x3e4] sm:$0xf]
    %v274 = vld [vmem:[%s1 + $0x3e8] sm:$0xf]
    %v275 = vld [vmem:[%s1 + $0x3ec] sm:$0xf]
    %v276 = vld [vmem:[%s1 + $0x3f0] sm:$0xf]
    %v277 = vld [vmem:[%s1 + $0x3f4] sm:$0xf]
    %v278 = vld [vmem:[%s1 + $0x3f8] sm:$0xf]
    %v279 = vld [vmem:[%s1 + $0x3fc] sm:$0xf]
    %v280 = vld [vmem:[%s2] sm:$0x1]
    %v282 = vlaneseq
    %v283 = vshrl.u32 %v282, 7
    %v284 = vsub.s32 0, %v283
    %v285 = vrot.slane %v280, %v284
    %v289 = vcombine.high %v22, %v22
    %v291 = vunpack.c.l.s4 1966171168
    %v292 = vunpack.c.0.s8 %v291
    %v293 = vlaneseq
    %v294 = vshrl.u32 %v293, 7
    %v295 = vsub.s32 %v292, %v294
    %v296 = vrot.slane %v22, %v295
    %v298 = vunpack.c.l.s4 1966171168
    %v299 = vunpack.c.0.s8 %v298
    %v300 = vlaneseq
    %v301 = vshrl.u32 %v300, 7
    %v302 = vsub.s32 %v299, %v301
    %v303 = vrot.slane %v289, %v302
    %v304 = vcombine.high %v296, %v296
    %v305 = vcombine.high %v303, %v303
    %v307 = vunpack.c.l.s4 1966171168
    %v308 = vunpack.c.0.s8 %v307
    %v309 = vlaneseq
    %v310 = vshrl.u32 %v309, 7
    %v311 = vsub.s32 %v308, %v310
    %v312 = vrot.slane %v296, %v311
    %v314 = vunpack.c.l.s4 1966171168
    %v315 = vunpack.c.0.s8 %v314
    %v316 = vlaneseq
    %v317 = vshrl.u32 %v316, 7
    %v318 = vsub.s32 %v315, %v317
    %v319 = vrot.slane %v303, %v318
    %v321 = vunpack.c.l.s4 1966171168
    %v322 = vunpack.c.0.s8 %v321
    %v323 = vlaneseq
    %v324 = vshrl.u32 %v323, 7
    %v325 = vsub.s32 %v322, %v324
    %v326 = vrot.slane %v304, %v325
    %v328 = vunpack.c.l.s4 1966171168
    %v329 = vunpack.c.0.s8 %v328
    %v330 = vlaneseq
    %v331 = vshrl.u32 %v330, 7
    %v332 = vsub.s32 %v329, %v331
    %v333 = vrot.slane %v305, %v332
    %v334 = vcombine.high %v312, %v312
    %v335 = vcombine.high %v319, %v319
    %v336 = vcombine.high %v326, %v326
    %v337 = vcombine.high %v333, %v333
    %v338 = vcombine.high %v23, %v23
    %v340 = vunpack.c.l.s4 1966171168
    %v341 = vunpack.c.0.s8 %v340
    %v342 = vlaneseq
    %v343 = vshrl.u32 %v342, 7
    %v344 = vsub.s32 %v341, %v343
    %v345 = vrot.slane %v23, %v344
    %v347 = vunpack.c.l.s4 1966171168
    %v348 = vunpack.c.0.s8 %v347
    %v349 = vlaneseq
    %v350 = vshrl.u32 %v349, 7
    %v351 = vsub.s32 %v348, %v350
    %v352 = vrot.slane %v338, %v351
    %v353 = vcombine.high %v345, %v345
    %v354 = vcombine.high %v352, %v352
    %v356 = vunpack.c.l.s4 1966171168
    %v357 = vunpack.c.0.s8 %v356
    %v358 = vlaneseq
    %v359 = vshrl.u32 %v358, 7
    %v360 = vsub.s32 %v357, %v359
    %v361 = vrot.slane %v345, %v360
    %v363 = vunpack.c.l.s4 1966171168
    %v364 = vunpack.c.0.s8 %v363
    %v365 = vlaneseq
    %v366 = vshrl.u32 %v365, 7
    %v367 = vsub.s32 %v364, %v366
    %v368 = vrot.slane %v352, %v367
    %v370 = vunpack.c.l.s4 1966171168
    %v371 = vunpack.c.0.s8 %v370
    %v372 = vlaneseq
    %v373 = vshrl.u32 %v372, 7
    %v374 = vsub.s32 %v371, %v373
    %v375 = vrot.slane %v353, %v374
    %v377 = vunpack.c.l.s4 1966171168
    %v378 = vunpack.c.0.s8 %v377
    %v379 = vlaneseq
    %v380 = vshrl.u32 %v379, 7
    %v381 = vsub.s32 %v378, %v380
    %v382 = vrot.slane %v354, %v381
    %v383 = vcombine.high %v361, %v361
    %v384 = vcombine.high %v368, %v368
    %v385 = vcombine.high %v375, %v375
    %v386 = vcombine.high %v382, %v382
    %v659 = vunpack.c.l.b16 %v24
    %v660 = vunpack.c.l.b16 %v25
    %v661 = vunpack.c.l.b16 %v26
    %v662 = vunpack.c.l.b16 %v27
    %v663 = vunpack.c.l.b16 %v28
    %v664 = vunpack.c.l.b16 %v29
    %v665 = vunpack.c.l.b16 %v30
    %v666 = vunpack.c.l.b16 %v31
    %v667 = vunpack.c.l.b16 %v32
    %v668 = vunpack.c.l.b16 %v33
    %v669 = vunpack.c.l.b16 %v34
    %v670 = vunpack.c.l.b16 %v35
    %v671 = vunpack.c.l.b16 %v36
    %v672 = vunpack.c.l.b16 %v37
    %v673 = vunpack.c.l.b16 %v38
    %v674 = vunpack.c.l.b16 %v39
    %v675 = vunpack.c.l.b16 %v40
    %v676 = vunpack.c.l.b16 %v41
    %v677 = vunpack.c.l.b16 %v42
    %v678 = vunpack.c.l.b16 %v43
    %v679 = vunpack.c.l.b16 %v44
    %v680 = vunpack.c.l.b16 %v45
    %v681 = vunpack.c.l.b16 %v46
    %v682 = vunpack.c.l.b16 %v47
    %v683 = vunpack.c.l.b16 %v48
    %v684 = vunpack.c.l.b16 %v49
    %v685 = vunpack.c.l.b16 %v50
    %v686 = vunpack.c.l.b16 %v51
    %v687 = vunpack.c.l.b16 %v52
    %v688 = vunpack.c.l.b16 %v53
    %v689 = vunpack.c.l.b16 %v54
    %v690 = vunpack.c.l.b16 %v55
    %v691 = vunpack.c.l.b16 %v56
    %v692 = vunpack.c.l.b16 %v57
    %v693 = vunpack.c.l.b16 %v58
    %v694 = vunpack.c.l.b16 %v59
    %v695 = vunpack.c.l.b16 %v60
    %v696 = vunpack.c.l.b16 %v61
    %v697 = vunpack.c.l.b16 %v62
    %v698 = vunpack.c.l.b16 %v63
    %v699 = vunpack.c.l.b16 %v64
    %v700 = vunpack.c.l.b16 %v65
    %v701 = vunpack.c.l.b16 %v66
    %v702 = vunpack.c.l.b16 %v67
    %v703 = vunpack.c.l.b16 %v68
    %v704 = vunpack.c.l.b16 %v69
    %v705 = vunpack.c.l.b16 %v70
    %v706 = vunpack.c.l.b16 %v71
    %v707 = vunpack.c.l.b16 %v72
    %v708 = vunpack.c.l.b16 %v73
    %v709 = vunpack.c.l.b16 %v74
    %v710 = vunpack.c.l.b16 %v75
    %v711 = vunpack.c.l.b16 %v76
    %v712 = vunpack.c.l.b16 %v77
    %v713 = vunpack.c.l.b16 %v78
    %v714 = vunpack.c.l.b16 %v79
    %v715 = vunpack.c.l.b16 %v80
    %v716 = vunpack.c.l.b16 %v81
    %v717 = vunpack.c.l.b16 %v82
    %v718 = vunpack.c.l.b16 %v83
    %v719 = vunpack.c.l.b16 %v84
    %v720 = vunpack.c.l.b16 %v85
    %v721 = vunpack.c.l.b16 %v86
    %v722 = vunpack.c.l.b16 %v87
    %v723 = vunpack.c.l.b16 %v88
    %v724 = vunpack.c.l.b16 %v89
    %v725 = vunpack.c.l.b16 %v90
    %v726 = vunpack.c.l.b16 %v91
    %v727 = vunpack.c.l.b16 %v92
    %v728 = vunpack.c.l.b16 %v93
    %v729 = vunpack.c.l.b16 %v94
    %v730 = vunpack.c.l.b16 %v95
    %v731 = vunpack.c.l.b16 %v96
    %v732 = vunpack.c.l.b16 %v97
    %v733 = vunpack.c.l.b16 %v98
    %v734 = vunpack.c.l.b16 %v99
    %v735 = vunpack.c.l.b16 %v100
    %v736 = vunpack.c.l.b16 %v101
    %v737 = vunpack.c.l.b16 %v102
    %v738 = vunpack.c.l.b16 %v103
    %v739 = vunpack.c.l.b16 %v104
    %v740 = vunpack.c.l.b16 %v105
    %v741 = vunpack.c.l.b16 %v106
    %v742 = vunpack.c.l.b16 %v107
    %v743 = vunpack.c.l.b16 %v108
    %v744 = vunpack.c.l.b16 %v109
    %v745 = vunpack.c.l.b16 %v110
    %v746 = vunpack.c.l.b16 %v111
    %v747 = vunpack.c.l.b16 %v112
    %v748 = vunpack.c.l.b16 %v113
    %v749 = vunpack.c.l.b16 %v114
    %v750 = vunpack.c.l.b16 %v115
    %v751 = vunpack.c.l.b16 %v116
    %v752 = vunpack.c.l.b16 %v117
    %v753 = vunpack.c.l.b16 %v118
    %v754 = vunpack.c.l.b16 %v119
    %v755 = vunpack.c.l.b16 %v120
    %v756 = vunpack.c.l.b16 %v121
    %v757 = vunpack.c.l.b16 %v122
    %v758 = vunpack.c.l.b16 %v123
    %v759 = vunpack.c.l.b16 %v124
    %v760 = vunpack.c.l.b16 %v125
    %v761 = vunpack.c.l.b16 %v126
    %v762 = vunpack.c.l.b16 %v127
    %v763 = vunpack.c.l.b16 %v128
    %v764 = vunpack.c.l.b16 %v129
    %v765 = vunpack.c.l.b16 %v130
    %v766 = vunpack.c.l.b16 %v131
    %v767 = vunpack.c.l.b16 %v132
    %v768 = vunpack.c.l.b16 %v133
    %v769 = vunpack.c.l.b16 %v134
    %v770 = vunpack.c.l.b16 %v135
    %v771 = vunpack.c.l.b16 %v136
    %v772 = vunpack.c.l.b16 %v137
    %v773 = vunpack.c.l.b16 %v138
    %v774 = vunpack.c.l.b16 %v139
    %v775 = vunpack.c.l.b16 %v140
    %v776 = vunpack.c.l.b16 %v141
    %v777 = vunpack.c.l.b16 %v142
    %v778 = vunpack.c.l.b16 %v143
    %v779 = vunpack.c.l.b16 %v144
    %v780 = vunpack.c.l.b16 %v145
    %v781 = vunpack.c.l.b16 %v146
    %v782 = vunpack.c.l.b16 %v147
    %v783 = vunpack.c.l.b16 %v148
    %v784 = vunpack.c.l.b16 %v149
    %v785 = vunpack.c.l.b16 %v150
    %v786 = vunpack.c.l.b16 %v151
    %v787 = vunpack.c.l.b16 %v152
    %v788 = vunpack.c.l.b16 %v153
    %v789 = vunpack.c.l.b16 %v154
    %v790 = vunpack.c.l.b16 %v155
    %v791 = vunpack.c.l.b16 %v156
    %v792 = vunpack.c.l.b16 %v157
    %v793 = vunpack.c.l.b16 %v158
    %v794 = vunpack.c.l.b16 %v159
    %v795 = vunpack.c.l.b16 %v160
    %v796 = vunpack.c.l.b16 %v161
    %v797 = vunpack.c.l.b16 %v162
    %v798 = vunpack.c.l.b16 %v163
    %v799 = vunpack.c.l.b16 %v164
    %v800 = vunpack.c.l.b16 %v165
    %v801 = vunpack.c.l.b16 %v166
    %v802 = vunpack.c.l.b16 %v167
    %v803 = vunpack.c.l.b16 %v168
    %v804 = vunpack.c.l.b16 %v169
    %v805 = vunpack.c.l.b16 %v170
    %v806 = vunpack.c.l.b16 %v171
    %v807 = vunpack.c.l.b16 %v172
    %v808 = vunpack.c.l.b16 %v173
    %v809 = vunpack.c.l.b16 %v174
    %v810 = vunpack.c.l.b16 %v175
    %v811 = vunpack.c.l.b16 %v176
    %v812 = vunpack.c.l.b16 %v177
    %v813 = vunpack.c.l.b16 %v178
    %v814 = vunpack.c.l.b16 %v179
    %v815 = vunpack.c.l.b16 %v180
    %v816 = vunpack.c.l.b16 %v181
    %v817 = vunpack.c.l.b16 %v182
    %v818 = vunpack.c.l.b16 %v183
    %v819 = vunpack.c.l.b16 %v184
    %v820 = vunpack.c.l.b16 %v185
    %v821 = vunpack.c.l.b16 %v186
    %v822 = vunpack.c.l.b16 %v187
    %v823 = vunpack.c.l.b16 %v188
    %v824 = vunpack.c.l.b16 %v189
    %v825 = vunpack.c.l.b16 %v190
    %v826 = vunpack.c.l.b16 %v191
    %v827 = vunpack.c.l.b16 %v192
    %v828 = vunpack.c.l.b16 %v193
    %v829 = vunpack.c.l.b16 %v194
    %v830 = vunpack.c.l.b16 %v195
    %v831 = vunpack.c.l.b16 %v196
    %v832 = vunpack.c.l.b16 %v197
    %v833 = vunpack.c.l.b16 %v198
    %v834 = vunpack.c.l.b16 %v199
    %v835 = vunpack.c.l.b16 %v200
    %v836 = vunpack.c.l.b16 %v201
    %v837 = vunpack.c.l.b16 %v202
    %v838 = vunpack.c.l.b16 %v203
    %v839 = vunpack.c.l.b16 %v204
    %v840 = vunpack.c.l.b16 %v205
    %v841 = vunpack.c.l.b16 %v206
    %v842 = vunpack.c.l.b16 %v207
    %v843 = vunpack.c.l.b16 %v208
    %v844 = vunpack.c.l.b16 %v209
    %v845 = vunpack.c.l.b16 %v210
    %v846 = vunpack.c.l.b16 %v211
    %v847 = vunpack.c.l.b16 %v212
    %v848 = vunpack.c.l.b16 %v213
    %v849 = vunpack.c.l.b16 %v214
    %v850 = vunpack.c.l.b16 %v215
    %v851 = vunpack.c.l.b16 %v216
    %v852 = vunpack.c.l.b16 %v217
    %v853 = vunpack.c.l.b16 %v218
    %v854 = vunpack.c.l.b16 %v219
    %v855 = vunpack.c.l.b16 %v220
    %v856 = vunpack.c.l.b16 %v221
    %v857 = vunpack.c.l.b16 %v222
    %v858 = vunpack.c.l.b16 %v223
    %v859 = vunpack.c.l.b16 %v224
    %v860 = vunpack.c.l.b16 %v225
    %v861 = vunpack.c.l.b16 %v226
    %v862 = vunpack.c.l.b16 %v227
    %v863 = vunpack.c.l.b16 %v228
    %v864 = vunpack.c.l.b16 %v229
    %v865 = vunpack.c.l.b16 %v230
    %v866 = vunpack.c.l.b16 %v231
    %v867 = vunpack.c.l.b16 %v232
    %v868 = vunpack.c.l.b16 %v233
    %v869 = vunpack.c.l.b16 %v234
    %v870 = vunpack.c.l.b16 %v235
    %v871 = vunpack.c.l.b16 %v236
    %v872 = vunpack.c.l.b16 %v237
    %v873 = vunpack.c.l.b16 %v238
    %v874 = vunpack.c.l.b16 %v239
    %v875 = vunpack.c.l.b16 %v240
    %v876 = vunpack.c.l.b16 %v241
    %v877 = vunpack.c.l.b16 %v242
    %v878 = vunpack.c.l.b16 %v243
    %v879 = vunpack.c.l.b16 %v244
    %v880 = vunpack.c.l.b16 %v245
    %v881 = vunpack.c.l.b16 %v246
    %v882 = vunpack.c.l.b16 %v247
    %v883 = vunpack.c.l.b16 %v248
    %v884 = vunpack.c.l.b16 %v249
    %v885 = vunpack.c.l.b16 %v250
    %v886 = vunpack.c.l.b16 %v251
    %v887 = vunpack.c.l.b16 %v252
    %v888 = vunpack.c.l.b16 %v253
    %v889 = vunpack.c.l.b16 %v254
    %v890 = vunpack.c.l.b16 %v255
    %v891 = vunpack.c.l.b16 %v256
    %v892 = vunpack.c.l.b16 %v257
    %v893 = vunpack.c.l.b16 %v258
    %v894 = vunpack.c.l.b16 %v259
    %v895 = vunpack.c.l.b16 %v260
    %v896 = vunpack.c.l.b16 %v261
    %v897 = vunpack.c.l.b16 %v262
    %v898 = vunpack.c.l.b16 %v263
    %v899 = vunpack.c.l.b16 %v264
    %v900 = vunpack.c.l.b16 %v265
    %v901 = vunpack.c.l.b16 %v266
    %v902 = vunpack.c.l.b16 %v267
    %v903 = vunpack.c.l.b16 %v268
    %v904 = vunpack.c.l.b16 %v269
    %v905 = vunpack.c.l.b16 %v270
    %v906 = vunpack.c.l.b16 %v271
    %v907 = vunpack.c.l.b16 %v272
    %v908 = vunpack.c.l.b16 %v273
    %v909 = vunpack.c.l.b16 %v274
    %v910 = vunpack.c.l.b16 %v275
    %v911 = vunpack.c.l.b16 %v276
    %v912 = vunpack.c.l.b16 %v277
    %v913 = vunpack.c.l.b16 %v278
    %v914 = vunpack.c.l.b16 %v279
    %v915 = vpack.c.b16 %v660, %v659
    %v916 = vpack.c.b16 %v662, %v661
    %v917 = vpack.c.b16 %v664, %v663
    %v918 = vpack.c.b16 %v666, %v665
    %v919 = vpack.c.b16 %v668, %v667
    %v920 = vpack.c.b16 %v670, %v669
    %v921 = vpack.c.b16 %v672, %v671
    %v922 = vpack.c.b16 %v674, %v673
    %v923 = vpack.c.b16 %v676, %v675
    %v924 = vpack.c.b16 %v678, %v677
    %v925 = vpack.c.b16 %v680, %v679
    %v926 = vpack.c.b16 %v682, %v681
    %v927 = vpack.c.b16 %v684, %v683
    %v928 = vpack.c.b16 %v686, %v685
    %v929 = vpack.c.b16 %v688, %v687
    %v930 = vpack.c.b16 %v690, %v689
    %v931 = vpack.c.b16 %v692, %v691
    %v932 = vpack.c.b16 %v694, %v693
    %v933 = vpack.c.b16 %v696, %v695
    %v934 = vpack.c.b16 %v698, %v697
    %v935 = vpack.c.b16 %v700, %v699
    %v936 = vpack.c.b16 %v702, %v701
    %v937 = vpack.c.b16 %v704, %v703
    %v938 = vpack.c.b16 %v706, %v705
    %v939 = vpack.c.b16 %v708, %v707
    %v940 = vpack.c.b16 %v710, %v709
    %v941 = vpack.c.b16 %v712, %v711
    %v942 = vpack.c.b16 %v714, %v713
    %v943 = vpack.c.b16 %v716, %v715
    %v944 = vpack.c.b16 %v718, %v717
    %v945 = vpack.c.b16 %v720, %v719
    %v946 = vpack.c.b16 %v722, %v721
    %v947 = vpack.c.b16 %v724, %v723
    %v948 = vpack.c.b16 %v726, %v725
    %v949 = vpack.c.b16 %v728, %v727
    %v950 = vpack.c.b16 %v730, %v729
    %v951 = vpack.c.b16 %v732, %v731
    %v952 = vpack.c.b16 %v734, %v733
    %v953 = vpack.c.b16 %v736, %v735
    %v954 = vpack.c.b16 %v738, %v737
    %v955 = vpack.c.b16 %v740, %v739
    %v956 = vpack.c.b16 %v742, %v741
    %v957 = vpack.c.b16 %v744, %v743
    %v958 = vpack.c.b16 %v746, %v745
    %v959 = vpack.c.b16 %v748, %v747
    %v960 = vpack.c.b16 %v750, %v749
    %v961 = vpack.c.b16 %v752, %v751
    %v962 = vpack.c.b16 %v754, %v753
    %v963 = vpack.c.b16 %v756, %v755
    %v964 = vpack.c.b16 %v758, %v757
    %v965 = vpack.c.b16 %v760, %v759
    %v966 = vpack.c.b16 %v762, %v761
    %v967 = vpack.c.b16 %v764, %v763
    %v968 = vpack.c.b16 %v766, %v765
    %v969 = vpack.c.b16 %v768, %v767
    %v970 = vpack.c.b16 %v770, %v769
    %v971 = vpack.c.b16 %v772, %v771
    %v972 = vpack.c.b16 %v774, %v773
    %v973 = vpack.c.b16 %v776, %v775
    %v974 = vpack.c.b16 %v778, %v777
    %v975 = vpack.c.b16 %v780, %v779
    %v976 = vpack.c.b16 %v782, %v781
    %v977 = vpack.c.b16 %v784, %v783
    %v978 = vpack.c.b16 %v786, %v785
    %v979 = vpack.c.b16 %v788, %v787
    %v980 = vpack.c.b16 %v790, %v789
    %v981 = vpack.c.b16 %v792, %v791
    %v982 = vpack.c.b16 %v794, %v793
    %v983 = vpack.c.b16 %v796, %v795
    %v984 = vpack.c.b16 %v798, %v797
    %v985 = vpack.c.b16 %v800, %v799
    %v986 = vpack.c.b16 %v802, %v801
    %v987 = vpack.c.b16 %v804, %v803
    %v988 = vpack.c.b16 %v806, %v805
    %v989 = vpack.c.b16 %v808, %v807
    %v990 = vpack.c.b16 %v810, %v809
    %v991 = vpack.c.b16 %v812, %v811
    %v992 = vpack.c.b16 %v814, %v813
    %v993 = vpack.c.b16 %v816, %v815
    %v994 = vpack.c.b16 %v818, %v817
    %v995 = vpack.c.b16 %v820, %v819
    %v996 = vpack.c.b16 %v822, %v821
    %v997 = vpack.c.b16 %v824, %v823
    %v998 = vpack.c.b16 %v826, %v825
    %v999 = vpack.c.b16 %v828, %v827
    %v1000 = vpack.c.b16 %v830, %v829
    %v1001 = vpack.c.b16 %v832, %v831
    %v1002 = vpack.c.b16 %v834, %v833
    %v1003 = vpack.c.b16 %v836, %v835
    %v1004 = vpack.c.b16 %v838, %v837
    %v1005 = vpack.c.b16 %v840, %v839
    %v1006 = vpack.c.b16 %v842, %v841
    %v1007 = vpack.c.b16 %v844, %v843
    %v1008 = vpack.c.b16 %v846, %v845
    %v1009 = vpack.c.b16 %v848, %v847
    %v1010 = vpack.c.b16 %v850, %v849
    %v1011 = vpack.c.b16 %v852, %v851
    %v1012 = vpack.c.b16 %v854, %v853
    %v1013 = vpack.c.b16 %v856, %v855
    %v1014 = vpack.c.b16 %v858, %v857
    %v1015 = vpack.c.b16 %v860, %v859
    %v1016 = vpack.c.b16 %v862, %v861
    %v1017 = vpack.c.b16 %v864, %v863
    %v1018 = vpack.c.b16 %v866, %v865
    %v1019 = vpack.c.b16 %v868, %v867
    %v1020 = vpack.c.b16 %v870, %v869
    %v1021 = vpack.c.b16 %v872, %v871
    %v1022 = vpack.c.b16 %v874, %v873
    %v1023 = vpack.c.b16 %v876, %v875
    %v1024 = vpack.c.b16 %v878, %v877
    %v1025 = vpack.c.b16 %v880, %v879
    %v1026 = vpack.c.b16 %v882, %v881
    %v1027 = vpack.c.b16 %v884, %v883
    %v1028 = vpack.c.b16 %v886, %v885
    %v1029 = vpack.c.b16 %v888, %v887
    %v1030 = vpack.c.b16 %v890, %v889
    %v1031 = vpack.c.b16 %v892, %v891
    %v1032 = vpack.c.b16 %v894, %v893
    %v1033 = vpack.c.b16 %v896, %v895
    %v1034 = vpack.c.b16 %v898, %v897
    %v1035 = vpack.c.b16 %v900, %v899
    %v1036 = vpack.c.b16 %v902, %v901
    %v1037 = vpack.c.b16 %v904, %v903
    %v1038 = vpack.c.b16 %v906, %v905
    %v1039 = vpack.c.b16 %v908, %v907
    %v1040 = vpack.c.b16 %v910, %v909
    %v1041 = vpack.c.b16 %v912, %v911
    %v1042 = vpack.c.b16 %v914, %v913
    %1171 = vmatprep.subr.bf16.mxu0 0
    %1172 = vmatpush1.bf16.msra.mxu0 %v922
    %1173 = vmatprep.subr.bf16.mxu0 0
    %1174 = vmatpush1.bf16.msra.mxu0 %v921
    %1175 = vmatprep.subr.bf16.mxu0 0
    %1176 = vmatpush1.bf16.msra.mxu0 %v920
    %1177 = vmatprep.subr.bf16.mxu0 0
    %1178 = vmatpush1.bf16.msra.mxu0 %v919
    %1179 = vmatprep.subr.bf16.mxu0 0
    %1180 = vmatpush1.bf16.msra.mxu0 %v918
    %1181 = vmatprep.subr.bf16.mxu0 0
    %1182 = vmatpush1.bf16.msra.mxu0 %v917
    %1183 = vmatprep.subr.bf16.mxu0 0
    %1184 = vmatpush1.bf16.msra.mxu0 %v916
    %1185 = vmatprep.subr.bf16.mxu0 0
    %1186 = vmatpush1.bf16.msra.mxu0 %v915
    %1187 = vmatprep.subr.bf16.mxu0 0
    %1188 = vmatpush2.bf16.msra.mxu0 %v930
    %1189 = vmatprep.subr.bf16.mxu0 0
    %1190 = vmatpush2.bf16.msra.mxu0 %v929
    %1191 = vmatprep.subr.bf16.mxu0 0
    %1192 = vmatpush2.bf16.msra.mxu0 %v928
    %1193 = vmatprep.subr.bf16.mxu0 0
    %1194 = vmatpush2.bf16.msra.mxu0 %v927
    %1195 = vmatprep.subr.bf16.mxu0 0
    %1196 = vmatpush2.bf16.msra.mxu0 %v926
    %1197 = vmatprep.subr.bf16.mxu0 0
    %1198 = vmatpush2.bf16.msra.mxu0 %v925
    %1199 = vmatprep.subr.bf16.mxu0 0
    %1200 = vmatpush2.bf16.msra.mxu0 %v924
    %1201 = vmatprep.subr.bf16.mxu0 0
    %1202 = vmatpush2.bf16.msra.mxu0 %v923
    %1203 = vmatprep.mubr.bf16.mxu0 %v326
    %1204 = vmatmul.mubr.bf16.gmra.mxu0 %v312
    %v1205 = vpop.f32.mrf.mxu0
    %v1206 = vadd.f32 %v285, %v1205
    %v1207 = vpop.f32.mrf.mxu0
    %v1208 = vpop.f32.mrf.mxu0
    %v1209 = vpop.f32.mrf.mxu0
    %1210 = vdwg.mxu0
    %1211 = vmatprep.subr.bf16.mxu0 0
    %1212 = vmatpush1.bf16.msra.mxu0 %v938
    %1213 = vmatprep.subr.bf16.mxu0 0
    %1214 = vmatpush1.bf16.msra.mxu0 %v937
    %1215 = vmatprep.subr.bf16.mxu0 0
    %1216 = vmatpush1.bf16.msra.mxu0 %v936
    %1217 = vmatprep.subr.bf16.mxu0 0
    %1218 = vmatpush1.bf16.msra.mxu0 %v935
    %1219 = vmatprep.subr.bf16.mxu0 0
    %1220 = vmatpush1.bf16.msra.mxu0 %v934
    %1221 = vmatprep.subr.bf16.mxu0 0
    %1222 = vmatpush1.bf16.msra.mxu0 %v933
    %1223 = vmatprep.subr.bf16.mxu0 0
    %1224 = vmatpush1.bf16.msra.mxu0 %v932
    %1225 = vmatprep.subr.bf16.mxu0 0
    %1226 = vmatpush1.bf16.msra.mxu0 %v931
    %1227 = vmatprep.subr.bf16.mxu0 0
    %1228 = vmatpush2.bf16.msra.mxu0 %v946
    %1229 = vmatprep.subr.bf16.mxu0 0
    %1230 = vmatpush2.bf16.msra.mxu0 %v945
    %1231 = vmatprep.subr.bf16.mxu0 0
    %1232 = vmatpush2.bf16.msra.mxu0 %v944
    %1233 = vmatprep.subr.bf16.mxu0 0
    %1234 = vmatpush2.bf16.msra.mxu0 %v943
    %1235 = vmatprep.subr.bf16.mxu0 0
    %1236 = vmatpush2.bf16.msra.mxu0 %v942
    %1237 = vmatprep.subr.bf16.mxu0 0
    %1238 = vmatpush2.bf16.msra.mxu0 %v941
    %1239 = vmatprep.subr.bf16.mxu0 0
    %1240 = vmatpush2.bf16.msra.mxu0 %v940
    %1241 = vmatprep.subr.bf16.mxu0 0
    %1242 = vmatpush2.bf16.msra.mxu0 %v939
    %1243 = vmatprep.mubr.bf16.mxu0 %v336
    %1244 = vmatmul.mubr.bf16.gmra.mxu0 %v334
    %v1245 = vpop.f32.mrf.mxu0
    %v1246 = vadd.f32 %v1206, %v1245
    %v1247 = vpop.f32.mrf.mxu0
    %v1248 = vpop.f32.mrf.mxu0
    %v1249 = vpop.f32.mrf.mxu0
    %1250 = vdwg.mxu0
    %1251 = vmatprep.subr.bf16.mxu0 0
    %1252 = vmatpush1.bf16.msra.mxu0 %v954
    %1253 = vmatprep.subr.bf16.mxu0 0
    %1254 = vmatpush1.bf16.msra.mxu0 %v953
    %1255 = vmatprep.subr.bf16.mxu0 0
    %1256 = vmatpush1.bf16.msra.mxu0 %v952
    %1257 = vmatprep.subr.bf16.mxu0 0
    %1258 = vmatpush1.bf16.msra.mxu0 %v951
    %1259 = vmatprep.subr.bf16.mxu0 0
    %1260 = vmatpush1.bf16.msra.mxu0 %v950
    %1261 = vmatprep.subr.bf16.mxu0 0
    %1262 = vmatpush1.bf16.msra.mxu0 %v949
    %1263 = vmatprep.subr.bf16.mxu0 0
    %1264 = vmatpush1.bf16.msra.mxu0 %v948
    %1265 = vmatprep.subr.bf16.mxu0 0
    %1266 = vmatpush1.bf16.msra.mxu0 %v947
    %1267 = vmatprep.subr.bf16.mxu0 0
    %1268 = vmatpush2.bf16.msra.mxu0 %v962
    %1269 = vmatprep.subr.bf16.mxu0 0
    %1270 = vmatpush2.bf16.msra.mxu0 %v961
    %1271 = vmatprep.subr.bf16.mxu0 0
    %1272 = vmatpush2.bf16.msra.mxu0 %v960
    %1273 = vmatprep.subr.bf16.mxu0 0
    %1274 = vmatpush2.bf16.msra.mxu0 %v959
    %1275 = vmatprep.subr.bf16.mxu0 0
    %1276 = vmatpush2.bf16.msra.mxu0 %v958
    %1277 = vmatprep.subr.bf16.mxu0 0
    %1278 = vmatpush2.bf16.msra.mxu0 %v957
    %1279 = vmatprep.subr.bf16.mxu0 0
    %1280 = vmatpush2.bf16.msra.mxu0 %v956
    %1281 = vmatprep.subr.bf16.mxu0 0
    %1282 = vmatpush2.bf16.msra.mxu0 %v955
    %1283 = vmatprep.mubr.bf16.mxu0 %v333
    %1284 = vmatmul.mubr.bf16.gmra.mxu0 %v319
    %v1285 = vpop.f32.mrf.mxu0
    %v1286 = vadd.f32 %v1246, %v1285
    %v1287 = vpop.f32.mrf.mxu0
    %v1288 = vpop.f32.mrf.mxu0
    %v1289 = vpop.f32.mrf.mxu0
    %1290 = vdwg.mxu0
    %1291 = vmatprep.subr.bf16.mxu0 0
    %1292 = vmatpush1.bf16.msra.mxu0 %v970
    %1293 = vmatprep.subr.bf16.mxu0 0
    %1294 = vmatpush1.bf16.msra.mxu0 %v969
    %1295 = vmatprep.subr.bf16.mxu0 0
    %1296 = vmatpush1.bf16.msra.mxu0 %v968
    %1297 = vmatprep.subr.bf16.mxu0 0
    %1298 = vmatpush1.bf16.msra.mxu0 %v967
    %1299 = vmatprep.subr.bf16.mxu0 0
    %1300 = vmatpush1.bf16.msra.mxu0 %v966
    %1301 = vmatprep.subr.bf16.mxu0 0
    %1302 = vmatpush1.bf16.msra.mxu0 %v965
    %1303 = vmatprep.subr.bf16.mxu0 0
    %1304 = vmatpush1.bf16.msra.mxu0 %v964
    %1305 = vmatprep.subr.bf16.mxu0 0
    %1306 = vmatpush1.bf16.msra.mxu0 %v963
    %1307 = vmatprep.subr.bf16.mxu0 0
    %1308 = vmatpush2.bf16.msra.mxu0 %v978
    %1309 = vmatprep.subr.bf16.mxu0 0
    %1310 = vmatpush2.bf16.msra.mxu0 %v977
    %1311 = vmatprep.subr.bf16.mxu0 0
    %1312 = vmatpush2.bf16.msra.mxu0 %v976
    %1313 = vmatprep.subr.bf16.mxu0 0
    %1314 = vmatpush2.bf16.msra.mxu0 %v975
    %1315 = vmatprep.subr.bf16.mxu0 0
    %1316 = vmatpush2.bf16.msra.mxu0 %v974
    %1317 = vmatprep.subr.bf16.mxu0 0
    %1318 = vmatpush2.bf16.msra.mxu0 %v973
    %1319 = vmatprep.subr.bf16.mxu0 0
    %1320 = vmatpush2.bf16.msra.mxu0 %v972
    %1321 = vmatprep.subr.bf16.mxu0 0
    %1322 = vmatpush2.bf16.msra.mxu0 %v971
    %1323 = vmatprep.mubr.bf16.mxu0 %v337
    %1324 = vmatmul.mubr.bf16.gmra.mxu0 %v335
    %v1325 = vpop.f32.mrf.mxu0
    %v1326 = vadd.f32 %v1286, %v1325
    %v1327 = vpop.f32.mrf.mxu0
    %v1328 = vpop.f32.mrf.mxu0
    %v1329 = vpop.f32.mrf.mxu0
    %1330 = vdwg.mxu0
    %1331 = vmatprep.subr.bf16.mxu0 0
    %1332 = vmatpush1.bf16.msra.mxu0 %v986
    %1333 = vmatprep.subr.bf16.mxu0 0
    %1334 = vmatpush1.bf16.msra.mxu0 %v985
    %1335 = vmatprep.subr.bf16.mxu0 0
    %1336 = vmatpush1.bf16.msra.mxu0 %v984
    %1337 = vmatprep.subr.bf16.mxu0 0
    %1338 = vmatpush1.bf16.msra.mxu0 %v983
    %1339 = vmatprep.subr.bf16.mxu0 0
    %1340 = vmatpush1.bf16.msra.mxu0 %v982
    %1341 = vmatprep.subr.bf16.mxu0 0
    %1342 = vmatpush1.bf16.msra.mxu0 %v981
    %1343 = vmatprep.subr.bf16.mxu0 0
    %1344 = vmatpush1.bf16.msra.mxu0 %v980
    %1345 = vmatprep.subr.bf16.mxu0 0
    %1346 = vmatpush1.bf16.msra.mxu0 %v979
    %1347 = vmatprep.subr.bf16.mxu0 0
    %1348 = vmatpush2.bf16.msra.mxu0 %v994
    %1349 = vmatprep.subr.bf16.mxu0 0
    %1350 = vmatpush2.bf16.msra.mxu0 %v993
    %1351 = vmatprep.subr.bf16.mxu0 0
    %1352 = vmatpush2.bf16.msra.mxu0 %v992
    %1353 = vmatprep.subr.bf16.mxu0 0
    %1354 = vmatpush2.bf16.msra.mxu0 %v991
    %1355 = vmatprep.subr.bf16.mxu0 0
    %1356 = vmatpush2.bf16.msra.mxu0 %v990
    %1357 = vmatprep.subr.bf16.mxu0 0
    %1358 = vmatpush2.bf16.msra.mxu0 %v989
    %1359 = vmatprep.subr.bf16.mxu0 0
    %1360 = vmatpush2.bf16.msra.mxu0 %v988
    %1361 = vmatprep.subr.bf16.mxu0 0
    %1362 = vmatpush2.bf16.msra.mxu0 %v987
    %1363 = vmatprep.mubr.bf16.mxu0 %v375
    %1364 = vmatmul.mubr.bf16.gmra.mxu0 %v361
    %v1365 = vpop.f32.mrf.mxu0
    %v1366 = vadd.f32 %v1326, %v1365
    %v1367 = vpop.f32.mrf.mxu0
    %v1368 = vpop.f32.mrf.mxu0
    %v1369 = vpop.f32.mrf.mxu0
    %1370 = vdwg.mxu0
    %1371 = vmatprep.subr.bf16.mxu0 0
    %1372 = vmatpush1.bf16.msra.mxu0 %v1002
    %1373 = vmatprep.subr.bf16.mxu0 0
    %1374 = vmatpush1.bf16.msra.mxu0 %v1001
    %1375 = vmatprep.subr.bf16.mxu0 0
    %1376 = vmatpush1.bf16.msra.mxu0 %v1000
    %1377 = vmatprep.subr.bf16.mxu0 0
    %1378 = vmatpush1.bf16.msra.mxu0 %v999
    %1379 = vmatprep.subr.bf16.mxu0 0
    %1380 = vmatpush1.bf16.msra.mxu0 %v998
    %1381 = vmatprep.subr.bf16.mxu0 0
    %1382 = vmatpush1.bf16.msra.mxu0 %v997
    %1383 = vmatprep.subr.bf16.mxu0 0
    %1384 = vmatpush1.bf16.msra.mxu0 %v996
    %1385 = vmatprep.subr.bf16.mxu0 0
    %1386 = vmatpush1.bf16.msra.mxu0 %v995
    %1387 = vmatprep.subr.bf16.mxu0 0
    %1388 = vmatpush2.bf16.msra.mxu0 %v1010
    %1389 = vmatprep.subr.bf16.mxu0 0
    %1390 = vmatpush2.bf16.msra.mxu0 %v1009
    %1391 = vmatprep.subr.bf16.mxu0 0
    %1392 = vmatpush2.bf16.msra.mxu0 %v1008
    %1393 = vmatprep.subr.bf16.mxu0 0
    %1394 = vmatpush2.bf16.msra.mxu0 %v1007
    %1395 = vmatprep.subr.bf16.mxu0 0
    %1396 = vmatpush2.bf16.msra.mxu0 %v1006
    %1397 = vmatprep.subr.bf16.mxu0 0
    %1398 = vmatpush2.bf16.msra.mxu0 %v1005
    %1399 = vmatprep.subr.bf16.mxu0 0
    %1400 = vmatpush2.bf16.msra.mxu0 %v1004
    %1401 = vmatprep.subr.bf16.mxu0 0
    %1402 = vmatpush2.bf16.msra.mxu0 %v1003
    %1403 = vmatprep.mubr.bf16.mxu0 %v385
    %1404 = vmatmul.mubr.bf16.gmra.mxu0 %v383
    %v1405 = vpop.f32.mrf.mxu0
    %v1406 = vadd.f32 %v1366, %v1405
    %v1407 = vpop.f32.mrf.mxu0
    %v1408 = vpop.f32.mrf.mxu0
    %v1409 = vpop.f32.mrf.mxu0
    %1410 = vdwg.mxu0
    %1411 = vmatprep.subr.bf16.mxu0 0
    %1412 = vmatpush1.bf16.msra.mxu0 %v1018
    %1413 = vmatprep.subr.bf16.mxu0 0
    %1414 = vmatpush1.bf16.msra.mxu0 %v1017
    %1415 = vmatprep.subr.bf16.mxu0 0
    %1416 = vmatpush1.bf16.msra.mxu0 %v1016
    %1417 = vmatprep.subr.bf16.mxu0 0
    %1418 = vmatpush1.bf16.msra.mxu0 %v1015
    %1419 = vmatprep.subr.bf16.mxu0 0
    %1420 = vmatpush1.bf16.msra.mxu0 %v1014
    %1421 = vmatprep.subr.bf16.mxu0 0
    %1422 = vmatpush1.bf16.msra.mxu0 %v1013
    %1423 = vmatprep.subr.bf16.mxu0 0
    %1424 = vmatpush1.bf16.msra.mxu0 %v1012
    %1425 = vmatprep.subr.bf16.mxu0 0
    %1426 = vmatpush1.bf16.msra.mxu0 %v1011
    %1427 = vmatprep.subr.bf16.mxu0 0
    %1428 = vmatpush2.bf16.msra.mxu0 %v1026
    %1429 = vmatprep.subr.bf16.mxu0 0
    %1430 = vmatpush2.bf16.msra.mxu0 %v1025
    %1431 = vmatprep.subr.bf16.mxu0 0
    %1432 = vmatpush2.bf16.msra.mxu0 %v1024
    %1433 = vmatprep.subr.bf16.mxu0 0
    %1434 = vmatpush2.bf16.msra.mxu0 %v1023
    %1435 = vmatprep.subr.bf16.mxu0 0
    %1436 = vmatpush2.bf16.msra.mxu0 %v1022
    %1437 = vmatprep.subr.bf16.mxu0 0
    %1438 = vmatpush2.bf16.msra.mxu0 %v1021
    %1439 = vmatprep.subr.bf16.mxu0 0
    %1440 = vmatpush2.bf16.msra.mxu0 %v1020
    %1441 = vmatprep.subr.bf16.mxu0 0
    %1442 = vmatpush2.bf16.msra.mxu0 %v1019
    %1443 = vmatprep.mubr.bf16.mxu0 %v382
    %1444 = vmatmul.mubr.bf16.gmra.mxu0 %v368
    %v1445 = vpop.f32.mrf.mxu0
    %v1446 = vadd.f32 %v1406, %v1445
    %v1447 = vpop.f32.mrf.mxu0
    %v1448 = vpop.f32.mrf.mxu0
    %v1449 = vpop.f32.mrf.mxu0
    %1450 = vdwg.mxu0
    %1451 = vmatprep.subr.bf16.mxu0 0
    %1452 = vmatpush1.bf16.msra.mxu0 %v1034
    %1453 = vmatprep.subr.bf16.mxu0 0
    %1454 = vmatpush1.bf16.msra.mxu0 %v1033
    %1455 = vmatprep.subr.bf16.mxu0 0
    %1456 = vmatpush1.bf16.msra.mxu0 %v1032
    %1457 = vmatprep.subr.bf16.mxu0 0
    %1458 = vmatpush1.bf16.msra.mxu0 %v1031
    %1459 = vmatprep.subr.bf16.mxu0 0
    %1460 = vmatpush1.bf16.msra.mxu0 %v1030
    %1461 = vmatprep.subr.bf16.mxu0 0
    %1462 = vmatpush1.bf16.msra.mxu0 %v1029
    %1463 = vmatprep.subr.bf16.mxu0 0
    %1464 = vmatpush1.bf16.msra.mxu0 %v1028
    %1465 = vmatprep.subr.bf16.mxu0 0
    %1466 = vmatpush1.bf16.msra.mxu0 %v1027
    %1467 = vmatprep.subr.bf16.mxu0 0
    %1468 = vmatpush2.bf16.msra.mxu0 %v1042
    %1469 = vmatprep.subr.bf16.mxu0 0
    %1470 = vmatpush2.bf16.msra.mxu0 %v1041
    %1471 = vmatprep.subr.bf16.mxu0 0
    %1472 = vmatpush2.bf16.msra.mxu0 %v1040
    %1473 = vmatprep.subr.bf16.mxu0 0
    %1474 = vmatpush2.bf16.msra.mxu0 %v1039
    %1475 = vmatprep.subr.bf16.mxu0 0
    %1476 = vmatpush2.bf16.msra.mxu0 %v1038
    %1477 = vmatprep.subr.bf16.mxu0 0
    %1478 = vmatpush2.bf16.msra.mxu0 %v1037
    %1479 = vmatprep.subr.bf16.mxu0 0
    %1480 = vmatpush2.bf16.msra.mxu0 %v1036
    %1481 = vmatprep.subr.bf16.mxu0 0
    %1482 = vmatpush2.bf16.msra.mxu0 %v1035
    %1483 = vmatprep.mubr.bf16.mxu0 %v386
    %1484 = vmatmul.mubr.bf16.gmra.mxu0 %v384
    %v1485 = vpop.f32.mrf.mxu0
    %v1486 = vadd.f32 %v1446, %v1485
    %v1487 = vpop.f32.mrf.mxu0
    %v1488 = vpop.f32.mrf.mxu0
    %v1489 = vpop.f32.mrf.mxu0
    %1490 = vdwg.mxu0
    %v1491 = vmul.f32 %v1486, %v1486
    %vm1492 = vcmask 1041408
    %v1493 = vsel %vm1492, %v1491, 0.0
    %1494 = vadd.xlane.f32.xlu0 %v1493
    %v1495 = vpop.xlane.xlu0 %1494
    %v1496 = vmax.f32 %v1495, 1e-24
    %v1497 = vrsqrt.pop %v1496
    %v1498 = vmul.f32 %v1486, %v1497
    %1499 = vst [vmem:[#allocation2] sm:$0x3] %v1498
    %v1500 = vld [vmem:[%s3] sm:$0x3]
    %v1501 = vmul.f32 %v1498, %v1500
    %v1502 = vsel %vm1492, %v1501, 0.0
    %1503 = vadd.xlane.f32.xlu0 %v1502
    %v1504 = vpop.xlane.xlu0 %1503
    %v1505 = vsub.f32 1.0, %v1504
    %v1506 = vand.u32 2147483647, %v1505
    %v1507 = vsel %vm1492, %v1506, 0.0
    %v1508 = vrot.slane %v1507, 4
    %v1509 = vadd.f32 %v1507, %v1508
    %v1510 = vrot.slane %v1509, 2
    %v1511 = vadd.f32 %v1509, %v1510
    %v1512 = vrot.slane %v1511, 1
    %v1513 = vadd.f32 %v1511, %v1512
    %v1514 = vrcp.pop 2.0
    %v1515 = vmul.f32 %v1513, %v1514
    %vm1516 = vcmask 0
    %1517 = vst.msk [vmem:[#allocation4] sm:$0x1] %vm1516, %v1515
    // Predicated region
    $region18: #{net_forward.3} parent=1 // pred_check
      _
    $region19: #{net_forward.3} parent=1 // pred_check_branch
      %1519 = sbr.rel (0) target = $region21
    $region20: #{net_forward.3} parent=1 // pred_region
      %s1521 = ssub.s32 32, 32
      %1522 = vsyncadd [#allocation3], %s1521
      %s1524 = sshll.u32 [#allocation2], 4
      %s1525 = int_to_ptr.vmem [resolvable:$true] %s1524
      %1527 = dma.vmem_to_hbm [thread:$0]  %s1525, 32, %s4, [#allocation3]
    $region21: #{net_forward.3} parent=1 // pred_fallthru
      _
    // Predicated region
    $region22: #{net_forward.3} parent=1 // pred_check
      _
    $region23: #{net_forward.3} parent=1 // pred_check_branch
      %1529 = sbr.rel (0) target = $region25
    $region24: #{net_forward.3} parent=1 // pred_region
      %s1531 = ssub.s32 16, 16
      %1532 = vsyncadd [#allocation5], %s1531
      %s1534 = sshll.u32 [#allocation4], 4
      %s1535 = int_to_ptr.vmem [resolvable:$true] %s1534
      %1537 = dma.vmem_to_hbm [thread:$0]  %s1535, 16, %s5, [#allocation5]
    $region25: #{net_forward.3} parent=1 // pred_fallthru
      _
    // Predicated region
    $region26: #{net_forward.3} parent=1 // pred_check
      _
    $region27: #{net_forward.3} parent=1 // pred_check_branch
      %1539 = sbr.rel (0) target = $region29
    $region28: #{net_forward.3} parent=1 // pred_region
      %1540 = dma.done [#allocation3], 32
    $region29: #{net_forward.3} parent=1 // pred_fallthru
      _
    // Predicated region
    $region30: #{net_forward.3} parent=1 // pred_check
      _
    $region31: #{net_forward.3} parent=1 // pred_check_branch
      %1542 = sbr.rel (0) target = $region33
    $region32: #{net_forward.3} parent=1 // pred_region
      %1543 = dma.done [#allocation5], 16
    $region33: #{net_forward.3} parent=1 // pred_fallthru
      _
    %1544 = vsyncpa [#allocation3], 1
    %1545 = vsyncpa [#allocation5], 1

// kernel: net_forward.2
$region0: #{net_forward.2}
  #allocation0 [shape = 'u32[]', space=smem, size = 0x4, offset = 0x4, fixed_abs, tag = 'smem constant byte address 0x4 - core index']
  #allocation1 [shape = 'u32[144,128]{1,0:T(1,128)}', space=vmem, size = 0x12000, scoped, tag = 'internal scratch']
  #allocation2 [shape = 'bf16[2,4608]{1,0:T(2,128)(2,1)}', space=vmem, size = 0x4800, scoped, tag = 'scratch operand']
  %s0 = inlined_call_operand.vmem [shape: bf16[2,32], index: 0, kind: input, shape index: {}]
  %s1 = inlined_call_operand.hbm [shape: bf16[32,4608], index: 1, kind: input, shape index: {}]
  %s2 = inlined_call_operand.hbm [shape: f32[1,4608], index: 2, kind: input, shape index: {}]
  %s3 = inlined_call_operand.hbm [shape: s8[2,4608,1024], index: 3, kind: input, shape index: {}]
  %s4 = inlined_call_operand.hbm [shape: f32[1,2048], index: 4, kind: input, shape index: {}]
  %s5 = inlined_call_operand.hbm [shape: f32[1,2048], index: 5, kind: input, shape index: {}]
  %s6 = inlined_call_operand.vmem [shape: bf16[2,2048], index: 6, kind: output, shape index: {}]
  %s7 = sld [smem:[#allocation0]]
  $region84: #{net_forward.2} parent=0
    _
  %s9 = ssub.s32 1, %s7
  %s10 = scalar_select 0, %s9, %s7
  $region1: #{net_forward.2} parent=0
    #allocation3 [shape = 'u8[294912]{0}', space=vmem, size = 0x48000, scoped, tag = 'input window, operand 1, single buffered']
    #allocation4 [shape = 's32[2]{0}', space=sflag, size = 0x8, scoped, tag = 'scoped memory for net_forward.2']
    #allocation5 [shape = 'u8[18432]{0}', space=vmem, size = 0x4800, scoped, tag = 'input window, operand 2, single buffered']
    #allocation6 [shape = 's32[1]{0}', space=sflag, size = 0x4, scoped, tag = 'scoped memory for net_forward.2']
    #allocation7 [shape = 'u8[9437184]{0}', space=vmem, size = 0x900000, scoped, tag = 'input window, operand 3']
    #allocation8 [shape = 'u8[8192]{0}', space=vmem, size = 0x2000, scoped, tag = 'input window, operand 4']
    #allocation9 [shape = 'u8[8192]{0}', space=vmem, size = 0x2000, scoped, tag = 'input window, operand 5']
    %11 = vsyncpa [#allocation4], 0
    %12 = vsyncpa [#allocation6], 0
    loop: start=0, step=1, limit=4
    $region2: #{net_forward.2} parent=1 // loop_pre_header
      _
    $region3: #{net_forward.2} parent=1 // loop_header
      %s14 = sphi 0, %s18
      %p15 = scmp.ge.s32.totalorder %s14, 4
      %s22 = sphi 0, %s22
      %s24 = sphi 0, %s22
      %s25 = sphi 0, %s24
      %s39 = sphi 0, %s25
      %s43 = sphi 0, %s43
      %s45 = sphi 0, %s43
      %s46 = sphi 0, %s45
      %s60 = sphi 0, %s46
      %s64 = sphi 0, %s64
      %s66 = sphi 0, %s64
      %s67 = sphi 0, %s66
      %s81 = sphi 0, %s67
      %s87 = sphi 0, %s89
      %s90 = sphi 0, %s87
      %s91 = sphi 0, %s90
      %s107 = sphi 0, %s91
      %s113 = sphi 0, %s115
      %s116 = sphi 0, %s113
      %s117 = sphi 0, %s116
      %s133 = sphi 0, %s117
      %s139 = sphi 0, %s141
      %s142 = sphi 0, %s139
      %s143 = sphi 0, %s142
      %s159 = sphi 0, %s143
      %s165 = sphi 0, %s167
      %s168 = sphi 0, %s165
      %s169 = sphi 0, %s168
      %s185 = sphi 0, %s169
    $region4: #{net_forward.2} parent=1 // loop_header_branch
      %17 = sbr.rel (%p15) target = $region8
    $region5: #{net_forward.2} parent=1 // loop_body
      %s19 = ssub.s32 %s14, 1
      %s20 = ssub.s32 %s14, 2
      %s21 = sadd.s32 %s14, 1
      %s23 = sadd.s32 %s22, 1
      %p26 = scmp.eq.s32.totalorder %s14, 1
      %p27 = scmp.ne.s32.totalorder %s22, %s24
      %p28 = scmp.eq.s32.totalorder %s14, 0
      %p29 = por %p27, %p28
      %p30 = scmp.ne.s32.totalorder %s22, %s24
      %p31 = scmp.eq.s32.totalorder %s19, 1
      %p32 = por %p30, %p31
      %p33 = scmp.ne.s32.totalorder %s24, %s25
      %p34 = scmp.eq.s32.totalorder %s19, 0
      %p35 = por %p33, %p34
      %p36 = scmp.ne.s32.totalorder %s24, %s25
      %p37 = scmp.eq.s32.totalorder %s20, 1
      %p38 = por %p36, %p37
      %p40 = scmp.ne.s32.totalorder %s25, %s39
      %p41 = scmp.eq.s32.totalorder %s20, 0
      %p42 = por %p40, %p41
      %s44 = sadd.s32 %s43, 1
      %p47 = scmp.eq.s32.totalorder %s14, 1
      %p48 = scmp.ne.s32.totalorder %s43, %s45
      %p49 = scmp.eq.s32.totalorder %s14, 0
      %p50 = por %p48, %p49
      %p51 = scmp.ne.s32.totalorder %s43, %s45
      %p52 = scmp.eq.s32.totalorder %s19, 1
      %p53 = por %p51, %p52
      %p54 = scmp.ne.s32.totalorder %s45, %s46
      %p55 = scmp.eq.s32.totalorder %s19, 0
      %p56 = por %p54, %p55
      %p57 = scmp.ne.s32.totalorder %s45, %s46
      %p58 = scmp.eq.s32.totalorder %s20, 1
      %p59 = por %p57, %p58
      %p61 = scmp.ne.s32.totalorder %s46, %s60
      %p62 = scmp.eq.s32.totalorder %s20, 0
      %p63 = por %p61, %p62
      %s65 = sadd.s32 %s64, 1
      %p68 = scmp.eq.s32.totalorder %s14, 1
      %p69 = scmp.ne.s32.totalorder %s64, %s66
      %p70 = scmp.eq.s32.totalorder %s14, 0
      %p71 = por %p69, %p70
      %p72 = scmp.ne.s32.totalorder %s64, %s66
      %p73 = scmp.eq.s32.totalorder %s19, 1
      %p74 = por %p72, %p73
      %p75 = scmp.ne.s32.totalorder %s66, %s67
      %p76 = scmp.eq.s32.totalorder %s19, 0
      %p77 = por %p75, %p76
      %p78 = scmp.ne.s32.totalorder %s66, %s67
      %p79 = scmp.eq.s32.totalorder %s20, 1
      %p80 = por %p78, %p79
      %p82 = scmp.ne.s32.totalorder %s67, %s81
      %p83 = scmp.eq.s32.totalorder %s20, 0
      %p84 = por %p82, %p83
      %s85 = ssub.s32 %s14, %s21
      %p86 = scmp.eq.s32.totalorder %s85, 0
      %s88 = sadd.s32 %s87, 1
      %s89 = scalar_select %p86, %s87, %s88
      %p92 = pneg %p86
      %p93 = scmp.eq.s32.totalorder %s14, 1
      %p94 = por %p92, %p93
      %p95 = scmp.ne.s32.totalorder %s87, %s90
      %p96 = scmp.eq.s32.totalorder %s14, 0
      %p97 = por %p95, %p96
      %p98 = scmp.ne.s32.totalorder %s87, %s90
      %p99 = scmp.eq.s32.totalorder %s19, 1
      %p100 = por %p98, %p99
      %p101 = scmp.ne.s32.totalorder %s90, %s91
      %p102 = scmp.eq.s32.totalorder %s19, 0
      %p103 = por %p101, %p102
      %p104 = scmp.ne.s32.totalorder %s90, %s91
      %p105 = scmp.eq.s32.totalorder %s20, 1
      %p106 = por %p104, %p105
      %p108 = scmp.ne.s32.totalorder %s91, %s107
      %p109 = scmp.eq.s32.totalorder %s20, 0
      %p110 = por %p108, %p109
      %s111 = ssub.s32 %s14, %s21
      %p112 = scmp.eq.s32.totalorder %s111, 0
      %s114 = sadd.s32 %s113, 1
      %s115 = scalar_select %p112, %s113, %s114
      %p118 = pneg %p112
      %p119 = scmp.eq.s32.totalorder %s14, 1
      %p120 = por %p118, %p119
      %p121 = scmp.ne.s32.totalorder %s113, %s116
      %p122 = scmp.eq.s32.totalorder %s14, 0
      %p123 = por %p121, %p122
      %p124 = scmp.ne.s32.totalorder %s113, %s116
      %p125 = scmp.eq.s32.totalorder %s19, 1
      %p126 = por %p124, %p125
      %p127 = scmp.ne.s32.totalorder %s116, %s117
      %p128 = scmp.eq.s32.totalorder %s19, 0
      %p129 = por %p127, %p128
      %p130 = scmp.ne.s32.totalorder %s116, %s117
      %p131 = scmp.eq.s32.totalorder %s20, 1
      %p132 = por %p130, %p131
      %p134 = scmp.ne.s32.totalorder %s117, %s133
      %p135 = scmp.eq.s32.totalorder %s20, 0
      %p136 = por %p134, %p135
      %s137 = ssub.s32 %s14, %s21
      %p138 = scmp.eq.s32.totalorder %s137, 0
      %s140 = sadd.s32 %s139, 1
      %s141 = scalar_select %p138, %s139, %s140
      %p144 = pneg %p138
      %p145 = scmp.eq.s32.totalorder %s14, 1
      %p146 = por %p144, %p145
      %p147 = scmp.ne.s32.totalorder %s139, %s142
      %p148 = scmp.eq.s32.totalorder %s14, 0
      %p149 = por %p147, %p148
      %p150 = scmp.ne.s32.totalorder %s139, %s142
      %p151 = scmp.eq.s32.totalorder %s19, 1
      %p152 = por %p150, %p151
      %p153 = scmp.ne.s32.totalorder %s142, %s143
      %p154 = scmp.eq.s32.totalorder %s19, 0
      %p155 = por %p153, %p154
      %p156 = scmp.ne.s32.totalorder %s142, %s143
      %p157 = scmp.eq.s32.totalorder %s20, 1
      %p158 = por %p156, %p157
      %p160 = scmp.ne.s32.totalorder %s143, %s159
      %p161 = scmp.eq.s32.totalorder %s20, 0
      %p162 = por %p160, %p161
      %s163 = ssub.s32 %s14, %s21
      %p164 = scmp.eq.s32.totalorder %s163, 0
      %s166 = sadd.s32 %s165, 1
      %s167 = scalar_select %p164, %s165, %s166
      %p170 = pneg %p164
      %p171 = scmp.eq.s32.totalorder %s14, 1
      %p172 = por %p170, %p171
      %p173 = scmp.ne.s32.totalorder %s165, %s168
      %p174 = scmp.eq.s32.totalorder %s14, 0
      %p175 = por %p173, %p174
      %p176 = scmp.ne.s32.totalorder %s165, %s168
      %p177 = scmp.eq.s32.totalorder %s19, 1
      %p178 = por %p176, %p177
      %p179 = scmp.ne.s32.totalorder %s168, %s169
      %p180 = scmp.eq.s32.totalorder %s19, 0
      %p181 = por %p179, %p180
      %p182 = scmp.ne.s32.totalorder %s168, %s169
      %p183 = scmp.eq.s32.totalorder %s20, 1
      %p184 = por %p182, %p183
      %p186 = scmp.ne.s32.totalorder %s169, %s185
      %p187 = scmp.eq.s32.totalorder %s20, 0
      %p188 = por %p186, %p187
      %p189 = scmp.le.s32.totalorder 1, %s14
      %p190 = scmp.lt.s32.totalorder %s14, 3
      %p191 = pnand %p189, %p190
      %p192 = pneg %p191
      // Predicated region
      $region9: #{net_forward.2} parent=5 // pred_check
        _
      $region10: #{net_forward.2} parent=5 // pred_check_branch
        %194 = sbr.rel (%p191) target = $region12
      $region11: #{net_forward.2} parent=5 // pred_region
        %s195 = ssub.s32 %s14, 1
        // Predicated region
        $region13: #{net_forward.2} parent=11 // pred_check
          %p196 = pneg %p35
        $region14: #{net_forward.2} parent=11 // pred_check_branch
          %198 = sbr.rel (%p196) target = $region16
        $region15: #{net_forward.2} parent=11 // pred_region
          _
        $region16: #{net_forward.2} parent=11 // pred_fallthru
          _
        // Predicated region
        $region17: #{net_forward.2} parent=11 // pred_check
          %p199 = pneg %p56
        $region18: #{net_forward.2} parent=11 // pred_check_branch
          %201 = sbr.rel (%p199) target = $region20
        $region19: #{net_forward.2} parent=11 // pred_region
          %s203 = ssub.s32 9216, 9216
          %204 = vsyncadd [#allocation4], %s203
          %s205 = sshll.u32 [#allocation3], 4
          %s206 = int_to_ptr.vmem [resolvable:$true] %s205
          %211 = dma.hbm_to_vmem [thread:$0]  %s1, 9216, %s206, [#allocation4], 2304, 2304, 144
        $region20: #{net_forward.2} parent=11 // pred_fallthru
          _
        // Predicated region
        $region21: #{net_forward.2} parent=11 // pred_check
          %p212 = pneg %p77
        $region22: #{net_forward.2} parent=11 // pred_check_branch
          %214 = sbr.rel (%p212) target = $region24
        $region23: #{net_forward.2} parent=11 // pred_region
          %s216 = ssub.s32 576, 576
          %217 = vsyncadd [#allocation6], %s216
          %s219 = sshll.u32 [#allocation5], 4
          %s220 = int_to_ptr.vmem [resolvable:$true] %s219
          %222 = dma.hbm_to_vmem [thread:$0]  %s2, 576, %s220, [#allocation6]
        $region24: #{net_forward.2} parent=11 // pred_fallthru
          _
      $region12: #{net_forward.2} parent=5 // pred_fallthru
        _
      %p223 = scmp.lt.s32.totalorder %s14, 2
      // Predicated region
      $region25: #{net_forward.2} parent=5 // pred_check
        %p224 = pneg %p223
      $region26: #{net_forward.2} parent=5 // pred_check_branch
        %226 = sbr.rel (%p224) target = $region28
      $region27: #{net_forward.2} parent=5 // pred_region
        // Predicated region
        $region29: #{net_forward.2} parent=27 // pred_check
          %p227 = pneg %p97
        $region30: #{net_forward.2} parent=27 // pred_check_branch
          %229 = sbr.rel (%p227) target = $region32
        $region31: #{net_forward.2} parent=27 // pred_region
          %s230 = sand.u32 %s14, 1
          %s231 = scalar_lea.sflag [#allocation4], %s230
          %s232 = sand.u32 %s87, 1
          %s233 = smul.addr %s232, 9216
          %s234 = scalar_lea.vmem [#allocation7], %s233
          %s236 = ssub.s32 147456, 147456
          %237 = vsyncadd %s231, %s236
          %s238 = smul.addr %s14, 1152
          %s239 = smul.addr %s238, 128
          %s240 = scalar_lea.hbm %s3, %s239
          %s241 = sshll.u32 %s234, 4
          %s242 = int_to_ptr.vmem [resolvable:$true] %s241
          %247 = dma.hbm_to_vmem [thread:$0]  %s240, 147456, %s242, %s231, 1024, 1024, 64
        $region32: #{net_forward.2} parent=27 // pred_fallthru
          _
        // Predicated region
        $region33: #{net_forward.2} parent=27 // pred_check
          %p248 = pneg %p123
        $region34: #{net_forward.2} parent=27 // pred_check_branch
          %250 = sbr.rel (%p248) target = $region36
        $region35: #{net_forward.2} parent=27 // pred_region
          %s251 = sand.u32 %s14, 1
          %s252 = scalar_lea.sflag [#allocation4], %s251
          %s253 = sand.u32 %s113, 1
          %s254 = smul.addr %s253, 8
          %s255 = scalar_lea.vmem [#allocation8], %s254
          %s256 = smul.u32 8, %s14
          %s258 = ssub.s32 128, 128
          %259 = vsyncadd %s252, %s258
          %s260 = smul.addr %s256, 16
          %s261 = scalar_lea.hbm %s4, %s260
          %s263 = sshll.u32 %s255, 4
          %s264 = int_to_ptr.vmem [resolvable:$true] %s263
          %266 = dma.hbm_to_vmem [thread:$0]  %s261, 128, %s264, %s252
        $region36: #{net_forward.2} parent=27 // pred_fallthru
          _
        // Predicated region
        $region37: #{net_forward.2} parent=27 // pred_check
          %p267 = pneg %p149
        $region38: #{net_forward.2} parent=27 // pred_check_branch
          %269 = sbr.rel (%p267) target = $region40
        $region39: #{net_forward.2} parent=27 // pred_region
          %s270 = sand.u32 %s14, 1
          %s271 = scalar_lea.sflag [#allocation4], %s270
          %s272 = sand.u32 %s139, 1
          %s273 = smul.addr %s272, 8
          %s274 = scalar_lea.vmem [#allocation9], %s273
          %s275 = smul.u32 8, %s14
          %s277 = ssub.s32 128, 128
          %278 = vsyncadd %s271, %s277
          %s279 = smul.addr %s275, 16
          %s280 = scalar_lea.hbm %s5, %s279
          %s282 = sshll.u32 %s274, 4
          %s283 = int_to_ptr.vmem [resolvable:$true] %s282
          %285 = dma.hbm_to_vmem [thread:$0]  %s280, 128, %s283, %s271
        $region40: #{net_forward.2} parent=27 // pred_fallthru
          _
      $region28: #{net_forward.2} parent=5 // pred_fallthru
        _
      %p286 = scmp.le.s32.totalorder 1, %s14
      %p287 = scmp.lt.s32.totalorder %s14, 3
      %p288 = pnand %p286, %p287
      %p289 = pneg %p288
      // Predicated region
      $region41: #{net_forward.2} parent=5 // pred_check
        _
      $region42: #{net_forward.2} parent=5 // pred_check_branch
        %291 = sbr.rel (%p288) target = $region44
      $region43: #{net_forward.2} parent=5 // pred_region
        %s292 = ssub.s32 %s14, 1
        // Predicated region
        $region45: #{net_forward.2} parent=43 // pred_check
          %p293 = pneg %p56
        $region46: #{net_forward.2} parent=43 // pred_check_branch
          %295 = sbr.rel (%p293) target = $region48
        $region47: #{net_forward.2} parent=43 // pred_region
          %296 = dma.done [#allocation4], 9216
        $region48: #{net_forward.2} parent=43 // pred_fallthru
          _
        // Predicated region
        $region49: #{net_forward.2} parent=43 // pred_check
          %p297 = pneg %p77
        $region50: #{net_forward.2} parent=43 // pred_check_branch
          %299 = sbr.rel (%p297) target = $region52
        $region51: #{net_forward.2} parent=43 // pred_region
          %300 = dma.done [#allocation6], 576
        $region52: #{net_forward.2} parent=43 // pred_fallthru
          _
        %s301 = sand.u32 %s19, 1
        %s302 = scalar_lea.sflag [#allocation4], %s301
        %s303 = sand.u32 %s90, 1
        %s304 = smul.addr %s303, 9216
        %s305 = scalar_lea.vmem [#allocation7], %s304
        // Predicated region
        $region53: #{net_forward.2} parent=43 // pred_check
          %p306 = pneg %p103
        $region54: #{net_forward.2} parent=43 // pred_check_branch
          %308 = sbr.rel (%p306) target = $region56
        $region55: #{net_forward.2} parent=43 // pred_region
          %309 = dma.done %s302, 147456
        $region56: #{net_forward.2} parent=43 // pred_fallthru
          _
        %s310 = sand.u32 %s19, 1
        %s311 = scalar_lea.sflag [#allocation4], %s310
        %s312 = sand.u32 %s116, 1
        %s313 = smul.addr %s312, 8
        %s314 = scalar_lea.vmem [#allocation8], %s313
        // Predicated region
        $region57: #{net_forward.2} parent=43 // pred_check
          %p315 = pneg %p129
        $region58: #{net_forward.2} parent=43 // pred_check_branch
          %317 = sbr.rel (%p315) target = $region60
        $region59: #{net_forward.2} parent=43 // pred_region
          %318 = dma.done %s311, 128
        $region60: #{net_forward.2} parent=43 // pred_fallthru
          _
        %s319 = sand.u32 %s19, 1
        %s320 = scalar_lea.sflag [#allocation4], %s319
        %s321 = sand.u32 %s142, 1
        %s322 = smul.addr %s321, 8
        %s323 = scalar_lea.vmem [#allocation9], %s322
        // Predicated region
        $region61: #{net_forward.2} parent=43 // pred_check
          %p324 = pneg %p155
        $region62: #{net_forward.2} parent=43 // pred_check_branch
          %326 = sbr.rel (%p324) target = $region64
        $region63: #{net_forward.2} parent=43 // pred_region
          %327 = dma.done %s320, 128
        $region64: #{net_forward.2} parent=43 // pred_fallthru
          _
        %p328 = pneg %p35
        %p329 = pneg %p32
        %p330 = pneg %p56
        %p331 = pneg %p53
        %p332 = pneg %p77
        %p333 = pneg %p74
        %s334 = sand.u32 %s19, 1
        %s335 = scalar_lea.sflag [#allocation4], %s334
        %s336 = sand.u32 %s90, 1
        %s337 = smul.addr %s336, 9216
        %s338 = scalar_lea.vmem [#allocation7], %s337
        %p339 = pneg %p103
        %p340 = pneg %p100
        %s341 = sand.u32 %s19, 1
        %s342 = scalar_lea.sflag [#allocation4], %s341
        %s343 = sand.u32 %s116, 1
        %s344 = smul.addr %s343, 8
        %s345 = scalar_lea.vmem [#allocation8], %s344
        %p346 = pneg %p129
        %p347 = pneg %p126
        %s348 = sand.u32 %s19, 1
        %s349 = scalar_lea.sflag [#allocation4], %s348
        %s350 = sand.u32 %s142, 1
        %s351 = smul.addr %s350, 8
        %s352 = scalar_lea.vmem [#allocation9], %s351
        %p353 = pneg %p155
        %p354 = pneg %p152
        %p355 = pneg %p181
        %p356 = pneg %p178
        %s357 = smul.u32 8, %s19
        %p358 = scmp.lt.s32.totalorder %s357, 15
        %s359 = scalar_select %p358, %s357, 15
        %s360 = scalar_lea.vmem %s6, %s359
        %s361 = smul.u32 8, %s19
        %s362 = smul.u32 8, %s19
        %s363 = smul.u32 8, %s19
        %p364 = scmp.lt.s32.totalorder %s363, 15
        %s365 = scalar_select %p364, %s363, 15
        %s366 = scalar_lea.vmem %s6, %s365
        %s367 = smul.u32 8, %s19
        %v369 = vld [vmem:[%s0] sm:$0x1]
        %v370 = vld [vmem:[#allocation3] sm:$0xff]
        %v371 = vld [vmem:[#allocation3 + $0x8] sm:$0xff]
        %v372 = vld [vmem:[#allocation3 + $0x10] sm:$0xff]
        %v373 = vld [vmem:[#allocation3 + $0x18] sm:$0xff]
        %v374 = vld [vmem:[#allocation3 + $0x20] sm:$0xff]
        %v375 = vld [vmem:[#allocation3 + $0x28] sm:$0xff]
        %v376 = vld [vmem:[#allocation3 + $0x30] sm:$0xff]
        %v377 = vld [vmem:[#allocation3 + $0x38] sm:$0xff]
        %v378 = vld [vmem:[#allocation3 + $0x40] sm:$0xff]
        %v379 = vld [vmem:[#allocation3 + $0x48] sm:$0xff]
        %v380 = vld [vmem:[#allocation3 + $0x50] sm:$0xff]
        %v381 = vld [vmem:[#allocation3 + $0x58] sm:$0xff]
        %v382 = vld [vmem:[#allocation3 + $0x60] sm:$0xff]
        %v383 = vld [vmem:[#allocation3 + $0x68] sm:$0xff]
        %v384 = vld [vmem:[#allocation3 + $0x70] sm:$0xff]
        %v385 = vld [vmem:[#allocation3 + $0x78] sm:$0xff]
        %v386 = vld [vmem:[#allocation3 + $0x80] sm:$0xff]
        %v387 = vld [vmem:[#allocation3 + $0x88] sm:$0xff]
        %v388 = vld [vmem:[#allocation3 + $0x90] sm:$0xff]
        %v389 = vld [vmem:[#allocation3 + $0x98] sm:$0xff]
        %v390 = vld [vmem:[#allocation3 + $0xa0] sm:$0xff]
        %v391 = vld [vmem:[#allocation3 + $0xa8] sm:$0xff]
        %v392 = vld [vmem:[#allocation3 + $0xb0] sm:$0xff]
        %v393 = vld [vmem:[#allocation3 + $0xb8] sm:$0xff]
        %v394 = vld [vmem:[#allocation3 + $0xc0] sm:$0xff]
        %v395 = vld [vmem:[#allocation3 + $0xc8] sm:$0xff]
        %v396 = vld [vmem:[#allocation3 + $0xd0] sm:$0xff]
        %v397 = vld [vmem:[#allocation3 + $0xd8] sm:$0xff]
        %v398 = vld [vmem:[#allocation3 + $0xe0] sm:$0xff]
        %v399 = vld [vmem:[#allocation3 + $0xe8] sm:$0xff]
        %v400 = vld [vmem:[#allocation3 + $0xf0] sm:$0xff]
        %v401 = vld [vmem:[#allocation3 + $0xf8] sm:$0xff]
        %v402 = vld [vmem:[#allocation3 + $0x100] sm:$0xff]
        %v403 = vld [vmem:[#allocation3 + $0x108] sm:$0xff]
        %v404 = vld [vmem:[#allocation3 + $0x110] sm:$0xff]
        %v405 = vld [vmem:[#allocation3 + $0x118] sm:$0xff]
        %v406 = vld [vmem:[#allocation3 + $0x120] sm:$0xff]
        %v407 = vld [vmem:[#allocation3 + $0x128] sm:$0xff]
        %v408 = vld [vmem:[#allocation3 + $0x130] sm:$0xff]
        %v409 = vld [vmem:[#allocation3 + $0x138] sm:$0xff]
        %v410 = vld [vmem:[#allocation3 + $0x140] sm:$0xff]
        %v411 = vld [vmem:[#allocation3 + $0x148] sm:$0xff]
        %v412 = vld [vmem:[#allocation3 + $0x150] sm:$0xff]
        %v413 = vld [vmem:[#allocation3 + $0x158] sm:$0xff]
        %v414 = vld [vmem:[#allocation3 + $0x160] sm:$0xff]
        %v415 = vld [vmem:[#allocation3 + $0x168] sm:$0xff]
        %v416 = vld [vmem:[#allocation3 + $0x170] sm:$0xff]
        %v417 = vld [vmem:[#allocation3 + $0x178] sm:$0xff]
        %v418 = vld [vmem:[#allocation3 + $0x180] sm:$0xff]
        %v419 = vld [vmem:[#allocation3 + $0x188] sm:$0xff]
        %v420 = vld [vmem:[#allocation3 + $0x190] sm:$0xff]
        %v421 = vld [vmem:[#allocation3 + $0x198] sm:$0xff]
        %v422 = vld [vmem:[#allocation3 + $0x1a0] sm:$0xff]
        %v423 = vld [vmem:[#allocation3 + $0x1a8] sm:$0xff]
        %v424 = vld [vmem:[#allocation3 + $0x1b0] sm:$0xff]
        %v425 = vld [vmem:[#allocation3 + $0x1b8] sm:$0xff]
        %v426 = vld [vmem:[#allocation3 + $0x1c0] sm:$0xff]
        %v427 = vld [vmem:[#allocation3 + $0x1c8] sm:$0xff]
        %v428 = vld [vmem:[#allocation3 + $0x1d0] sm:$0xff]
        %v429 = vld [vmem:[#allocation3 + $0x1d8] sm:$0xff]
        %v430 = vld [vmem:[#allocation3 + $0x1e0] sm:$0xff]
        %v431 = vld [vmem:[#allocation3 + $0x1e8] sm:$0xff]
        %v432 = vld [vmem:[#allocation3 + $0x1f0] sm:$0xff]
        %v433 = vld [vmem:[#allocation3 + $0x1f8] sm:$0xff]
        %v434 = vld [vmem:[#allocation3 + $0x200] sm:$0xff]
        %v435 = vld [vmem:[#allocation3 + $0x208] sm:$0xff]
        %v436 = vld [vmem:[#allocation3 + $0x210] sm:$0xff]
        %v437 = vld [vmem:[#allocation3 + $0x218] sm:$0xff]
        %v438 = vld [vmem:[#allocation3 + $0x220] sm:$0xff]
        %v439 = vld [vmem:[#allocation3 + $0x228] sm:$0xff]
        %v440 = vld [vmem:[#allocation3 + $0x230] sm:$0xff]
        %v441 = vld [vmem:[#allocation3 + $0x238] sm:$0xff]
        %v442 = vld [vmem:[#allocation5] sm:$0xff]
        %v443 = vld [vmem:[#allocation5 + $0x8] sm:$0xff]
        %v444 = vld [vmem:[#allocation5 + $0x10] sm:$0xff]
        %v445 = vld [vmem:[#allocation5 + $0x18] sm:$0xff]
        %v446 = vld [vmem:[#allocation5 + $0x20] sm:$0xf]
        %v452 = vlaneseq
        %v453 = vshrl.u32 %v452, 7
        %v454 = vsub.s32 0, %v453
        %v455 = vrot.slane %v442, %v454
        %v456 = vlaneseq
        %v457 = vshrl.u32 %v456, 7
        %v458 = vsub.s32 1, %v457
        %v459 = vrot.slane %v442, %v458
        %v460 = vlaneseq
        %v461 = vshrl.u32 %v460, 7
        %v462 = vsub.s32 2, %v461
        %v463 = vrot.slane %v442, %v462
        %v464 = vlaneseq
        %v465 = vshrl.u32 %v464, 7
        %v466 = vsub.s32 3, %v465
        %v467 = vrot.slane %v442, %v466
        %v468 = vlaneseq
        %v469 = vshrl.u32 %v468, 7
        %v470 = vsub.s32 4, %v469
        %v471 = vrot.slane %v442, %v470
        %v472 = vlaneseq
        %v473 = vshrl.u32 %v472, 7
        %v474 = vsub.s32 5, %v473
        %v475 = vrot.slane %v442, %v474
        %v476 = vlaneseq
        %v477 = vshrl.u32 %v476, 7
        %v478 = vsub.s32 6, %v477
        %v479 = vrot.slane %v442, %v478
        %v480 = vlaneseq
        %v481 = vshrl.u32 %v480, 7
        %v482 = vsub.s32 7, %v481
        %v483 = vrot.slane %v442, %v482
        %v484 = vlaneseq
        %v485 = vshrl.u32 %v484, 7
        %v486 = vsub.s32 0, %v485
        %v487 = vrot.slane %v443, %v486
        %v488 = vlaneseq
        %v489 = vshrl.u32 %v488, 7
        %v490 = vsub.s32 1, %v489
        %v491 = vrot.slane %v443, %v490
        %v492 = vlaneseq
        %v493 = vshrl.u32 %v492, 7
        %v494 = vsub.s32 2, %v493
        %v495 = vrot.slane %v443, %v494
        %v496 = vlaneseq
        %v497 = vshrl.u32 %v496, 7
        %v498 = vsub.s32 3, %v497
        %v499 = vrot.slane %v443, %v498
        %v500 = vlaneseq
        %v501 = vshrl.u32 %v500, 7
        %v502 = vsub.s32 4, %v501
        %v503 = vrot.slane %v443, %v502
        %v504 = vlaneseq
        %v505 = vshrl.u32 %v504, 7
        %v506 = vsub.s32 5, %v505
        %v507 = vrot.slane %v443, %v506
        %v508 = vlaneseq
        %v509 = vshrl.u32 %v508, 7
        %v510 = vsub.s32 6, %v509
        %v511 = vrot.slane %v443, %v510
        %v512 = vlaneseq
        %v513 = vshrl.u32 %v512, 7
        %v514 = vsub.s32 7, %v513
        %v515 = vrot.slane %v443, %v514
        %v516 = vlaneseq
        %v517 = vshrl.u32 %v516, 7
        %v518 = vsub.s32 0, %v517
        %v519 = vrot.slane %v444, %v518
        %v520 = vlaneseq
        %v521 = vshrl.u32 %v520, 7
        %v522 = vsub.s32 1, %v521
        %v523 = vrot.slane %v444, %v522
        %v524 = vlaneseq
        %v525 = vshrl.u32 %v524, 7
        %v526 = vsub.s32 2, %v525
        %v527 = vrot.slane %v444, %v526
        %v528 = vlaneseq
        %v529 = vshrl.u32 %v528, 7
        %v530 = vsub.s32 3, %v529
        %v531 = vrot.slane %v444, %v530
        %v532 = vlaneseq
        %v533 = vshrl.u32 %v532, 7
        %v534 = vsub.s32 4, %v533
        %v535 = vrot.slane %v444, %v534
        %v536 = vlaneseq
        %v537 = vshrl.u32 %v536, 7
        %v538 = vsub.s32 5, %v537
        %v539 = vrot.slane %v444, %v538
        %v540 = vlaneseq
        %v541 = vshrl.u32 %v540, 7
        %v542 = vsub.s32 6, %v541
        %v543 = vrot.slane %v444, %v542
        %v544 = vlaneseq
        %v545 = vshrl.u32 %v544, 7
        %v546 = vsub.s32 7, %v545
        %v547 = vrot.slane %v444, %v546
        %v548 = vlaneseq
        %v549 = vshrl.u32 %v548, 7
        %v550 = vsub.s32 0, %v549
        %v551 = vrot.slane %v445, %v550
        %v552 = vlaneseq
        %v553 = vshrl.u32 %v552, 7
        %v554 = vsub.s32 1, %v553
        %v555 = vrot.slane %v445, %v554
        %v556 = vlaneseq
        %v557 = vshrl.u32 %v556, 7
        %v558 = vsub.s32 2, %v557
        %v559 = vrot.slane %v445, %v558
        %v560 = vlaneseq
        %v561 = vshrl.u32 %v560, 7
        %v562 = vsub.s32 3, %v561
        %v563 = vrot.slane %v445, %v562
        %v564 = vlaneseq
        %v565 = vshrl.u32 %v564, 7
        %v566 = vsub.s32 4, %v565
        %v567 = vrot.slane %v445, %v566
        %v568 = vlaneseq
        %v569 = vshrl.u32 %v568, 7
        %v570 = vsub.s32 5, %v569
        %v571 = vrot.slane %v445, %v570
        %v572 = vlaneseq
        %v573 = vshrl.u32 %v572, 7
        %v574 = vsub.s32 6, %v573
        %v575 = vrot.slane %v445, %v574
        %v576 = vlaneseq
        %v577 = vshrl.u32 %v576, 7
        %v578 = vsub.s32 7, %v577
        %v579 = vrot.slane %v445, %v578
        %v580 = vlaneseq
        %v581 = vshrl.u32 %v580, 7
        %v582 = vsub.s32 0, %v581
        %v583 = vrot.slane %v446, %v582
        %v584 = vlaneseq
        %v585 = vshrl.u32 %v584, 7
        %v586 = vsub.s32 1, %v585
        %v587 = vrot.slane %v446, %v586
        %v588 = vlaneseq
        %v589 = vshrl.u32 %v588, 7
        %v590 = vsub.s32 2, %v589
        %v591 = vrot.slane %v446, %v590
        %v592 = vlaneseq
        %v593 = vshrl.u32 %v592, 7
        %v594 = vsub.s32 3, %v593
        %v595 = vrot.slane %v446, %v594
        %v704 = vunpack.c.l.b16 %v370
        %v705 = vunpack.c.h.b16 %v370
        %v706 = vunpack.c.l.b16 %v371
        %v707 = vunpack.c.h.b16 %v371
        %v708 = vunpack.c.l.b16 %v372
        %v709 = vunpack.c.h.b16 %v372
        %v710 = vunpack.c.l.b16 %v373
        %v711 = vunpack.c.h.b16 %v373
        %v712 = vunpack.c.l.b16 %v374
        %v713 = vunpack.c.h.b16 %v374
        %v714 = vunpack.c.l.b16 %v375
        %v715 = vunpack.c.h.b16 %v375
        %v716 = vunpack.c.l.b16 %v376
        %v717 = vunpack.c.h.b16 %v376
        %v718 = vunpack.c.l.b16 %v377
        %v719 = vunpack.c.h.b16 %v377
        %v720 = vunpack.c.l.b16 %v378
        %v721 = vunpack.c.h.b16 %v378
        %v722 = vunpack.c.l.b16 %v379
        %v723 = vunpack.c.h.b16 %v379
        %v724 = vunpack.c.l.b16 %v380
        %v725 = vunpack.c.h.b16 %v380
        %v726 = vunpack.c.l.b16 %v381
        %v727 = vunpack.c.h.b16 %v381
        %v728 = vunpack.c.l.b16 %v382
        %v729 = vunpack.c.h.b16 %v382
        %v730 = vunpack.c.l.b16 %v383
        %v731 = vunpack.c.h.b16 %v383
        %v732 = vunpack.c.l.b16 %v384
        %v733 = vunpack.c.h.b16 %v384
        %v734 = vunpack.c.l.b16 %v385
        %v735 = vunpack.c.h.b16 %v385
        %v736 = vunpack.c.l.b16 %v386
        %v737 = vunpack.c.h.b16 %v386
        %v738 = vunpack.c.l.b16 %v387
        %v739 = vunpack.c.h.b16 %v387
        %v740 = vunpack.c.l.b16 %v388
        %v741 = vunpack.c.h.b16 %v388
        %v742 = vunpack.c.l.b16 %v389
        %v743 = vunpack.c.h.b16 %v389
        %v744 = vunpack.c.l.b16 %v390
        %v745 = vunpack.c.h.b16 %v390
        %v746 = vunpack.c.l.b16 %v391
        %v747 = vunpack.c.h.b16 %v391
        %v748 = vunpack.c.l.b16 %v392
        %v749 = vunpack.c.h.b16 %v392
        %v750 = vunpack.c.l.b16 %v393
        %v751 = vunpack.c.h.b16 %v393
        %v752 = vunpack.c.l.b16 %v394
        %v753 = vunpack.c.h.b16 %v394
        %v754 = vunpack.c.l.b16 %v395
        %v755 = vunpack.c.h.b16 %v395
        %v756 = vunpack.c.l.b16 %v396
        %v757 = vunpack.c.h.b16 %v396
        %v758 = vunpack.c.l.b16 %v397
        %v759 = vunpack.c.h.b16 %v397
        %v760 = vunpack.c.l.b16 %v398
        %v761 = vunpack.c.h.b16 %v398
        %v762 = vunpack.c.l.b16 %v399
        %v763 = vunpack.c.h.b16 %v399
        %v764 = vunpack.c.l.b16 %v400
        %v765 = vunpack.c.h.b16 %v400
        %v766 = vunpack.c.l.b16 %v401
        %v767 = vunpack.c.h.b16 %v401
        %v768 = vunpack.c.l.b16 %v402
        %v769 = vunpack.c.h.b16 %v402
        %v770 = vunpack.c.l.b16 %v403
        %v771 = vunpack.c.h.b16 %v403
        %v772 = vunpack.c.l.b16 %v404
        %v773 = vunpack.c.h.b16 %v404
        %v774 = vunpack.c.l.b16 %v405
        %v775 = vunpack.c.h.b16 %v405
        %v776 = vunpack.c.l.b16 %v406
        %v777 = vunpack.c.h.b16 %v406
        %v778 = vunpack.c.l.b16 %v407
        %v779 = vunpack.c.h.b16 %v407
        %v780 = vunpack.c.l.b16 %v408
        %v781 = vunpack.c.h.b16 %v408
        %v782 = vunpack.c.l.b16 %v409
        %v783 = vunpack.c.h.b16 %v409
        %v784 = vunpack.c.l.b16 %v410
        %v785 = vunpack.c.h.b16 %v410
        %v786 = vunpack.c.l.b16 %v411
        %v787 = vunpack.c.h.b16 %v411
        %v788 = vunpack.c.l.b16 %v412
        %v789 = vunpack.c.h.b16 %v412
        %v790 = vunpack.c.l.b16 %v413
        %v791 = vunpack.c.h.b16 %v413
        %v792 = vunpack.c.l.b16 %v414
        %v793 = vunpack.c.h.b16 %v414
        %v794 = vunpack.c.l.b16 %v415
        %v795 = vunpack.c.h.b16 %v415
        %v796 = vunpack.c.l.b16 %v416
        %v797 = vunpack.c.h.b16 %v416
        %v798 = vunpack.c.l.b16 %v417
        %v799 = vunpack.c.h.b16 %v417
        %v800 = vunpack.c.l.b16 %v418
        %v801 = vunpack.c.h.b16 %v418
        %v802 = vunpack.c.l.b16 %v419
        %v803 = vunpack.c.h.b16 %v419
        %v804 = vunpack.c.l.b16 %v420
        %v805 = vunpack.c.h.b16 %v420
        %v806 = vunpack.c.l.b16 %v421
        %v807 = vunpack.c.h.b16 %v421
        %v808 = vunpack.c.l.b16 %v422
        %v809 = vunpack.c.h.b16 %v422
        %v810 = vunpack.c.l.b16 %v423
        %v811 = vunpack.c.h.b16 %v423
        %v812 = vunpack.c.l.b16 %v424
        %v813 = vunpack.c.h.b16 %v424
        %v814 = vunpack.c.l.b16 %v425
        %v815 = vunpack.c.h.b16 %v425
        %v816 = vunpack.c.l.b16 %v426
        %v817 = vunpack.c.h.b16 %v426
        %v818 = vunpack.c.l.b16 %v427
        %v819 = vunpack.c.h.b16 %v427
        %v820 = vunpack.c.l.b16 %v428
        %v821 = vunpack.c.h.b16 %v428
        %v822 = vunpack.c.l.b16 %v429
        %v823 = vunpack.c.h.b16 %v429
        %v824 = vunpack.c.l.b16 %v430
        %v825 = vunpack.c.h.b16 %v430
        %v826 = vunpack.c.l.b16 %v431
        %v827 = vunpack.c.h.b16 %v431
        %v828 = vunpack.c.l.b16 %v432
        %v829 = vunpack.c.h.b16 %v432
        %v830 = vunpack.c.l.b16 %v433
        %v831 = vunpack.c.h.b16 %v433
        %v832 = vunpack.c.l.b16 %v434
        %v833 = vunpack.c.h.b16 %v434
        %v834 = vunpack.c.l.b16 %v435
        %v835 = vunpack.c.h.b16 %v435
        %v836 = vunpack.c.l.b16 %v436
        %v837 = vunpack.c.h.b16 %v436
        %v838 = vunpack.c.l.b16 %v437
        %v839 = vunpack.c.h.b16 %v437
        %v840 = vunpack.c.l.b16 %v438
        %v841 = vunpack.c.h.b16 %v438
        %v842 = vunpack.c.l.b16 %v439
        %v843 = vunpack.c.h.b16 %v439
        %v844 = vunpack.c.l.b16 %v440
        %v845 = vunpack.c.h.b16 %v440
        %v846 = vunpack.c.l.b16 %v441
        %v847 = vunpack.c.h.b16 %v441
        %v848 = vpack.c.b16 %v740, %v704
        %v849 = vpack.c.b16 %v741, %v705
        %v850 = vpack.c.b16 %v742, %v706
        %v851 = vpack.c.b16 %v743, %v707
        %v852 = vpack.c.b16 %v744, %v708
        %v853 = vpack.c.b16 %v745, %v709
        %v854 = vpack.c.b16 %v746, %v710
        %v855 = vpack.c.b16 %v747, %v711
        %v856 = vpack.c.b16 %v748, %v712
        %v857 = vpack.c.b16 %v749, %v713
        %v858 = vpack.c.b16 %v750, %v714
        %v859 = vpack.c.b16 %v751, %v715
        %v860 = vpack.c.b16 %v752, %v716
        %v861 = vpack.c.b16 %v753, %v717
        %v862 = vpack.c.b16 %v754, %v718
        %v863 = vpack.c.b16 %v755, %v719
        %v864 = vpack.c.b16 %v756, %v720
        %v865 = vpack.c.b16 %v757, %v721
        %v866 = vpack.c.b16 %v758, %v722
        %v867 = vpack.c.b16 %v759, %v723
        %v868 = vpack.c.b16 %v760, %v724
        %v869 = vpack.c.b16 %v761, %v725
        %v870 = vpack.c.b16 %v762, %v726
        %v871 = vpack.c.b16 %v763, %v727
        %v872 = vpack.c.b16 %v764, %v728
        %v873 = vpack.c.b16 %v765, %v729
        %v874 = vpack.c.b16 %v766, %v730
        %v875 = vpack.c.b16 %v767, %v731
        %v876 = vpack.c.b16 %v768, %v732
        %v877 = vpack.c.b16 %v769, %v733
        %v878 = vpack.c.b16 %v770, %v734
        %v879 = vpack.c.b16 %v771, %v735
        %v880 = vpack.c.b16 %v772, %v736
        %v881 = vpack.c.b16 %v773, %v737
        %v882 = vpack.c.b16 %v774, %v738
        %v883 = vpack.c.b16 %v775, %v739
        %v884 = vpack.c.b16 %v812, %v776
        %v885 = vpack.c.b16 %v813, %v777
        %v886 = vpack.c.b16 %v814, %v778
        %v887 = vpack.c.b16 %v815, %v779
        %v888 = vpack.c.b16 %v816, %v780
        %v889 = vpack.c.b16 %v817, %v781
        %v890 = vpack.c.b16 %v818, %v782
        %v891 = vpack.c.b16 %v819, %v783
        %v892 = vpack.c.b16 %v820, %v784
        %v893 = vpack.c.b16 %v821, %v785
        %v894 = vpack.c.b16 %v822, %v786
        %v895 = vpack.c.b16 %v823, %v787
        %v896 = vpack.c.b16 %v824, %v788
        %v897 = vpack.c.b16 %v825, %v789
        %v898 = vpack.c.b16 %v826, %v790
        %v899 = vpack.c.b16 %v827, %v791
        %v900 = vpack.c.b16 %v828, %v792
        %v901 = vpack.c.b16 %v829, %v793
        %v902 = vpack.c.b16 %v830, %v794
        %v903 = vpack.c.b16 %v831, %v795
        %v904 = vpack.c.b16 %v832, %v796
        %v905 = vpack.c.b16 %v833, %v797
        %v906 = vpack.c.b16 %v834, %v798
        %v907 = vpack.c.b16 %v835, %v799
        %v908 = vpack.c.b16 %v836, %v800
        %v909 = vpack.c.b16 %v837, %v801
        %v910 = vpack.c.b16 %v838, %v802
        %v911 = vpack.c.b16 %v839, %v803
        %v912 = vpack.c.b16 %v840, %v804
        %v913 = vpack.c.b16 %v841, %v805
        %v914 = vpack.c.b16 %v842, %v806
        %v915 = vpack.c.b16 %v843, %v807
        %v916 = vpack.c.b16 %v844, %v808
        %v917 = vpack.c.b16 %v845, %v809
        %v918 = vpack.c.b16 %v846, %v810
        %v919 = vpack.c.b16 %v847, %v811
        %vm992 = vcmask 261120
        %v994 = vsel %vm992, %v369, 0
        %996 = vmatprep.subr.bf16.mxu0 0
        %997 = vmatpush1.bf16.msra.mxu0 0
        %998 = vmatprep.subr.bf16.mxu0 0
        %999 = vmatpush1.bf16.msra.mxu0 0
        %1000 = vmatprep.subr.bf16.mxu0 0
        %1001 = vmatpush1.bf16.msra.mxu0 0
        %1002 = vmatprep.subr.bf16.mxu0 0
        %1003 = vmatpush1.bf16.msra.mxu0 0
        %1004 = vmatprep.subr.bf16.mxu0 0
        %1005 = vmatpush1.bf16.msra.mxu0 0
        %1006 = vmatprep.subr.bf16.mxu0 0
        %1007 = vmatpush1.bf16.msra.mxu0 0
        %1008 = vmatprep.subr.bf16.mxu0 %v885
        %1009 = vmatpush1.bf16.msra.mxu0 %v884
        %1010 = vmatprep.subr.bf16.mxu0 %v849
        %1011 = vmatpush1.bf16.msra.mxu0 %v848
        %1012 = vmatprep.subr.bf16.mxu0 0
        %1013 = vmatpush2.bf16.msra.mxu0 0
        %1014 = vmatprep.subr.bf16.mxu0 0
        %1015 = vmatpush2.bf16.msra.mxu0 0
        %1016 = vmatprep.subr.bf16.mxu0 0
        %1017 = vmatpush2.bf16.msra.mxu0 0
        %1018 = vmatprep.subr.bf16.mxu0 0
        %1019 = vmatpush2.bf16.msra.mxu0 0
        %1020 = vmatprep.subr.bf16.mxu0 0
        %1021 = vmatpush2.bf16.msra.mxu0 0
        %1022 = vmatprep.subr.bf16.mxu0 0
        %1023 = vmatpush2.bf16.msra.mxu0 0
        %1024 = vmatprep.subr.bf16.mxu0 0
        %1025 = vmatpush2.bf16.msra.mxu0 0
        %1026 = vmatprep.subr.bf16.mxu0 0
        %1027 = vmatpush2.bf16.msra.mxu0 0
        %1028 = vmatprep.mubr.bf16.mxu0 0
        %1029 = vmatmul.mubr.bf16.gmra.mxu0 %v994
        %v1030 = vpop.f32.mrf.mxu0
        %v1031 = vadd.f32 %v455, %v1030
        %v1032 = vpop.f32.mrf.mxu0
        %v1033 = vadd.f32 %v459, %v1032
        %v1034 = vpop.f32.mrf.mxu0
        %v1035 = vpop.f32.mrf.mxu0
        %1036 = vdwg.mxu0
        %1037 = vmatprep.subr.bf16.mxu0 0
        %1038 = vmatpush1.bf16.msra.mxu0 0
        %1039 = vmatprep.subr.bf16.mxu0 0
        %1040 = vmatpush1.bf16.msra.mxu0 0
        %1041 = vmatprep.subr.bf16.mxu0 0
        %1042 = vmatpush1.bf16.msra.mxu0 0
        %1043 = vmatprep.subr.bf16.mxu0 0
        %1044 = vmatpush1.bf16.msra.mxu0 0
        %1045 = vmatprep.subr.bf16.mxu0 0
        %1046 = vmatpush1.bf16.msra.mxu0 0
        %1047 = vmatprep.subr.bf16.mxu0 0
        %1048 = vmatpush1.bf16.msra.mxu0 0
        %1049 = vmatprep.subr.bf16.mxu0 %v887
        %1050 = vmatpush1.bf16.msra.mxu0 %v886
        %1051 = vmatprep.subr.bf16.mxu0 %v851
        %1052 = vmatpush1.bf16.msra.mxu0 %v850
        %1053 = vmatprep.subr.bf16.mxu0 0
        %1054 = vmatpush2.bf16.msra.mxu0 0
        %1055 = vmatprep.subr.bf16.mxu0 0
        %1056 = vmatpush2.bf16.msra.mxu0 0
        %1057 = vmatprep.subr.bf16.mxu0 0
        %1058 = vmatpush2.bf16.msra.mxu0 0
        %1059 = vmatprep.subr.bf16.mxu0 0
        %1060 = vmatpush2.bf16.msra.mxu0 0
        %1061 = vmatprep.subr.bf16.mxu0 0
        %1062 = vmatpush2.bf16.msra.mxu0 0
        %1063 = vmatprep.subr.bf16.mxu0 0
        %1064 = vmatpush2.bf16.msra.mxu0 0
        %1065 = vmatprep.subr.bf16.mxu0 0
        %1066 = vmatpush2.bf16.msra.mxu0 0
        %1067 = vmatprep.subr.bf16.mxu0 0
        %1068 = vmatpush2.bf16.msra.mxu0 0
        %1069 = vmatprep.mubr.bf16.mxu0 0
        %1070 = vmatmul.mubr.bf16.gmra.mxu0 %v994
        %v1071 = vpop.f32.mrf.mxu0
        %v1072 = vadd.f32 %v463, %v1071
        %v1073 = vpop.f32.mrf.mxu0
        %v1074 = vadd.f32 %v467, %v1073
        %v1075 = vpop.f32.mrf.mxu0
        %v1076 = vpop.f32.mrf.mxu0
        %1077 = vdwg.mxu0
        %1078 = vmatprep.subr.bf16.mxu0 0
        %1079 = vmatpush1.bf16.msra.mxu0 0
        %1080 = vmatprep.subr.bf16.mxu0 0
        %1081 = vmatpush1.bf16.msra.mxu0 0
        %1082 = vmatprep.subr.bf16.mxu0 0
        %1083 = vmatpush1.bf16.msra.mxu0 0
        %1084 = vmatprep.subr.bf16.mxu0 0
        %1085 = vmatpush1.bf16.msra.mxu0 0
        %1086 = vmatprep.subr.bf16.mxu0 0
        %1087 = vmatpush1.bf16.msra.mxu0 0
        %1088 = vmatprep.subr.bf16.mxu0 0
        %1089 = vmatpush1.bf16.msra.mxu0 0
        %1090 = vmatprep.subr.bf16.mxu0 %v889
        %1091 = vmatpush1.bf16.msra.mxu0 %v888
        %1092 = vmatprep.subr.bf16.mxu0 %v853
        %1093 = vmatpush1.bf16.msra.mxu0 %v852
        %1094 = vmatprep.subr.bf16.mxu0 0
        %1095 = vmatpush2.bf16.msra.mxu0 0
        %1096 = vmatprep.subr.bf16.mxu0 0
        %1097 = vmatpush2.bf16.msra.mxu0 0
        %1098 = vmatprep.subr.bf16.mxu0 0
        %1099 = vmatpush2.bf16.msra.mxu0 0
        %1100 = vmatprep.subr.bf16.mxu0 0
        %1101 = vmatpush2.bf16.msra.mxu0 0
        %1102 = vmatprep.subr.bf16.mxu0 0
        %1103 = vmatpush2.bf16.msra.mxu0 0
        %1104 = vmatprep.subr.bf16.mxu0 0
        %1105 = vmatpush2.bf16.msra.mxu0 0
        %1106 = vmatprep.subr.bf16.mxu0 0
        %1107 = vmatpush2.bf16.msra.mxu0 0
        %1108 = vmatprep.subr.bf16.mxu0 0
        %1109 = vmatpush2.bf16.msra.mxu0 0
        %1110 = vmatprep.mubr.bf16.mxu0 0
        %1111 = vmatmul.mubr.bf16.gmra.mxu0 %v994
        %v1112 = vpop.f32.mrf.mxu0
        %v1113 = vadd.f32 %v471, %v1112
        %v1114 = vpop.f32.mrf.mxu0
        %v1115 = vadd.f32 %v475, %v1114
        %v1116 = vpop.f32.mrf.mxu0
        %v1117 = vpop.f32.mrf.mxu0
        %1118 = vdwg.mxu0
        %1119 = vmatprep.subr.bf16.mxu0 0
        %1120 = vmatpush1.bf16.msra.mxu0 0
        %1121 = vmatprep.subr.bf16.mxu0 0
        %1122 = vmatpush1.bf16.msra.mxu0 0
        %1123 = vmatprep.subr.bf16.mxu0 0
        %1124 = vmatpush1.bf16.msra.mxu0 0
        %1125 = vmatprep.subr.bf16.mxu0 0
        %1126 = vmatpush1.bf16.msra.mxu0 0
        %1127 = vmatprep.subr.bf16.mxu0 0
        %1128 = vmatpush1.bf16.msra.mxu0 0
        %1129 = vmatprep.subr.bf16.mxu0 0
        %1130 = vmatpush1.bf16.msra.mxu0 0
        %1131 = vmatprep.subr.bf16.mxu0 %v891
        %1132 = vmatpush1.bf16.msra.mxu0 %v890
        %1133 = vmatprep.subr.bf16.mxu0 %v855
        %1134 = vmatpush1.bf16.msra.mxu0 %v854
        %1135 = vmatprep.subr.bf16.mxu0 0
        %1136 = vmatpush2.bf16.msra.mxu0 0
        %1137 = vmatprep.subr.bf16.mxu0 0
        %1138 = vmatpush2.bf16.msra.mxu0 0
        %1139 = vmatprep.subr.bf16.mxu0 0
        %1140 = vmatpush2.bf16.msra.mxu0 0
        %1141 = vmatprep.subr.bf16.mxu0 0
        %1142 = vmatpush2.bf16.msra.mxu0 0
        %1143 = vmatprep.subr.bf16.mxu0 0
        %1144 = vmatpush2.bf16.msra.mxu0 0
        %1145 = vmatprep.subr.bf16.mxu0 0
        %1146 = vmatpush2.bf16.msra.mxu0 0
        %1147 = vmatprep.subr.bf16.mxu0 0
        %1148 = vmatpush2.bf16.msra.mxu0 0
        %1149 = vmatprep.subr.bf16.mxu0 0
        %1150 = vmatpush2.bf16.msra.mxu0 0
        %1151 = vmatprep.mubr.bf16.mxu0 0
        %1152 = vmatmul.mubr.bf16.gmra.mxu0 %v994
        %v1153 = vpop.f32.mrf.mxu0
        %v1154 = vadd.f32 %v479, %v1153
        %v1155 = vpop.f32.mrf.mxu0
        %v1156 = vadd.f32 %v483, %v1155
        %v1157 = vpop.f32.mrf.mxu0
        %v1158 = vpop.f32.mrf.mxu0
        %1159 = vdwg.mxu0
        %1160 = vmatprep.subr.bf16.mxu0 0
        %1161 = vmatpush1.bf16.msra.mxu0 0
        %1162 = vmatprep.subr.bf16.mxu0 0
        %1163 = vmatpush1.bf16.msra.mxu0 0
        %1164 = vmatprep.subr.bf16.mxu0 0
        %1165 = vmatpush1.bf16.msra.mxu0 0
        %1166 = vmatprep.subr.bf16.mxu0 0
        %1167 = vmatpush1.bf16.msra.mxu0 0
        %1168 = vmatprep.subr.bf16.mxu0 0
        %1169 = vmatpush1.bf16.msra.mxu0 0
        %1170 = vmatprep.subr.bf16.mxu0 0
        %1171 = vmatpush1.bf16.msra.mxu0 0
        %1172 = vmatprep.subr.bf16.mxu0 %v893
        %1173 = vmatpush1.bf16.msra.mxu0 %v892
        %1174 = vmatprep.subr.bf16.mxu0 %v857
        %1175 = vmatpush1.bf16.msra.mxu0 %v856
        %1176 = vmatprep.subr.bf16.mxu0 0
        %1177 = vmatpush2.bf16.msra.mxu0 0
        %1178 = vmatprep.subr.bf16.mxu0 0
        %1179 = vmatpush2.bf16.msra.mxu0 0
        %1180 = vmatprep.subr.bf16.mxu0 0
        %1181 = vmatpush2.bf16.msra.mxu0 0
        %1182 = vmatprep.subr.bf16.mxu0 0
        %1183 = vmatpush2.bf16.msra.mxu0 0
        %1184 = vmatprep.subr.bf16.mxu0 0
        %1185 = vmatpush2.bf16.msra.mxu0 0
        %1186 = vmatprep.subr.bf16.mxu0 0
        %1187 = vmatpush2.bf16.msra.mxu0 0
        %1188 = vmatprep.subr.bf16.mxu0 0
        %1189 = vmatpush2.bf16.msra.mxu0 0
        %1190 = vmatprep.subr.bf16.mxu0 0
        %1191 = vmatpush2.bf16.msra.mxu0 0
        %1192 = vmatprep.mubr.bf16.mxu0 0
        %1193 = vmatmul.mubr.bf16.gmra.mxu0 %v994
        %v1194 = vpop.f32.mrf.mxu0
        %v1195 = vadd.f32 %v487, %v1194
        %v1196 = vpop.f32.mrf.mxu0
        %v1197 = vadd.f32 %v491, %v1196
        %v1198 = vpop.f32.mrf.mxu0
        %v1199 = vpop.f32.mrf.mxu0
        %1200 = vdwg.mxu0
        %1201 = vmatprep.subr.bf16.mxu0 0
        %1202 = vmatpush1.bf16.msra.mxu0 0
        %1203 = vmatprep.subr.bf16.mxu0 0
        %1204 = vmatpush1.bf16.msra.mxu0 0
        %1205 = vmatprep.subr.bf16.mxu0 0
        %1206 = vmatpush1.bf16.msra.mxu0 0
        %1207 = vmatprep.subr.bf16.mxu0 0
        %1208 = vmatpush1.bf16.msra.mxu0 0
        %1209 = vmatprep.subr.bf16.mxu0 0
        %1210 = vmatpush1.bf16.msra.mxu0 0
        %1211 = vmatprep.subr.bf16.mxu0 0
        %1212 = vmatpush1.bf16.msra.mxu0 0
        %1213 = vmatprep.subr.bf16.mxu0 %v895
        %1214 = vmatpush1.bf16.msra.mxu0 %v894
        %1215 = vmatprep.subr.bf16.mxu0 %v859
        %1216 = vmatpush1.bf16.msra.mxu0 %v858
        %1217 = vmatprep.subr.bf16.mxu0 0
        %1218 = vmatpush2.bf16.msra.mxu0 0
        %1219 = vmatprep.subr.bf16.mxu0 0
        %1220 = vmatpush2.bf16.msra.mxu0 0
        %1221 = vmatprep.subr.bf16.mxu0 0
        %1222 = vmatpush2.bf16.msra.mxu0 0
        %1223 = vmatprep.subr.bf16.mxu0 0
        %1224 = vmatpush2.bf16.msra.mxu0 0
        %1225 = vmatprep.subr.bf16.mxu0 0
        %1226 = vmatpush2.bf16.msra.mxu0 0
        %1227 = vmatprep.subr.bf16.mxu0 0
        %1228 = vmatpush2.bf16.msra.mxu0 0
        %1229 = vmatprep.subr.bf16.mxu0 0
        %1230 = vmatpush2.bf16.msra.mxu0 0
        %1231 = vmatprep.subr.bf16.mxu0 0
        %1232 = vmatpush2.bf16.msra.mxu0 0
        %1233 = vmatprep.mubr.bf16.mxu0 0
        %1234 = vmatmul.mubr.bf16.gmra.mxu0 %v994
        %v1235 = vpop.f32.mrf.mxu0
        %v1236 = vadd.f32 %v495, %v1235
        %v1237 = vpop.f32.mrf.mxu0
        %v1238 = vadd.f32 %v499, %v1237
        %v1239 = vpop.f32.mrf.mxu0
        %v1240 = vpop.f32.mrf.mxu0
        %1241 = vdwg.mxu0
        %1242 = vmatprep.subr.bf16.mxu0 0
        %1243 = vmatpush1.bf16.msra.mxu0 0
        %1244 = vmatprep.subr.bf16.mxu0 0
        %1245 = vmatpush1.bf16.msra.mxu0 0
        %1246 = vmatprep.subr.bf16.mxu0 0
        %1247 = vmatpush1.bf16.msra.mxu0 0
        %1248 = vmatprep.subr.bf16.mxu0 0
        %1249 = vmatpush1.bf16.msra.mxu0 0
        %1250 = vmatprep.subr.bf16.mxu0 0
        %1251 = vmatpush1.bf16.msra.mxu0 0
        %1252 = vmatprep.subr.bf16.mxu0 0
        %1253 = vmatpush1.bf16.msra.mxu0 0
        %1254 = vmatprep.subr.bf16.mxu0 %v897
        %1255 = vmatpush1.bf16.msra.mxu0 %v896
        %1256 = vmatprep.subr.bf16.mxu0 %v861
        %1257 = vmatpush1.bf16.msra.mxu0 %v860
        %1258 = vmatprep.subr.bf16.mxu0 0
        %1259 = vmatpush2.bf16.msra.mxu0 0
        %1260 = vmatprep.subr.bf16.mxu0 0
        %1261 = vmatpush2.bf16.msra.mxu0 0
        %1262 = vmatprep.subr.bf16.mxu0 0
        %1263 = vmatpush2.bf16.msra.mxu0 0
        %1264 = vmatprep.subr.bf16.mxu0 0
        %1265 = vmatpush2.bf16.msra.mxu0 0
        %1266 = vmatprep.subr.bf16.mxu0 0
        %1267 = vmatpush2.bf16.msra.mxu0 0
        %1268 = vmatprep.subr.bf16.mxu0 0
        %1269 = vmatpush2.bf16.msra.mxu0 0
        %1270 = vmatprep.subr.bf16.mxu0 0
        %1271 = vmatpush2.bf16.msra.mxu0 0
        %1272 = vmatprep.subr.bf16.mxu0 0
        %1273 = vmatpush2.bf16.msra.mxu0 0
        %1274 = vmatprep.mubr.bf16.mxu0 0
        %1275 = vmatmul.mubr.bf16.gmra.mxu0 %v994
        %v1276 = vpop.f32.mrf.mxu0
        %v1277 = vadd.f32 %v503, %v1276
        %v1278 = vpop.f32.mrf.mxu0
        %v1279 = vadd.f32 %v507, %v1278
        %v1280 = vpop.f32.mrf.mxu0
        %v1281 = vpop.f32.mrf.mxu0
        %1282 = vdwg.mxu0
        %1283 = vmatprep.subr.bf16.mxu0 0
        %1284 = vmatpush1.bf16.msra.mxu0 0
        %1285 = vmatprep.subr.bf16.mxu0 0
        %1286 = vmatpush1.bf16.msra.mxu0 0
        %1287 = vmatprep.subr.bf16.mxu0 0
        %1288 = vmatpush1.bf16.msra.mxu0 0
        %1289 = vmatprep.subr.bf16.mxu0 0
        %1290 = vmatpush1.bf16.msra.mxu0 0
        %1291 = vmatprep.subr.bf16.mxu0 0
        %1292 = vmatpush1.bf16.msra.mxu0 0
        %1293 = vmatprep.subr.bf16.mxu0 0
        %1294 = vmatpush1.bf16.msra.mxu0 0
        %1295 = vmatprep.subr.bf16.mxu0 %v899
        %1296 = vmatpush1.bf16.msra.mxu0 %v898
        %1297 = vmatprep.subr.bf16.mxu0 %v863
        %1298 = vmatpush1.bf16.msra.mxu0 %v862
        %1299 = vmatprep.subr.bf16.mxu0 0
        %1300 = vmatpush2.bf16.msra.mxu0 0
        %1301 = vmatprep.subr.bf16.mxu0 0
        %1302 = vmatpush2.bf16.msra.mxu0 0
        %1303 = vmatprep.subr.bf16.mxu0 0
        %1304 = vmatpush2.bf16.msra.mxu0 0
        %1305 = vmatprep.subr.bf16.mxu0 0
        %1306 = vmatpush2.bf16.msra.mxu0 0
        %1307 = vmatprep.subr.bf16.mxu0 0
        %1308 = vmatpush2.bf16.msra.mxu0 0
        %1309 = vmatprep.subr.bf16.mxu0 0
        %1310 = vmatpush2.bf16.msra.mxu0 0
        %1311 = vmatprep.subr.bf16.mxu0 0
        %1312 = vmatpush2.bf16.msra.mxu0 0
        %1313 = vmatprep.subr.bf16.mxu0 0
        %1314 = vmatpush2.bf16.msra.mxu0 0
        %1315 = vmatprep.mubr.bf16.mxu0 0
        %1316 = vmatmul.mubr.bf16.gmra.mxu0 %v994
        %v1317 = vpop.f32.mrf.mxu0
        %v1318 = vadd.f32 %v511, %v1317
        %v1319 = vpop.f32.mrf.mxu0
        %v1320 = vadd.f32 %v515, %v1319
        %v1321 = vpop.f32.mrf.mxu0
        %v1322 = vpop.f32.mrf.mxu0
        %1323 = vdwg.mxu0
        %1324 = vmatprep.subr.bf16.mxu0 0
        %1325 = vmatpush1.bf16.msra.mxu0 0
        %1326 = vmatprep.subr.bf16.mxu0 0
        %1327 = vmatpush1.bf16.msra.mxu0 0
        %1328 = vmatprep.subr.bf16.mxu0 0
        %1329 = vmatpush1.bf16.msra.mxu0 0
        %1330 = vmatprep.subr.bf16.mxu0 0
        %1331 = vmatpush1.bf16.msra.mxu0 0
        %1332 = vmatprep.subr.bf16.mxu0 0
        %1333 = vmatpush1.bf16.msra.mxu0 0
        %1334 = vmatprep.subr.bf16.mxu0 0
        %1335 = vmatpush1.bf16.msra.mxu0 0
        %1336 = vmatprep.subr.bf16.mxu0 %v901
        %1337 = vmatpush1.bf16.msra.mxu0 %v900
        %1338 = vmatprep.subr.bf16.mxu0 %v865
        %1339 = vmatpush1.bf16.msra.mxu0 %v864
        %1340 = vmatprep.subr.bf16.mxu0 0
        %1341 = vmatpush2.bf16.msra.mxu0 0
        %1342 = vmatprep.subr.bf16.mxu0 0
        %1343 = vmatpush2.bf16.msra.mxu0 0
        %1344 = vmatprep.subr.bf16.mxu0 0
        %1345 = vmatpush2.bf16.msra.mxu0 0
        %1346 = vmatprep.subr.bf16.mxu0 0
        %1347 = vmatpush2.bf16.msra.mxu0 0
        %1348 = vmatprep.subr.bf16.mxu0 0
        %1349 = vmatpush2.bf16.msra.mxu0 0
        %1350 = vmatprep.subr.bf16.mxu0 0
        %1351 = vmatpush2.bf16.msra.mxu0 0
        %1352 = vmatprep.subr.bf16.mxu0 0
        %1353 = vmatpush2.bf16.msra.mxu0 0
        %1354 = vmatprep.subr.bf16.mxu0 0
        %1355 = vmatpush2.bf16.msra.mxu0 0
        %1356 = vmatprep.mubr.bf16.mxu0 0
        %1357 = vmatmul.mubr.bf16.gmra.mxu0 %v994
        %v1358 = vpop.f32.mrf.mxu0
        %v1359 = vadd.f32 %v519, %v1358
        %v1360 = vpop.f32.mrf.mxu0
        %v1361 = vadd.f32 %v523, %v1360
        %v1362 = vpop.f32.mrf.mxu0
        %v1363 = vpop.f32.mrf.mxu0
        %1364 = vdwg.mxu0
        %1365 = vmatprep.subr.bf16.mxu0 0
        %1366 = vmatpush1.bf16.msra.mxu0 0
        %1367 = vmatprep.subr.bf16.mxu0 0
        %1368 = vmatpush1.bf16.msra.mxu0 0
        %1369 = vmatprep.subr.bf16.mxu0 0
        %1370 = vmatpush1.bf16.msra.mxu0 0
        %1371 = vmatprep.subr.bf16.mxu0 0
        %1372 = vmatpush1.bf16.msra.mxu0 0
        %1373 = vmatprep.subr.bf16.mxu0 0
        %1374 = vmatpush1.bf16.msra.mxu0 0
        %1375 = vmatprep.subr.bf16.mxu0 0
        %1376 = vmatpush1.bf16.msra.mxu0 0
        %1377 = vmatprep.subr.bf16.mxu0 %v903
        %1378 = vmatpush1.bf16.msra.mxu0 %v902
        %1379 = vmatprep.subr.bf16.mxu0 %v867
        %1380 = vmatpush1.bf16.msra.mxu0 %v866
        %1381 = vmatprep.subr.bf16.mxu0 0
        %1382 = vmatpush2.bf16.msra.mxu0 0
        %1383 = vmatprep.subr.bf16.mxu0 0
        %1384 = vmatpush2.bf16.msra.mxu0 0
        %1385 = vmatprep.subr.bf16.mxu0 0
        %1386 = vmatpush2.bf16.msra.mxu0 0
        %1387 = vmatprep.subr.bf16.mxu0 0
        %1388 = vmatpush2.bf16.msra.mxu0 0
        %1389 = vmatprep.subr.bf16.mxu0 0
        %1390 = vmatpush2.bf16.msra.mxu0 0
        %1391 = vmatprep.subr.bf16.mxu0 0
        %1392 = vmatpush2.bf16.msra.mxu0 0
        %1393 = vmatprep.subr.bf16.mxu0 0
        %1394 = vmatpush2.bf16.msra.mxu0 0
        %1395 = vmatprep.subr.bf16.mxu0 0
        %1396 = vmatpush2.bf16.msra.mxu0 0
        %1397 = vmatprep.mubr.bf16.mxu0 0
        %1398 = vmatmul.mubr.bf16.gmra.mxu0 %v994
        %v1399 = vpop.f32.mrf.mxu0
        %v1400 = vadd.f32 %v527, %v1399
        %v1401 = vpop.f32.mrf.mxu0
        %v1402 = vadd.f32 %v531, %v1401
        %v1403 = vpop.f32.mrf.mxu0
        %v1404 = vpop.f32.mrf.mxu0
        %1405 = vdwg.mxu0
        %1406 = vmatprep.subr.bf16.mxu0 0
        %1407 = vmatpush1.bf16.msra.mxu0 0
        %1408 = vmatprep.subr.bf16.mxu0 0
        %1409 = vmatpush1.bf16.msra.mxu0 0
        %1410 = vmatprep.subr.bf16.mxu0 0
        %1411 = vmatpush1.bf16.msra.mxu0 0
        %1412 = vmatprep.subr.bf16.mxu0 0
        %1413 = vmatpush1.bf16.msra.mxu0 0
        %1414 = vmatprep.subr.bf16.mxu0 0
        %1415 = vmatpush1.bf16.msra.mxu0 0
        %1416 = vmatprep.subr.bf16.mxu0 0
        %1417 = vmatpush1.bf16.msra.mxu0 0
        %1418 = vmatprep.subr.bf16.mxu0 %v905
        %1419 = vmatpush1.bf16.msra.mxu0 %v904
        %1420 = vmatprep.subr.bf16.mxu0 %v869
        %1421 = vmatpush1.bf16.msra.mxu0 %v868
        %1422 = vmatprep.subr.bf16.mxu0 0
        %1423 = vmatpush2.bf16.msra.mxu0 0
        %1424 = vmatprep.subr.bf16.mxu0 0
        %1425 = vmatpush2.bf16.msra.mxu0 0
        %1426 = vmatprep.subr.bf16.mxu0 0
        %1427 = vmatpush2.bf16.msra.mxu0 0
        %1428 = vmatprep.subr.bf16.mxu0 0
        %1429 = vmatpush2.bf16.msra.mxu0 0
        %1430 = vmatprep.subr.bf16.mxu0 0
        %1431 = vmatpush2.bf16.msra.mxu0 0
        %1432 = vmatprep.subr.bf16.mxu0 0
        %1433 = vmatpush2.bf16.msra.mxu0 0
        %1434 = vmatprep.subr.bf16.mxu0 0
        %1435 = vmatpush2.bf16.msra.mxu0 0
        %1436 = vmatprep.subr.bf16.mxu0 0
        %1437 = vmatpush2.bf16.msra.mxu0 0
        %1438 = vmatprep.mubr.bf16.mxu0 0
        %1439 = vmatmul.mubr.bf16.gmra.mxu0 %v994
        %v1440 = vpop.f32.mrf.mxu0
        %v1441 = vadd.f32 %v535, %v1440
        %v1442 = vpop.f32.mrf.mxu0
        %v1443 = vadd.f32 %v539, %v1442
        %v1444 = vpop.f32.mrf.mxu0
        %v1445 = vpop.f32.mrf.mxu0
        %1446 = vdwg.mxu0
        %1447 = vmatprep.subr.bf16.mxu0 0
        %1448 = vmatpush1.bf16.msra.mxu0 0
        %1449 = vmatprep.subr.bf16.mxu0 0
        %1450 = vmatpush1.bf16.msra.mxu0 0
        %1451 = vmatprep.subr.bf16.mxu0 0
        %1452 = vmatpush1.bf16.msra.mxu0 0
        %1453 = vmatprep.subr.bf16.mxu0 0
        %1454 = vmatpush1.bf16.msra.mxu0 0
        %1455 = vmatprep.subr.bf16.mxu0 0
        %1456 = vmatpush1.bf16.msra.mxu0 0
        %1457 = vmatprep.subr.bf16.mxu0 0
        %1458 = vmatpush1.bf16.msra.mxu0 0
        %1459 = vmatprep.subr.bf16.mxu0 %v907
        %1460 = vmatpush1.bf16.msra.mxu0 %v906
        %1461 = vmatprep.subr.bf16.mxu0 %v871
        %1462 = vmatpush1.bf16.msra.mxu0 %v870
        %1463 = vmatprep.subr.bf16.mxu0 0
        %1464 = vmatpush2.bf16.msra.mxu0 0
        %1465 = vmatprep.subr.bf16.mxu0 0
        %1466 = vmatpush2.bf16.msra.mxu0 0
        %1467 = vmatprep.subr.bf16.mxu0 0
        %1468 = vmatpush2.bf16.msra.mxu0 0
        %1469 = vmatprep.subr.bf16.mxu0 0
        %1470 = vmatpush2.bf16.msra.mxu0 0
        %1471 = vmatprep.subr.bf16.mxu0 0
        %1472 = vmatpush2.bf16.msra.mxu0 0
        %1473 = vmatprep.subr.bf16.mxu0 0
        %1474 = vmatpush2.bf16.msra.mxu0 0
        %1475 = vmatprep.subr.bf16.mxu0 0
        %1476 = vmatpush2.bf16.msra.mxu0 0
        %1477 = vmatprep.subr.bf16.mxu0 0
        %1478 = vmatpush2.bf16.msra.mxu0 0
        %1479 = vmatprep.mubr.bf16.mxu0 0
        %1480 = vmatmul.mubr.bf16.gmra.mxu0 %v994
        %v1481 = vpop.f32.mrf.mxu0
        %v1482 = vadd.f32 %v543, %v1481
        %v1483 = vpop.f32.mrf.mxu0
        %v1484 = vadd.f32 %v547, %v1483
        %v1485 = vpop.f32.mrf.mxu0
        %v1486 = vpop.f32.mrf.mxu0
        %1487 = vdwg.mxu0
        %1488 = vmatprep.subr.bf16.mxu0 0
        %1489 = vmatpush1.bf16.msra.mxu0 0
        %1490 = vmatprep.subr.bf16.mxu0 0
        %1491 = vmatpush1.bf16.msra.mxu0 0
        %1492 = vmatprep.subr.bf16.mxu0 0
        %1493 = vmatpush1.bf16.msra.mxu0 0
        %1494 = vmatprep.subr.bf16.mxu0 0
        %1495 = vmatpush1.bf16.msra.mxu0 0
        %1496 = vmatprep.subr.bf16.mxu0 0
        %1497 = vmatpush1.bf16.msra.mxu0 0
        %1498 = vmatprep.subr.bf16.mxu0 0
        %1499 = vmatpush1.bf16.msra.mxu0 0
        %1500 = vmatprep.subr.bf16.mxu0 %v909
        %1501 = vmatpush1.bf16.msra.mxu0 %v908
        %1502 = vmatprep.subr.bf16.mxu0 %v873
        %1503 = vmatpush1.bf16.msra.mxu0 %v872
        %1504 = vmatprep.subr.bf16.mxu0 0
        %1505 = vmatpush2.bf16.msra.mxu0 0
        %1506 = vmatprep.subr.bf16.mxu0 0
        %1507 = vmatpush2.bf16.msra.mxu0 0
        %1508 = vmatprep.subr.bf16.mxu0 0
        %1509 = vmatpush2.bf16.msra.mxu0 0
        %1510 = vmatprep.subr.bf16.mxu0 0
        %1511 = vmatpush2.bf16.msra.mxu0 0
        %1512 = vmatprep.subr.bf16.mxu0 0
        %1513 = vmatpush2.bf16.msra.mxu0 0
        %1514 = vmatprep.subr.bf16.mxu0 0
        %1515 = vmatpush2.bf16.msra.mxu0 0
        %1516 = vmatprep.subr.bf16.mxu0 0
        %1517 = vmatpush2.bf16.msra.mxu0 0
        %1518 = vmatprep.subr.bf16.mxu0 0
        %1519 = vmatpush2.bf16.msra.mxu0 0
        %1520 = vmatprep.mubr.bf16.mxu0 0
        %1521 = vmatmul.mubr.bf16.gmra.mxu0 %v994
        %v1522 = vpop.f32.mrf.mxu0
        %v1523 = vadd.f32 %v551, %v1522
        %v1524 = vpop.f32.mrf.mxu0
        %v1525 = vadd.f32 %v555, %v1524
        %v1526 = vpop.f32.mrf.mxu0
        %v1527 = vpop.f32.mrf.mxu0
        %1528 = vdwg.mxu0
        %1529 = vmatprep.subr.bf16.mxu0 0
        %1530 = vmatpush1.bf16.msra.mxu0 0
        %1531 = vmatprep.subr.bf16.mxu0 0
        %1532 = vmatpush1.bf16.msra.mxu0 0
        %1533 = vmatprep.subr.bf16.mxu0 0
        %1534 = vmatpush1.bf16.msra.mxu0 0
        %1535 = vmatprep.subr.bf16.mxu0 0
        %1536 = vmatpush1.bf16.msra.mxu0 0
        %1537 = vmatprep.subr.bf16.mxu0 0
        %1538 = vmatpush1.bf16.msra.mxu0 0
        %1539 = vmatprep.subr.bf16.mxu0 0
        %1540 = vmatpush1.bf16.msra.mxu0 0
        %1541 = vmatprep.subr.bf16.mxu0 %v911
        %1542 = vmatpush1.bf16.msra.mxu0 %v910
        %1543 = vmatprep.subr.bf16.mxu0 %v875
        %1544 = vmatpush1.bf16.msra.mxu0 %v874
        %1545 = vmatprep.subr.bf16.mxu0 0
        %1546 = vmatpush2.bf16.msra.mxu0 0
        %1547 = vmatprep.subr.bf16.mxu0 0
        %1548 = vmatpush2.bf16.msra.mxu0 0
        %1549 = vmatprep.subr.bf16.mxu0 0
        %1550 = vmatpush2.bf16.msra.mxu0 0
        %1551 = vmatprep.subr.bf16.mxu0 0
        %1552 = vmatpush2.bf16.msra.mxu0 0
        %1553 = vmatprep.subr.bf16.mxu0 0
        %1554 = vmatpush2.bf16.msra.mxu0 0
        %1555 = vmatprep.subr.bf16.mxu0 0
        %1556 = vmatpush2.bf16.msra.mxu0 0
        %1557 = vmatprep.subr.bf16.mxu0 0
        %1558 = vmatpush2.bf16.msra.mxu0 0
        %1559 = vmatprep.subr.bf16.mxu0 0
        %1560 = vmatpush2.bf16.msra.mxu0 0
        %1561 = vmatprep.mubr.bf16.mxu0 0
        %1562 = vmatmul.mubr.bf16.gmra.mxu0 %v994
        %v1563 = vpop.f32.mrf.mxu0
        %v1564 = vadd.f32 %v559, %v1563
        %v1565 = vpop.f32.mrf.mxu0
        %v1566 = vadd.f32 %v563, %v1565
        %v1567 = vpop.f32.mrf.mxu0
        %v1568 = vpop.f32.mrf.mxu0
        %1569 = vdwg.mxu0
        %1570 = vmatprep.subr.bf16.mxu0 0
        %1571 = vmatpush1.bf16.msra.mxu0 0
        %1572 = vmatprep.subr.bf16.mxu0 0
        %1573 = vmatpush1.bf16.msra.mxu0 0
        %1574 = vmatprep.subr.bf16.mxu0 0
        %1575 = vmatpush1.bf16.msra.mxu0 0
        %1576 = vmatprep.subr.bf16.mxu0 0
        %1577 = vmatpush1.bf16.msra.mxu0 0
        %1578 = vmatprep.subr.bf16.mxu0 0
        %1579 = vmatpush1.bf16.msra.mxu0 0
        %1580 = vmatprep.subr.bf16.mxu0 0
        %1581 = vmatpush1.bf16.msra.mxu0 0
        %1582 = vmatprep.subr.bf16.mxu0 %v913
        %1583 = vmatpush1.bf16.msra.mxu0 %v912
        %1584 = vmatprep.subr.bf16.mxu0 %v877
        %1585 = vmatpush1.bf16.msra.mxu0 %v876
        %1586 = vmatprep.subr.bf16.mxu0 0
        %1587 = vmatpush2.bf16.msra.mxu0 0
        %1588 = vmatprep.subr.bf16.mxu0 0
        %1589 = vmatpush2.bf16.msra.mxu0 0
        %1590 = vmatprep.subr.bf16.mxu0 0
        %1591 = vmatpush2.bf16.msra.mxu0 0
        %1592 = vmatprep.subr.bf16.mxu0 0
        %1593 = vmatpush2.bf16.msra.mxu0 0
        %1594 = vmatprep.subr.bf16.mxu0 0
        %1595 = vmatpush2.bf16.msra.mxu0 0
        %1596 = vmatprep.subr.bf16.mxu0 0
        %1597 = vmatpush2.bf16.msra.mxu0 0
        %1598 = vmatprep.subr.bf16.mxu0 0
        %1599 = vmatpush2.bf16.msra.mxu0 0
        %1600 = vmatprep.subr.bf16.mxu0 0
        %1601 = vmatpush2.bf16.msra.mxu0 0
        %1602 = vmatprep.mubr.bf16.mxu0 0
        %1603 = vmatmul.mubr.bf16.gmra.mxu0 %v994
        %v1604 = vpop.f32.mrf.mxu0
        %v1605 = vadd.f32 %v567, %v1604
        %v1606 = vpop.f32.mrf.mxu0
        %v1607 = vadd.f32 %v571, %v1606
        %v1608 = vpop.f32.mrf.mxu0
        %v1609 = vpop.f32.mrf.mxu0
        %1610 = vdwg.mxu0
        %1611 = vmatprep.subr.bf16.mxu0 0
        %1612 = vmatpush1.bf16.msra.mxu0 0
        %1613 = vmatprep.subr.bf16.mxu0 0
        %1614 = vmatpush1.bf16.msra.mxu0 0
        %1615 = vmatprep.subr.bf16.mxu0 0
        %1616 = vmatpush1.bf16.msra.mxu0 0
        %1617 = vmatprep.subr.bf16.mxu0 0
        %1618 = vmatpush1.bf16.msra.mxu0 0
        %1619 = vmatprep.subr.bf16.mxu0 0
        %1620 = vmatpush1.bf16.msra.mxu0 0
        %1621 = vmatprep.subr.bf16.mxu0 0
        %1622 = vmatpush1.bf16.msra.mxu0 0
        %1623 = vmatprep.subr.bf16.mxu0 %v915
        %1624 = vmatpush1.bf16.msra.mxu0 %v914
        %1625 = vmatprep.subr.bf16.mxu0 %v879
        %1626 = vmatpush1.bf16.msra.mxu0 %v878
        %1627 = vmatprep.subr.bf16.mxu0 0
        %1628 = vmatpush2.bf16.msra.mxu0 0
        %1629 = vmatprep.subr.bf16.mxu0 0
        %1630 = vmatpush2.bf16.msra.mxu0 0
        %1631 = vmatprep.subr.bf16.mxu0 0
        %1632 = vmatpush2.bf16.msra.mxu0 0
        %1633 = vmatprep.subr.bf16.mxu0 0
        %1634 = vmatpush2.bf16.msra.mxu0 0
        %1635 = vmatprep.subr.bf16.mxu0 0
        %1636 = vmatpush2.bf16.msra.mxu0 0
        %1637 = vmatprep.subr.bf16.mxu0 0
        %1638 = vmatpush2.bf16.msra.mxu0 0
        %1639 = vmatprep.subr.bf16.mxu0 0
        %1640 = vmatpush2.bf16.msra.mxu0 0
        %1641 = vmatprep.subr.bf16.mxu0 0
        %1642 = vmatpush2.bf16.msra.mxu0 0
        %1643 = vmatprep.mubr.bf16.mxu0 0
        %1644 = vmatmul.mubr.bf16.gmra.mxu0 %v994
        %v1645 = vpop.f32.mrf.mxu0
        %v1646 = vadd.f32 %v575, %v1645
        %v1647 = vpop.f32.mrf.mxu0
        %v1648 = vadd.f32 %v579, %v1647
        %v1649 = vpop.f32.mrf.mxu0
        %v1650 = vpop.f32.mrf.mxu0
        %1651 = vdwg.mxu0
        %1652 = vmatprep.subr.bf16.mxu0 0
        %1653 = vmatpush1.bf16.msra.mxu0 0
        %1654 = vmatprep.subr.bf16.mxu0 0
        %1655 = vmatpush1.bf16.msra.mxu0 0
        %1656 = vmatprep.subr.bf16.mxu0 0
        %1657 = vmatpush1.bf16.msra.mxu0 0
        %1658 = vmatprep.subr.bf16.mxu0 0
        %1659 = vmatpush1.bf16.msra.mxu0 0
        %1660 = vmatprep.subr.bf16.mxu0 0
        %1661 = vmatpush1.bf16.msra.mxu0 0
        %1662 = vmatprep.subr.bf16.mxu0 0
        %1663 = vmatpush1.bf16.msra.mxu0 0
        %1664 = vmatprep.subr.bf16.mxu0 %v917
        %1665 = vmatpush1.bf16.msra.mxu0 %v916
        %1666 = vmatprep.subr.bf16.mxu0 %v881
        %1667 = vmatpush1.bf16.msra.mxu0 %v880
        %1668 = vmatprep.subr.bf16.mxu0 0
        %1669 = vmatpush2.bf16.msra.mxu0 0
        %1670 = vmatprep.subr.bf16.mxu0 0
        %1671 = vmatpush2.bf16.msra.mxu0 0
        %1672 = vmatprep.subr.bf16.mxu0 0
        %1673 = vmatpush2.bf16.msra.mxu0 0
        %1674 = vmatprep.subr.bf16.mxu0 0
        %1675 = vmatpush2.bf16.msra.mxu0 0
        %1676 = vmatprep.subr.bf16.mxu0 0
        %1677 = vmatpush2.bf16.msra.mxu0 0
        %1678 = vmatprep.subr.bf16.mxu0 0
        %1679 = vmatpush2.bf16.msra.mxu0 0
        %1680 = vmatprep.subr.bf16.mxu0 0
        %1681 = vmatpush2.bf16.msra.mxu0 0
        %1682 = vmatprep.subr.bf16.mxu0 0
        %1683 = vmatpush2.bf16.msra.mxu0 0
        %1684 = vmatprep.mubr.bf16.mxu0 0
        %1685 = vmatmul.mubr.bf16.gmra.mxu0 %v994
        %v1686 = vpop.f32.mrf.mxu0
        %v1687 = vadd.f32 %v583, %v1686
        %v1688 = vpop.f32.mrf.mxu0
        %v1689 = vadd.f32 %v587, %v1688
        %v1690 = vpop.f32.mrf.mxu0
        %v1691 = vpop.f32.mrf.mxu0
        %1692 = vdwg.mxu0
        %1693 = vmatprep.subr.bf16.mxu0 0
        %1694 = vmatpush1.bf16.msra.mxu0 0
        %1695 = vmatprep.subr.bf16.mxu0 0
        %1696 = vmatpush1.bf16.msra.mxu0 0
        %1697 = vmatprep.subr.bf16.mxu0 0
        %1698 = vmatpush1.bf16.msra.mxu0 0
        %1699 = vmatprep.subr.bf16.mxu0 0
        %1700 = vmatpush1.bf16.msra.mxu0 0
        %1701 = vmatprep.subr.bf16.mxu0 0
        %1702 = vmatpush1.bf16.msra.mxu0 0
        %1703 = vmatprep.subr.bf16.mxu0 0
        %1704 = vmatpush1.bf16.msra.mxu0 0
        %1705 = vmatprep.subr.bf16.mxu0 %v919
        %1706 = vmatpush1.bf16.msra.mxu0 %v918
        %1707 = vmatprep.subr.bf16.mxu0 %v883
        %1708 = vmatpush1.bf16.msra.mxu0 %v882
        %1709 = vmatprep.subr.bf16.mxu0 0
        %1710 = vmatpush2.bf16.msra.mxu0 0
        %1711 = vmatprep.subr.bf16.mxu0 0
        %1712 = vmatpush2.bf16.msra.mxu0 0
        %1713 = vmatprep.subr.bf16.mxu0 0
        %1714 = vmatpush2.bf16.msra.mxu0 0
        %1715 = vmatprep.subr.bf16.mxu0 0
        %1716 = vmatpush2.bf16.msra.mxu0 0
        %1717 = vmatprep.subr.bf16.mxu0 0
        %1718 = vmatpush2.bf16.msra.mxu0 0
        %1719 = vmatprep.subr.bf16.mxu0 0
        %1720 = vmatpush2.bf16.msra.mxu0 0
        %1721 = vmatprep.subr.bf16.mxu0 0
        %1722 = vmatpush2.bf16.msra.mxu0 0
        %1723 = vmatprep.subr.bf16.mxu0 0
        %1724 = vmatpush2.bf16.msra.mxu0 0
        %1725 = vmatprep.mubr.bf16.mxu0 0
        %1726 = vmatmul.mubr.bf16.gmra.mxu0 %v994
        %v1727 = vpop.f32.mrf.mxu0
        %v1728 = vadd.f32 %v591, %v1727
        %v1729 = vpop.f32.mrf.mxu0
        %v1730 = vadd.f32 %v595, %v1729
        %v1731 = vpop.f32.mrf.mxu0
        %v1732 = vpop.f32.mrf.mxu0
        %1733 = vdwg.mxu0
        %v1734 = vmax.f32 %v1031, 0.0
        %v1735 = vmax.f32 %v1033, 0.0
        %v1736 = vmax.f32 %v1072, 0.0
        %v1737 = vmax.f32 %v1074, 0.0
        %v1738 = vmax.f32 %v1113, 0.0
        %v1739 = vmax.f32 %v1115, 0.0
        %v1740 = vmax.f32 %v1154, 0.0
        %v1741 = vmax.f32 %v1156, 0.0
        %v1742 = vmax.f32 %v1195, 0.0
        %v1743 = vmax.f32 %v1197, 0.0
        %v1744 = vmax.f32 %v1236, 0.0
        %v1745 = vmax.f32 %v1238, 0.0
        %v1746 = vmax.f32 %v1277, 0.0
        %v1747 = vmax.f32 %v1279, 0.0
        %v1748 = vmax.f32 %v1318, 0.0
        %v1749 = vmax.f32 %v1320, 0.0
        %v1750 = vmax.f32 %v1359, 0.0
        %v1751 = vmax.f32 %v1361, 0.0
        %v1752 = vmax.f32 %v1400, 0.0
        %v1753 = vmax.f32 %v1402, 0.0
        %v1754 = vmax.f32 %v1441, 0.0
        %v1755 = vmax.f32 %v1443, 0.0
        %v1756 = vmax.f32 %v1482, 0.0
        %v1757 = vmax.f32 %v1484, 0.0
        %v1758 = vmax.f32 %v1523, 0.0
        %v1759 = vmax.f32 %v1525, 0.0
        %v1760 = vmax.f32 %v1564, 0.0
        %v1761 = vmax.f32 %v1566, 0.0
        %v1762 = vmax.f32 %v1605, 0.0
        %v1763 = vmax.f32 %v1607, 0.0
        %v1764 = vmax.f32 %v1646, 0.0
        %v1765 = vmax.f32 %v1648, 0.0
        %v1766 = vmax.f32 %v1687, 0.0
        %v1767 = vmax.f32 %v1689, 0.0
        %v1768 = vmax.f32 %v1728, 0.0
        %v1769 = vmax.f32 %v1730, 0.0
        %v1770 = vpack.c.bf16 %v1734, %v1734
        %v1771 = vpack.c.bf16 %v1735, %v1735
        %v1772 = vpack.c.bf16 %v1736, %v1736
        %v1773 = vpack.c.bf16 %v1737, %v1737
        %v1774 = vpack.c.bf16 %v1738, %v1738
        %v1775 = vpack.c.bf16 %v1739, %v1739
        %v1776 = vpack.c.bf16 %v1740, %v1740
        %v1777 = vpack.c.bf16 %v1741, %v1741
        %v1778 = vpack.c.bf16 %v1742, %v1742
        %v1779 = vpack.c.bf16 %v1743, %v1743
        %v1780 = vpack.c.bf16 %v1744, %v1744
        %v1781 = vpack.c.bf16 %v1745, %v1745
        %v1782 = vpack.c.bf16 %v1746, %v1746
        %v1783 = vpack.c.bf16 %v1747, %v1747
        %v1784 = vpack.c.bf16 %v1748, %v1748
        %v1785 = vpack.c.bf16 %v1749, %v1749
        %v1786 = vpack.c.bf16 %v1750, %v1750
        %v1787 = vpack.c.bf16 %v1751, %v1751
        %v1788 = vpack.c.bf16 %v1752, %v1752
        %v1789 = vpack.c.bf16 %v1753, %v1753
        %v1790 = vpack.c.bf16 %v1754, %v1754
        %v1791 = vpack.c.bf16 %v1755, %v1755
        %v1792 = vpack.c.bf16 %v1756, %v1756
        %v1793 = vpack.c.bf16 %v1757, %v1757
        %v1794 = vpack.c.bf16 %v1758, %v1758
        %v1795 = vpack.c.bf16 %v1759, %v1759
        %v1796 = vpack.c.bf16 %v1760, %v1760
        %v1797 = vpack.c.bf16 %v1761, %v1761
        %v1798 = vpack.c.bf16 %v1762, %v1762
        %v1799 = vpack.c.bf16 %v1763, %v1763
        %v1800 = vpack.c.bf16 %v1764, %v1764
        %v1801 = vpack.c.bf16 %v1765, %v1765
        %v1802 = vpack.c.bf16 %v1766, %v1766
        %v1803 = vpack.c.bf16 %v1767, %v1767
        %v1804 = vpack.c.bf16 %v1768, %v1768
        %v1805 = vpack.c.bf16 %v1769, %v1769
        %v1842 = vcombine.low %v1770, %v1771
        %v1843 = vcombine.low %v1772, %v1773
        %v1844 = vcombine.low %v1774, %v1775
        %v1845 = vcombine.low %v1776, %v1777
        %v1847 = vunpack.c.l.s4 1966171168
        %v1848 = vunpack.c.0.s8 %v1847
        %v1849 = vlaneseq
        %v1850 = vshrl.u32 %v1849, 7
        %v1851 = vsub.s32 %v1848, %v1850
        %v1852 = vrot.slane %v1842, %v1851
        %v1854 = vunpack.c.l.s4 1966171168
        %v1855 = vunpack.c.0.s8 %v1854
        %v1856 = vlaneseq
        %v1857 = vshrl.u32 %v1856, 7
        %v1858 = vsub.s32 %v1855, %v1857
        %v1859 = vrot.slane %v1843, %v1858
        %v1861 = vunpack.c.l.s4 1966171168
        %v1862 = vunpack.c.0.s8 %v1861
        %v1863 = vlaneseq
        %v1864 = vshrl.u32 %v1863, 7
        %v1865 = vsub.s32 %v1862, %v1864
        %v1866 = vrot.slane %v1844, %v1865
        %v1868 = vunpack.c.l.s4 1966171168
        %v1869 = vunpack.c.0.s8 %v1868
        %v1870 = vlaneseq
        %v1871 = vshrl.u32 %v1870, 7
        %v1872 = vsub.s32 %v1869, %v1871
        %v1873 = vrot.slane %v1845, %v1872
        %v1874 = vcombine.low %v1852, %v1859
        %v1875 = vcombine.low %v1866, %v1873
        %v1877 = vunpack.c.l.s4 1966171168
        %v1878 = vunpack.c.0.s8 %v1877
        %v1879 = vlaneseq
        %v1880 = vshrl.u32 %v1879, 7
        %v1881 = vsub.s32 %v1878, %v1880
        %v1882 = vrot.slane %v1874, %v1881
        %v1884 = vunpack.c.l.s4 1966171168
        %v1885 = vunpack.c.0.s8 %v1884
        %v1886 = vlaneseq
        %v1887 = vshrl.u32 %v1886, 7
        %v1888 = vsub.s32 %v1885, %v1887
        %v1889 = vrot.slane %v1875, %v1888
        %v1890 = vcombine.low %v1882, %v1889
        %v1891 = vcombine.low %v1778, %v1779
        %v1892 = vcombine.low %v1780, %v1781
        %v1893 = vcombine.low %v1782, %v1783
        %v1894 = vcombine.low %v1784, %v1785
        %v1896 = vunpack.c.l.s4 1966171168
        %v1897 = vunpack.c.0.s8 %v1896
        %v1898 = vlaneseq
        %v1899 = vshrl.u32 %v1898, 7
        %v1900 = vsub.s32 %v1897, %v1899
        %v1901 = vrot.slane %v1891, %v1900
        %v1903 = vunpack.c.l.s4 1966171168
        %v1904 = vunpack.c.0.s8 %v1903
        %v1905 = vlaneseq
        %v1906 = vshrl.u32 %v1905, 7
        %v1907 = vsub.s32 %v1904, %v1906
        %v1908 = vrot.slane %v1892, %v1907
        %v1910 = vunpack.c.l.s4 1966171168
        %v1911 = vunpack.c.0.s8 %v1910
        %v1912 = vlaneseq
        %v1913 = vshrl.u32 %v1912, 7
        %v1914 = vsub.s32 %v1911, %v1913
        %v1915 = vrot.slane %v1893, %v1914
        %v1917 = vunpack.c.l.s4 1966171168
        %v1918 = vunpack.c.0.s8 %v1917
        %v1919 = vlaneseq
        %v1920 = vshrl.u32 %v1919, 7
        %v1921 = vsub.s32 %v1918, %v1920
        %v1922 = vrot.slane %v1894, %v1921
        %v1923 = vcombine.low %v1901, %v1908
        %v1924 = vcombine.low %v1915, %v1922
        %v1926 = vunpack.c.l.s4 1966171168
        %v1927 = vunpack.c.0.s8 %v1926
        %v1928 = vlaneseq
        %v1929 = vshrl.u32 %v1928, 7
        %v1930 = vsub.s32 %v1927, %v1929
        %v1931 = vrot.slane %v1923, %v1930
        %v1933 = vunpack.c.l.s4 1966171168
        %v1934 = vunpack.c.0.s8 %v1933
        %v1935 = vlaneseq
        %v1936 = vshrl.u32 %v1935, 7
        %v1937 = vsub.s32 %v1934, %v1936
        %v1938 = vrot.slane %v1924, %v1937
        %v1939 = vcombine.low %v1931, %v1938
        %v1940 = vcombine.low %v1786, %v1787
        %v1941 = vcombine.low %v1788, %v1789
        %v1942 = vcombine.low %v1790, %v1791
        %v1943 = vcombine.low %v1792, %v1793
        %v1945 = vunpack.c.l.s4 1966171168
        %v1946 = vunpack.c.0.s8 %v1945
        %v1947 = vlaneseq
        %v1948 = vshrl.u32 %v1947, 7
        %v1949 = vsub.s32 %v1946, %v1948
        %v1950 = vrot.slane %v1940, %v1949
        %v1952 = vunpack.c.l.s4 1966171168
        %v1953 = vunpack.c.0.s8 %v1952
        %v1954 = vlaneseq
        %v1955 = vshrl.u32 %v1954, 7
        %v1956 = vsub.s32 %v1953, %v1955
        %v1957 = vrot.slane %v1941, %v1956
        %v1959 = vunpack.c.l.s4 1966171168
        %v1960 = vunpack.c.0.s8 %v1959
        %v1961 = vlaneseq
        %v1962 = vshrl.u32 %v1961, 7
        %v1963 = vsub.s32 %v1960, %v1962
        %v1964 = vrot.slane %v1942, %v1963
        %v1966 = vunpack.c.l.s4 1966171168
        %v1967 = vunpack.c.0.s8 %v1966
        %v1968 = vlaneseq
        %v1969 = vshrl.u32 %v1968, 7
        %v1970 = vsub.s32 %v1967, %v1969
        %v1971 = vrot.slane %v1943, %v1970
        %v1972 = vcombine.low %v1950, %v1957
        %v1973 = vcombine.low %v1964, %v1971
        %v1975 = vunpack.c.l.s4 1966171168
        %v1976 = vunpack.c.0.s8 %v1975
        %v1977 = vlaneseq
        %v1978 = vshrl.u32 %v1977, 7
        %v1979 = vsub.s32 %v1976, %v1978
        %v1980 = vrot.slane %v1972, %v1979
        %v1982 = vunpack.c.l.s4 1966171168
        %v1983 = vunpack.c.0.s8 %v1982
        %v1984 = vlaneseq
        %v1985 = vshrl.u32 %v1984, 7
        %v1986 = vsub.s32 %v1983, %v1985
        %v1987 = vrot.slane %v1973, %v1986
        %v1988 = vcombine.low %v1980, %v1987
        %v1989 = vcombine.low %v1794, %v1795
        %v1990 = vcombine.low %v1796, %v1797
        %v1991 = vcombine.low %v1798, %v1799
        %v1992 = vcombine.low %v1800, %v1801
        %v1994 = vunpack.c.l.s4 1966171168
        %v1995 = vunpack.c.0.s8 %v1994
        %v1996 = vlaneseq
        %v1997 = vshrl.u32 %v1996, 7
        %v1998 = vsub.s32 %v1995, %v1997
        %v1999 = vrot.slane %v1989, %v1998
        %v2001 = vunpack.c.l.s4 1966171168
        %v2002 = vunpack.c.0.s8 %v2001
        %v2003 = vlaneseq
        %v2004 = vshrl.u32 %v2003, 7
        %v2005 = vsub.s32 %v2002, %v2004
        %v2006 = vrot.slane %v1990, %v2005
        %v2008 = vunpack.c.l.s4 1966171168
        %v2009 = vunpack.c.0.s8 %v2008
        %v2010 = vlaneseq
        %v2011 = vshrl.u32 %v2010, 7
        %v2012 = vsub.s32 %v2009, %v2011
        %v2013 = vrot.slane %v1991, %v2012
        %v2015 = vunpack.c.l.s4 1966171168
        %v2016 = vunpack.c.0.s8 %v2015
        %v2017 = vlaneseq
        %v2018 = vshrl.u32 %v2017, 7
        %v2019 = vsub.s32 %v2016, %v2018
        %v2020 = vrot.slane %v1992, %v2019
        %v2021 = vcombine.low %v1999, %v2006
        %v2022 = vcombine.low %v2013, %v2020
        %v2024 = vunpack.c.l.s4 1966171168
        %v2025 = vunpack.c.0.s8 %v2024
        %v2026 = vlaneseq
        %v2027 = vshrl.u32 %v2026, 7
        %v2028 = vsub.s32 %v2025, %v2027
        %v2029 = vrot.slane %v2021, %v2028
        %v2031 = vunpack.c.l.s4 1966171168
        %v2032 = vunpack.c.0.s8 %v2031
        %v2033 = vlaneseq
        %v2034 = vshrl.u32 %v2033, 7
        %v2035 = vsub.s32 %v2032, %v2034
        %v2036 = vrot.slane %v2022, %v2035
        %v2037 = vcombine.low %v2029, %v2036
        %v2038 = vcombine.low %v1802, %v1803
        %v2039 = vcombine.low %v1804, %v1805
        %v2041 = vunpack.c.l.s4 1966171168
        %v2042 = vunpack.c.0.s8 %v2041
        %v2043 = vlaneseq
        %v2044 = vshrl.u32 %v2043, 7
        %v2045 = vsub.s32 %v2042, %v2044
        %v2046 = vrot.slane %v2038, %v2045
        %v2048 = vunpack.c.l.s4 1966171168
        %v2049 = vunpack.c.0.s8 %v2048
        %v2050 = vlaneseq
        %v2051 = vshrl.u32 %v2050, 7
        %v2052 = vsub.s32 %v2049, %v2051
        %v2053 = vrot.slane %v2039, %v2052
        %v2054 = vcombine.low %v2046, %v2053
        %v2056 = vunpack.c.l.s4 1966171168
        %v2057 = vunpack.c.0.s8 %v2056
        %v2058 = vlaneseq
        %v2059 = vshrl.u32 %v2058, 7
        %v2060 = vsub.s32 %v2057, %v2059
        %v2061 = vrot.slane %v2054, %v2060
        %2067 = vst [vmem:[#allocation2] sm:$0xff] %v1890
        %2068 = vst [vmem:[#allocation2 + $0x8] sm:$0xff] %v1939
        %2069 = vst [vmem:[#allocation2 + $0x10] sm:$0xff] %v1988
        %2070 = vst [vmem:[#allocation2 + $0x18] sm:$0xff] %v2037
        %2071 = vst [vmem:[#allocation2 + $0x20] sm:$0xf] %v2061
        loop: start=0, step=1, limit=4
        $region65: #{net_forward.2} parent=43 // loop_pre_header
          _
        $region66: #{net_forward.2} parent=43 // loop_header
          %s2073 = sphi 0, %s2077
          %p2074 = scmp.ge.s32.totalorder %s2073, 4
          %v2078 = vphi 0.0, %v3855
          %v2079 = vphi 0.0, %v3856
          %v2080 = vphi 0.0, %v3857
          %v2081 = vphi 0.0, %v3858
          %v2082 = vphi 0.0, %v3859
          %v2083 = vphi 0.0, %v3860
          %v2084 = vphi 0.0, %v3861
          %v2085 = vphi 0.0, %v3862
        $region67: #{net_forward.2} parent=43 // loop_header_branch
          %2076 = sbr.rel (%p2074) target = $region71
        $region68: #{net_forward.2} parent=43 // loop_body
          %s2086 = smul.u32 %s2073, 1152
          %s2087 = sshra.s32 %s2086, 5
          %s2088 = sand.u32 %s2086, 31
          %s2089 = smul.u32 %s2087, 8
          %s2090 = smul.addr %s2089, 8
          %s2091 = scalar_lea.vmem %s305, %s2090 [#allocation7]
          %v2092 = vld [vmem:[%s2091] sm:$0xff]
          %v2093 = vld [vmem:[%s2091 + $0x8] sm:$0xff]
          %v2094 = vld [vmem:[%s2091 + $0x10] sm:$0xff]
          %v2095 = vld [vmem:[%s2091 + $0x18] sm:$0xff]
          %v2096 = vld [vmem:[%s2091 + $0x20] sm:$0xff]
          %v2097 = vld [vmem:[%s2091 + $0x28] sm:$0xff]
          %v2098 = vld [vmem:[%s2091 + $0x30] sm:$0xff]
          %v2099 = vld [vmem:[%s2091 + $0x38] sm:$0xff]
          %v2100 = vld [vmem:[%s2091 + $0x40] sm:$0xff]
          %v2101 = vld [vmem:[%s2091 + $0x48] sm:$0xff]
          %v2102 = vld [vmem:[%s2091 + $0x50] sm:$0xff]
          %v2103 = vld [vmem:[%s2091 + $0x58] sm:$0xff]
          %v2104 = vld [vmem:[%s2091 + $0x60] sm:$0xff]
          %v2105 = vld [vmem:[%s2091 + $0x68] sm:$0xff]
          %v2106 = vld [vmem:[%s2091 + $0x70] sm:$0xff]
          %v2107 = vld [vmem:[%s2091 + $0x78] sm:$0xff]
          %v2108 = vld [vmem:[%s2091 + $0x80] sm:$0xff]
          %v2109 = vld [vmem:[%s2091 + $0x88] sm:$0xff]
          %v2110 = vld [vmem:[%s2091 + $0x90] sm:$0xff]
          %v2111 = vld [vmem:[%s2091 + $0x98] sm:$0xff]
          %v2112 = vld [vmem:[%s2091 + $0xa0] sm:$0xff]
          %v2113 = vld [vmem:[%s2091 + $0xa8] sm:$0xff]
          %v2114 = vld [vmem:[%s2091 + $0xb0] sm:$0xff]
          %v2115 = vld [vmem:[%s2091 + $0xb8] sm:$0xff]
          %v2116 = vld [vmem:[%s2091 + $0xc0] sm:$0xff]
          %v2117 = vld [vmem:[%s2091 + $0xc8] sm:$0xff]
          %v2118 = vld [vmem:[%s2091 + $0xd0] sm:$0xff]
          %v2119 = vld [vmem:[%s2091 + $0xd8] sm:$0xff]
          %v2120 = vld [vmem:[%s2091 + $0xe0] sm:$0xff]
          %v2121 = vld [vmem:[%s2091 + $0xe8] sm:$0xff]
          %v2122 = vld [vmem:[%s2091 + $0xf0] sm:$0xff]
          %v2123 = vld [vmem:[%s2091 + $0xf8] sm:$0xff]
          %v2124 = vld [vmem:[%s2091 + $0x100] sm:$0xff]
          %v2125 = vld [vmem:[%s2091 + $0x108] sm:$0xff]
          %v2126 = vld [vmem:[%s2091 + $0x110] sm:$0xff]
          %v2127 = vld [vmem:[%s2091 + $0x118] sm:$0xff]
          %v2128 = vld [vmem:[%s2091 + $0x120] sm:$0xff]
          %v2129 = vld [vmem:[%s2091 + $0x128] sm:$0xff]
          %v2130 = vld [vmem:[%s2091 + $0x130] sm:$0xff]
          %v2131 = vld [vmem:[%s2091 + $0x138] sm:$0xff]
          %v2132 = vld [vmem:[%s2091 + $0x140] sm:$0xff]
          %v2133 = vld [vmem:[%s2091 + $0x148] sm:$0xff]
          %v2134 = vld [vmem:[%s2091 + $0x150] sm:$0xff]
          %v2135 = vld [vmem:[%s2091 + $0x158] sm:$0xff]
          %v2136 = vld [vmem:[%s2091 + $0x160] sm:$0xff]
          %v2137 = vld [vmem:[%s2091 + $0x168] sm:$0xff]
          %v2138 = vld [vmem:[%s2091 + $0x170] sm:$0xff]
          %v2139 = vld [vmem:[%s2091 + $0x178] sm:$0xff]
          %v2140 = vld [vmem:[%s2091 + $0x180] sm:$0xff]
          %v2141 = vld [vmem:[%s2091 + $0x188] sm:$0xff]
          %v2142 = vld [vmem:[%s2091 + $0x190] sm:$0xff]
          %v2143 = vld [vmem:[%s2091 + $0x198] sm:$0xff]
          %v2144 = vld [vmem:[%s2091 + $0x1a0] sm:$0xff]
          %v2145 = vld [vmem:[%s2091 + $0x1a8] sm:$0xff]
          %v2146 = vld [vmem:[%s2091 + $0x1b0] sm:$0xff]
          %v2147 = vld [vmem:[%s2091 + $0x1b8] sm:$0xff]
          %v2148 = vld [vmem:[%s2091 + $0x1c0] sm:$0xff]
          %v2149 = vld [vmem:[%s2091 + $0x1c8] sm:$0xff]
          %v2150 = vld [vmem:[%s2091 + $0x1d0] sm:$0xff]
          %v2151 = vld [vmem:[%s2091 + $0x1d8] sm:$0xff]
          %v2152 = vld [vmem:[%s2091 + $0x1e0] sm:$0xff]
          %v2153 = vld [vmem:[%s2091 + $0x1e8] sm:$0xff]
          %v2154 = vld [vmem:[%s2091 + $0x1f0] sm:$0xff]
          %v2155 = vld [vmem:[%s2091 + $0x1f8] sm:$0xff]
          %v2156 = vld [vmem:[%s2091 + $0x200] sm:$0xff]
          %v2157 = vld [vmem:[%s2091 + $0x208] sm:$0xff]
          %v2158 = vld [vmem:[%s2091 + $0x210] sm:$0xff]
          %v2159 = vld [vmem:[%s2091 + $0x218] sm:$0xff]
          %v2160 = vld [vmem:[%s2091 + $0x220] sm:$0xff]
          %v2161 = vld [vmem:[%s2091 + $0x228] sm:$0xff]
          %v2162 = vld [vmem:[%s2091 + $0x230] sm:$0xff]
          %v2163 = vld [vmem:[%s2091 + $0x238] sm:$0xff]
          %v2164 = vld [vmem:[%s2091 + $0x240] sm:$0xff]
          %v2165 = vld [vmem:[%s2091 + $0x248] sm:$0xff]
          %v2166 = vld [vmem:[%s2091 + $0x250] sm:$0xff]
          %v2167 = vld [vmem:[%s2091 + $0x258] sm:$0xff]
          %v2168 = vld [vmem:[%s2091 + $0x260] sm:$0xff]
          %v2169 = vld [vmem:[%s2091 + $0x268] sm:$0xff]
          %v2170 = vld [vmem:[%s2091 + $0x270] sm:$0xff]
          %v2171 = vld [vmem:[%s2091 + $0x278] sm:$0xff]
          %v2172 = vld [vmem:[%s2091 + $0x280] sm:$0xff]
          %v2173 = vld [vmem:[%s2091 + $0x288] sm:$0xff]
          %v2174 = vld [vmem:[%s2091 + $0x290] sm:$0xff]
          %v2175 = vld [vmem:[%s2091 + $0x298] sm:$0xff]
          %v2176 = vld [vmem:[%s2091 + $0x2a0] sm:$0xff]
          %v2177 = vld [vmem:[%s2091 + $0x2a8] sm:$0xff]
          %v2178 = vld [vmem:[%s2091 + $0x2b0] sm:$0xff]
          %v2179 = vld [vmem:[%s2091 + $0x2b8] sm:$0xff]
          %v2180 = vld [vmem:[%s2091 + $0x2c0] sm:$0xff]
          %v2181 = vld [vmem:[%s2091 + $0x2c8] sm:$0xff]
          %v2182 = vld [vmem:[%s2091 + $0x2d0] sm:$0xff]
          %v2183 = vld [vmem:[%s2091 + $0x2d8] sm:$0xff]
          %v2184 = vld [vmem:[%s2091 + $0x2e0] sm:$0xff]
          %v2185 = vld [vmem:[%s2091 + $0x2e8] sm:$0xff]
          %v2186 = vld [vmem:[%s2091 + $0x2f0] sm:$0xff]
          %v2187 = vld [vmem:[%s2091 + $0x2f8] sm:$0xff]
          %v2188 = vld [vmem:[%s2091 + $0x300] sm:$0xff]
          %v2189 = vld [vmem:[%s2091 + $0x308] sm:$0xff]
          %v2190 = vld [vmem:[%s2091 + $0x310] sm:$0xff]
          %v2191 = vld [vmem:[%s2091 + $0x318] sm:$0xff]
          %v2192 = vld [vmem:[%s2091 + $0x320] sm:$0xff]
          %v2193 = vld [vmem:[%s2091 + $0x328] sm:$0xff]
          %v2194 = vld [vmem:[%s2091 + $0x330] sm:$0xff]
          %v2195 = vld [vmem:[%s2091 + $0x338] sm:$0xff]
          %v2196 = vld [vmem:[%s2091 + $0x340] sm:$0xff]
          %v2197 = vld [vmem:[%s2091 + $0x348] sm:$0xff]
          %v2198 = vld [vmem:[%s2091 + $0x350] sm:$0xff]
          %v2199 = vld [vmem:[%s2091 + $0x358] sm:$0xff]
          %v2200 = vld [vmem:[%s2091 + $0x360] sm:$0xff]
          %v2201 = vld [vmem:[%s2091 + $0x368] sm:$0xff]
          %v2202 = vld [vmem:[%s2091 + $0x370] sm:$0xff]
          %v2203 = vld [vmem:[%s2091 + $0x378] sm:$0xff]
          %v2204 = vld [vmem:[%s2091 + $0x380] sm:$0xff]
          %v2205 = vld [vmem:[%s2091 + $0x388] sm:$0xff]
          %v2206 = vld [vmem:[%s2091 + $0x390] sm:$0xff]
          %v2207 = vld [vmem:[%s2091 + $0x398] sm:$0xff]
          %v2208 = vld [vmem:[%s2091 + $0x3a0] sm:$0xff]
          %v2209 = vld [vmem:[%s2091 + $0x3a8] sm:$0xff]
          %v2210 = vld [vmem:[%s2091 + $0x3b0] sm:$0xff]
          %v2211 = vld [vmem:[%s2091 + $0x3b8] sm:$0xff]
          %v2212 = vld [vmem:[%s2091 + $0x3c0] sm:$0xff]
          %v2213 = vld [vmem:[%s2091 + $0x3c8] sm:$0xff]
          %v2214 = vld [vmem:[%s2091 + $0x3d0] sm:$0xff]
          %v2215 = vld [vmem:[%s2091 + $0x3d8] sm:$0xff]
          %v2216 = vld [vmem:[%s2091 + $0x3e0] sm:$0xff]
          %v2217 = vld [vmem:[%s2091 + $0x3e8] sm:$0xff]
          %v2218 = vld [vmem:[%s2091 + $0x3f0] sm:$0xff]
          %v2219 = vld [vmem:[%s2091 + $0x3f8] sm:$0xff]
          %v2220 = vld [vmem:[%s2091 + $0x400] sm:$0xff]
          %v2221 = vld [vmem:[%s2091 + $0x408] sm:$0xff]
          %v2222 = vld [vmem:[%s2091 + $0x410] sm:$0xff]
          %v2223 = vld [vmem:[%s2091 + $0x418] sm:$0xff]
          %v2224 = vld [vmem:[%s2091 + $0x420] sm:$0xff]
          %v2225 = vld [vmem:[%s2091 + $0x428] sm:$0xff]
          %v2226 = vld [vmem:[%s2091 + $0x430] sm:$0xff]
          %v2227 = vld [vmem:[%s2091 + $0x438] sm:$0xff]
          %v2228 = vld [vmem:[%s2091 + $0x440] sm:$0xff]
          %v2229 = vld [vmem:[%s2091 + $0x448] sm:$0xff]
          %v2230 = vld [vmem:[%s2091 + $0x450] sm:$0xff]
          %v2231 = vld [vmem:[%s2091 + $0x458] sm:$0xff]
          %v2232 = vld [vmem:[%s2091 + $0x460] sm:$0xff]
          %v2233 = vld [vmem:[%s2091 + $0x468] sm:$0xff]
          %v2234 = vld [vmem:[%s2091 + $0x470] sm:$0xff]
          %v2235 = vld [vmem:[%s2091 + $0x478] sm:$0xff]
          %v2236 = vld [vmem:[%s2091 + $0x480] sm:$0xff]
          %v2237 = vld [vmem:[%s2091 + $0x488] sm:$0xff]
          %v2238 = vld [vmem:[%s2091 + $0x490] sm:$0xff]
          %v2239 = vld [vmem:[%s2091 + $0x498] sm:$0xff]
          %v2240 = vld [vmem:[%s2091 + $0x4a0] sm:$0xff]
          %v2241 = vld [vmem:[%s2091 + $0x4a8] sm:$0xff]
          %v2242 = vld [vmem:[%s2091 + $0x4b0] sm:$0xff]
          %v2243 = vld [vmem:[%s2091 + $0x4b8] sm:$0xff]
          %v2244 = vld [vmem:[%s2091 + $0x4c0] sm:$0xff]
          %v2245 = vld [vmem:[%s2091 + $0x4c8] sm:$0xff]
          %v2246 = vld [vmem:[%s2091 + $0x4d0] sm:$0xff]
          %v2247 = vld [vmem:[%s2091 + $0x4d8] sm:$0xff]
          %v2248 = vld [vmem:[%s2091 + $0x4e0] sm:$0xff]
          %v2249 = vld [vmem:[%s2091 + $0x4e8] sm:$0xff]
          %v2250 = vld [vmem:[%s2091 + $0x4f0] sm:$0xff]
          %v2251 = vld [vmem:[%s2091 + $0x4f8] sm:$0xff]
          %v2252 = vld [vmem:[%s2091 + $0x500] sm:$0xff]
          %v2253 = vld [vmem:[%s2091 + $0x508] sm:$0xff]
          %v2254 = vld [vmem:[%s2091 + $0x510] sm:$0xff]
          %v2255 = vld [vmem:[%s2091 + $0x518] sm:$0xff]
          %v2256 = vld [vmem:[%s2091 + $0x520] sm:$0xff]
          %v2257 = vld [vmem:[%s2091 + $0x528] sm:$0xff]
          %v2258 = vld [vmem:[%s2091 + $0x530] sm:$0xff]
          %v2259 = vld [vmem:[%s2091 + $0x538] sm:$0xff]
          %v2260 = vld [vmem:[%s2091 + $0x540] sm:$0xff]
          %v2261 = vld [vmem:[%s2091 + $0x548] sm:$0xff]
          %v2262 = vld [vmem:[%s2091 + $0x550] sm:$0xff]
          %v2263 = vld [vmem:[%s2091 + $0x558] sm:$0xff]
          %v2264 = vld [vmem:[%s2091 + $0x560] sm:$0xff]
          %v2265 = vld [vmem:[%s2091 + $0x568] sm:$0xff]
          %v2266 = vld [vmem:[%s2091 + $0x570] sm:$0xff]
          %v2267 = vld [vmem:[%s2091 + $0x578] sm:$0xff]
          %v2268 = vld [vmem:[%s2091 + $0x580] sm:$0xff]
          %v2269 = vld [vmem:[%s2091 + $0x588] sm:$0xff]
          %v2270 = vld [vmem:[%s2091 + $0x590] sm:$0xff]
          %v2271 = vld [vmem:[%s2091 + $0x598] sm:$0xff]
          %v2272 = vld [vmem:[%s2091 + $0x5a0] sm:$0xff]
          %v2273 = vld [vmem:[%s2091 + $0x5a8] sm:$0xff]
          %v2274 = vld [vmem:[%s2091 + $0x5b0] sm:$0xff]
          %v2275 = vld [vmem:[%s2091 + $0x5b8] sm:$0xff]
          %v2276 = vld [vmem:[%s2091 + $0x5c0] sm:$0xff]
          %v2277 = vld [vmem:[%s2091 + $0x5c8] sm:$0xff]
          %v2278 = vld [vmem:[%s2091 + $0x5d0] sm:$0xff]
          %v2279 = vld [vmem:[%s2091 + $0x5d8] sm:$0xff]
          %v2280 = vld [vmem:[%s2091 + $0x5e0] sm:$0xff]
          %v2281 = vld [vmem:[%s2091 + $0x5e8] sm:$0xff]
          %v2282 = vld [vmem:[%s2091 + $0x5f0] sm:$0xff]
          %v2283 = vld [vmem:[%s2091 + $0x5f8] sm:$0xff]
          %v2284 = vld [vmem:[%s2091 + $0x600] sm:$0xff]
          %v2285 = vld [vmem:[%s2091 + $0x608] sm:$0xff]
          %v2286 = vld [vmem:[%s2091 + $0x610] sm:$0xff]
          %v2287 = vld [vmem:[%s2091 + $0x618] sm:$0xff]
          %v2288 = vld [vmem:[%s2091 + $0x620] sm:$0xff]
          %v2289 = vld [vmem:[%s2091 + $0x628] sm:$0xff]
          %v2290 = vld [vmem:[%s2091 + $0x630] sm:$0xff]
          %v2291 = vld [vmem:[%s2091 + $0x638] sm:$0xff]
          %v2292 = vld [vmem:[%s2091 + $0x640] sm:$0xff]
          %v2293 = vld [vmem:[%s2091 + $0x648] sm:$0xff]
          %v2294 = vld [vmem:[%s2091 + $0x650] sm:$0xff]
          %v2295 = vld [vmem:[%s2091 + $0x658] sm:$0xff]
          %v2296 = vld [vmem:[%s2091 + $0x660] sm:$0xff]
          %v2297 = vld [vmem:[%s2091 + $0x668] sm:$0xff]
          %v2298 = vld [vmem:[%s2091 + $0x670] sm:$0xff]
          %v2299 = vld [vmem:[%s2091 + $0x678] sm:$0xff]
          %v2300 = vld [vmem:[%s2091 + $0x680] sm:$0xff]
          %v2301 = vld [vmem:[%s2091 + $0x688] sm:$0xff]
          %v2302 = vld [vmem:[%s2091 + $0x690] sm:$0xff]
          %v2303 = vld [vmem:[%s2091 + $0x698] sm:$0xff]
          %v2304 = vld [vmem:[%s2091 + $0x6a0] sm:$0xff]
          %v2305 = vld [vmem:[%s2091 + $0x6a8] sm:$0xff]
          %v2306 = vld [vmem:[%s2091 + $0x6b0] sm:$0xff]
          %v2307 = vld [vmem:[%s2091 + $0x6b8] sm:$0xff]
          %v2308 = vld [vmem:[%s2091 + $0x6c0] sm:$0xff]
          %v2309 = vld [vmem:[%s2091 + $0x6c8] sm:$0xff]
          %v2310 = vld [vmem:[%s2091 + $0x6d0] sm:$0xff]
          %v2311 = vld [vmem:[%s2091 + $0x6d8] sm:$0xff]
          %v2312 = vld [vmem:[%s2091 + $0x6e0] sm:$0xff]
          %v2313 = vld [vmem:[%s2091 + $0x6e8] sm:$0xff]
          %v2314 = vld [vmem:[%s2091 + $0x6f0] sm:$0xff]
          %v2315 = vld [vmem:[%s2091 + $0x6f8] sm:$0xff]
          %v2316 = vld [vmem:[%s2091 + $0x700] sm:$0xff]
          %v2317 = vld [vmem:[%s2091 + $0x708] sm:$0xff]
          %v2318 = vld [vmem:[%s2091 + $0x710] sm:$0xff]
          %v2319 = vld [vmem:[%s2091 + $0x718] sm:$0xff]
          %v2320 = vld [vmem:[%s2091 + $0x720] sm:$0xff]
          %v2321 = vld [vmem:[%s2091 + $0x728] sm:$0xff]
          %v2322 = vld [vmem:[%s2091 + $0x730] sm:$0xff]
          %v2323 = vld [vmem:[%s2091 + $0x738] sm:$0xff]
          %v2324 = vld [vmem:[%s2091 + $0x740] sm:$0xff]
          %v2325 = vld [vmem:[%s2091 + $0x748] sm:$0xff]
          %v2326 = vld [vmem:[%s2091 + $0x750] sm:$0xff]
          %v2327 = vld [vmem:[%s2091 + $0x758] sm:$0xff]
          %v2328 = vld [vmem:[%s2091 + $0x760] sm:$0xff]
          %v2329 = vld [vmem:[%s2091 + $0x768] sm:$0xff]
          %v2330 = vld [vmem:[%s2091 + $0x770] sm:$0xff]
          %v2331 = vld [vmem:[%s2091 + $0x778] sm:$0xff]
          %v2332 = vld [vmem:[%s2091 + $0x780] sm:$0xff]
          %v2333 = vld [vmem:[%s2091 + $0x788] sm:$0xff]
          %v2334 = vld [vmem:[%s2091 + $0x790] sm:$0xff]
          %v2335 = vld [vmem:[%s2091 + $0x798] sm:$0xff]
          %v2336 = vld [vmem:[%s2091 + $0x7a0] sm:$0xff]
          %v2337 = vld [vmem:[%s2091 + $0x7a8] sm:$0xff]
          %v2338 = vld [vmem:[%s2091 + $0x7b0] sm:$0xff]
          %v2339 = vld [vmem:[%s2091 + $0x7b8] sm:$0xff]
          %v2340 = vld [vmem:[%s2091 + $0x7c0] sm:$0xff]
          %v2341 = vld [vmem:[%s2091 + $0x7c8] sm:$0xff]
          %v2342 = vld [vmem:[%s2091 + $0x7d0] sm:$0xff]
          %v2343 = vld [vmem:[%s2091 + $0x7d8] sm:$0xff]
          %v2344 = vld [vmem:[%s2091 + $0x7e0] sm:$0xff]
          %v2345 = vld [vmem:[%s2091 + $0x7e8] sm:$0xff]
          %v2346 = vld [vmem:[%s2091 + $0x7f0] sm:$0xff]
          %v2347 = vld [vmem:[%s2091 + $0x7f8] sm:$0xff]
          %v2348 = vld [vmem:[%s2091 + $0x800] sm:$0xff]
          %v2349 = vld [vmem:[%s2091 + $0x808] sm:$0xff]
          %v2350 = vld [vmem:[%s2091 + $0x810] sm:$0xff]
          %v2351 = vld [vmem:[%s2091 + $0x818] sm:$0xff]
          %v2352 = vld [vmem:[%s2091 + $0x820] sm:$0xff]
          %v2353 = vld [vmem:[%s2091 + $0x828] sm:$0xff]
          %v2354 = vld [vmem:[%s2091 + $0x830] sm:$0xff]
          %v2355 = vld [vmem:[%s2091 + $0x838] sm:$0xff]
          %v2356 = vld [vmem:[%s2091 + $0x840] sm:$0xff]
          %v2357 = vld [vmem:[%s2091 + $0x848] sm:$0xff]
          %v2358 = vld [vmem:[%s2091 + $0x850] sm:$0xff]
          %v2359 = vld [vmem:[%s2091 + $0x858] sm:$0xff]
          %v2360 = vld [vmem:[%s2091 + $0x860] sm:$0xff]
          %v2361 = vld [vmem:[%s2091 + $0x868] sm:$0xff]
          %v2362 = vld [vmem:[%s2091 + $0x870] sm:$0xff]
          %v2363 = vld [vmem:[%s2091 + $0x878] sm:$0xff]
          %v2364 = vld [vmem:[%s2091 + $0x880] sm:$0xff]
          %v2365 = vld [vmem:[%s2091 + $0x888] sm:$0xff]
          %v2366 = vld [vmem:[%s2091 + $0x890] sm:$0xff]
          %v2367 = vld [vmem:[%s2091 + $0x898] sm:$0xff]
          %v2368 = vld [vmem:[%s2091 + $0x8a0] sm:$0xff]
          %v2369 = vld [vmem:[%s2091 + $0x8a8] sm:$0xff]
          %v2370 = vld [vmem:[%s2091 + $0x8b0] sm:$0xff]
          %v2371 = vld [vmem:[%s2091 + $0x8b8] sm:$0xff]
          %v2372 = vld [vmem:[%s2091 + $0x8c0] sm:$0xff]
          %v2373 = vld [vmem:[%s2091 + $0x8c8] sm:$0xff]
          %v2374 = vld [vmem:[%s2091 + $0x8d0] sm:$0xff]
          %v2375 = vld [vmem:[%s2091 + $0x8d8] sm:$0xff]
          %v2376 = vld [vmem:[%s2091 + $0x8e0] sm:$0xff]
          %v2377 = vld [vmem:[%s2091 + $0x8e8] sm:$0xff]
          %v2378 = vld [vmem:[%s2091 + $0x8f0] sm:$0xff]
          %v2379 = vld [vmem:[%s2091 + $0x8f8] sm:$0xff]
          %v2380 = vunpack.c.l.s8.bf16 %v2092
          %v2381 = vunpack.c.l.s8.bf16 %v2093
          %v2382 = vunpack.c.l.s8.bf16 %v2094
          %v2383 = vunpack.c.l.s8.bf16 %v2095
          %v2384 = vunpack.c.l.s8.bf16 %v2096
          %v2385 = vunpack.c.l.s8.bf16 %v2097
          %v2386 = vunpack.c.l.s8.bf16 %v2098
          %v2387 = vunpack.c.l.s8.bf16 %v2099
          %v2388 = vunpack.c.h.s8.bf16 %v2092
          %v2389 = vunpack.c.h.s8.bf16 %v2093
          %v2390 = vunpack.c.h.s8.bf16 %v2094
          %v2391 = vunpack.c.h.s8.bf16 %v2095
          %v2392 = vunpack.c.h.s8.bf16 %v2096
          %v2393 = vunpack.c.h.s8.bf16 %v2097
          %v2394 = vunpack.c.h.s8.bf16 %v2098
          %v2395 = vunpack.c.h.s8.bf16 %v2099
          %v2396 = vunpack.c.l.s8.bf16 %v2100
          %v2397 = vunpack.c.l.s8.bf16 %v2101
          %v2398 = vunpack.c.l.s8.bf16 %v2102
          %v2399 = vunpack.c.l.s8.bf16 %v2103
          %v2400 = vunpack.c.l.s8.bf16 %v2104
          %v2401 = vunpack.c.l.s8.bf16 %v2105
          %v2402 = vunpack.c.l.s8.bf16 %v2106
          %v2403 = vunpack.c.l.s8.bf16 %v2107
          %v2404 = vunpack.c.h.s8.bf16 %v2100
          %v2405 = vunpack.c.h.s8.bf16 %v2101
          %v2406 = vunpack.c.h.s8.bf16 %v2102
          %v2407 = vunpack.c.h.s8.bf16 %v2103
          %v2408 = vunpack.c.h.s8.bf16 %v2104
          %v2409 = vunpack.c.h.s8.bf16 %v2105
          %v2410 = vunpack.c.h.s8.bf16 %v2106
          %v2411 = vunpack.c.h.s8.bf16 %v2107
          %v2412 = vunpack.c.l.s8.bf16 %v2108
          %v2413 = vunpack.c.l.s8.bf16 %v2109
          %v2414 = vunpack.c.l.s8.bf16 %v2110
          %v2415 = vunpack.c.l.s8.bf16 %v2111
          %v2416 = vunpack.c.l.s8.bf16 %v2112
          %v2417 = vunpack.c.l.s8.bf16 %v2113
          %v2418 = vunpack.c.l.s8.bf16 %v2114
          %v2419 = vunpack.c.l.s8.bf16 %v2115
          %v2420 = vunpack.c.h.s8.bf16 %v2108
          %v2421 = vunpack.c.h.s8.bf16 %v2109
          %v2422 = vunpack.c.h.s8.bf16 %v2110
          %v2423 = vunpack.c.h.s8.bf16 %v2111
          %v2424 = vunpack.c.h.s8.bf16 %v2112
          %v2425 = vunpack.c.h.s8.bf16 %v2113
          %v2426 = vunpack.c.h.s8.bf16 %v2114
          %v2427 = vunpack.c.h.s8.bf16 %v2115
          %v2428 = vunpack.c.l.s8.bf16 %v2116
          %v2429 = vunpack.c.l.s8.bf16 %v2117
          %v2430 = vunpack.c.l.s8.bf16 %v2118
          %v2431 = vunpack.c.l.s8.bf16 %v2119
          %v2432 = vunpack.c.l.s8.bf16 %v2120
          %v2433 = vunpack.c.l.s8.bf16 %v2121
          %v2434 = vunpack.c.l.s8.bf16 %v2122
          %v2435 = vunpack.c.l.s8.bf16 %v2123
          %v2436 = vunpack.c.h.s8.bf16 %v2116
          %v2437 = vunpack.c.h.s8.bf16 %v2117
          %v2438 = vunpack.c.h.s8.bf16 %v2118
          %v2439 = vunpack.c.h.s8.bf16 %v2119
          %v2440 = vunpack.c.h.s8.bf16 %v2120
          %v2441 = vunpack.c.h.s8.bf16 %v2121
          %v2442 = vunpack.c.h.s8.bf16 %v2122
          %v2443 = vunpack.c.h.s8.bf16 %v2123
          %v2444 = vunpack.c.l.s8.bf16 %v2124
          %v2445 = vunpack.c.l.s8.bf16 %v2125
          %v2446 = vunpack.c.l.s8.bf16 %v2126
          %v2447 = vunpack.c.l.s8.bf16 %v2127
          %v2448 = vunpack.c.l.s8.bf16 %v2128
          %v2449 = vunpack.c.l.s8.bf16 %v2129
          %v2450 = vunpack.c.l.s8.bf16 %v2130
          %v2451 = vunpack.c.l.s8.bf16 %v2131
          %v2452 = vunpack.c.h.s8.bf16 %v2124
          %v2453 = vunpack.c.h.s8.bf16 %v2125
          %v2454 = vunpack.c.h.s8.bf16 %v2126
          %v2455 = vunpack.c.h.s8.bf16 %v2127
          %v2456 = vunpack.c.h.s8.bf16 %v2128
          %v2457 = vunpack.c.h.s8.bf16 %v2129
          %v2458 = vunpack.c.h.s8.bf16 %v2130
          %v2459 = vunpack.c.h.s8.bf16 %v2131
          %v2460 = vunpack.c.l.s8.bf16 %v2132
          %v2461 = vunpack.c.l.s8.bf16 %v2133
          %v2462 = vunpack.c.l.s8.bf16 %v2134
          %v2463 = vunpack.c.l.s8.bf16 %v2135
          %v2464 = vunpack.c.l.s8.bf16 %v2136
          %v2465 = vunpack.c.l.s8.bf16 %v2137
          %v2466 = vunpack.c.l.s8.bf16 %v2138
          %v2467 = vunpack.c.l.s8.bf16 %v2139
          %v2468 = vunpack.c.h.s8.bf16 %v2132
          %v2469 = vunpack.c.h.s8.bf16 %v2133
          %v2470 = vunpack.c.h.s8.bf16 %v2134
          %v2471 = vunpack.c.h.s8.bf16 %v2135
          %v2472 = vunpack.c.h.s8.bf16 %v2136
          %v2473 = vunpack.c.h.s8.bf16 %v2137
          %v2474 = vunpack.c.h.s8.bf16 %v2138
          %v2475 = vunpack.c.h.s8.bf16 %v2139
          %v2476 = vunpack.c.l.s8.bf16 %v2140
          %v2477 = vunpack.c.l.s8.bf16 %v2141
          %v2478 = vunpack.c.l.s8.bf16 %v2142
          %v2479 = vunpack.c.l.s8.bf16 %v2143
          %v2480 = vunpack.c.l.s8.bf16 %v2144
          %v2481 = vunpack.c.l.s8.bf16 %v2145
          %v2482 = vunpack.c.l.s8.bf16 %v2146
          %v2483 = vunpack.c.l.s8.bf16 %v2147
          %v2484 = vunpack.c.h.s8.bf16 %v2140
          %v2485 = vunpack.c.h.s8.bf16 %v2141
          %v2486 = vunpack.c.h.s8.bf16 %v2142
          %v2487 = vunpack.c.h.s8.bf16 %v2143
          %v2488 = vunpack.c.h.s8.bf16 %v2144
          %v2489 = vunpack.c.h.s8.bf16 %v2145
          %v2490 = vunpack.c.h.s8.bf16 %v2146
          %v2491 = vunpack.c.h.s8.bf16 %v2147
          %v2492 = vunpack.c.l.s8.bf16 %v2148
          %v2493 = vunpack.c.l.s8.bf16 %v2149
          %v2494 = vunpack.c.l.s8.bf16 %v2150
          %v2495 = vunpack.c.l.s8.bf16 %v2151
          %v2496 = vunpack.c.l.s8.bf16 %v2152
          %v2497 = vunpack.c.l.s8.bf16 %v2153
          %v2498 = vunpack.c.l.s8.bf16 %v2154
          %v2499 = vunpack.c.l.s8.bf16 %v2155
          %v2500 = vunpack.c.h.s8.bf16 %v2148
          %v2501 = vunpack.c.h.s8.bf16 %v2149
          %v2502 = vunpack.c.h.s8.bf16 %v2150
          %v2503 = vunpack.c.h.s8.bf16 %v2151
          %v2504 = vunpack.c.h.s8.bf16 %v2152
          %v2505 = vunpack.c.h.s8.bf16 %v2153
          %v2506 = vunpack.c.h.s8.bf16 %v2154
          %v2507 = vunpack.c.h.s8.bf16 %v2155
          %v2508 = vunpack.c.l.s8.bf16 %v2156
          %v2509 = vunpack.c.l.s8.bf16 %v2157
          %v2510 = vunpack.c.l.s8.bf16 %v2158
          %v2511 = vunpack.c.l.s8.bf16 %v2159
          %v2512 = vunpack.c.l.s8.bf16 %v2160
          %v2513 = vunpack.c.l.s8.bf16 %v2161
          %v2514 = vunpack.c.l.s8.bf16 %v2162
          %v2515 = vunpack.c.l.s8.bf16 %v2163
          %v2516 = vunpack.c.h.s8.bf16 %v2156
          %v2517 = vunpack.c.h.s8.bf16 %v2157
          %v2518 = vunpack.c.h.s8.bf16 %v2158
          %v2519 = vunpack.c.h.s8.bf16 %v2159
          %v2520 = vunpack.c.h.s8.bf16 %v2160
          %v2521 = vunpack.c.h.s8.bf16 %v2161
          %v2522 = vunpack.c.h.s8.bf16 %v2162
          %v2523 = vunpack.c.h.s8.bf16 %v2163
          %v2524 = vunpack.c.l.s8.bf16 %v2164
          %v2525 = vunpack.c.l.s8.bf16 %v2165
          %v2526 = vunpack.c.l.s8.bf16 %v2166
          %v2527 = vunpack.c.l.s8.bf16 %v2167
          %v2528 = vunpack.c.l.s8.bf16 %v2168
          %v2529 = vunpack.c.l.s8.bf16 %v2169
          %v2530 = vunpack.c.l.s8.bf16 %v2170
          %v2531 = vunpack.c.l.s8.bf16 %v2171
          %v2532 = vunpack.c.h.s8.bf16 %v2164
          %v2533 = vunpack.c.h.s8.bf16 %v2165
          %v2534 = vunpack.c.h.s8.bf16 %v2166
          %v2535 = vunpack.c.h.s8.bf16 %v2167
          %v2536 = vunpack.c.h.s8.bf16 %v2168
          %v2537 = vunpack.c.h.s8.bf16 %v2169
          %v2538 = vunpack.c.h.s8.bf16 %v2170
          %v2539 = vunpack.c.h.s8.bf16 %v2171
          %v2540 = vunpack.c.l.s8.bf16 %v2172
          %v2541 = vunpack.c.l.s8.bf16 %v2173
          %v2542 = vunpack.c.l.s8.bf16 %v2174
          %v2543 = vunpack.c.l.s8.bf16 %v2175
          %v2544 = vunpack.c.l.s8.bf16 %v2176
          %v2545 = vunpack.c.l.s8.bf16 %v2177
          %v2546 = vunpack.c.l.s8.bf16 %v2178
          %v2547 = vunpack.c.l.s8.bf16 %v2179
          %v2548 = vunpack.c.h.s8.bf16 %v2172
          %v2549 = vunpack.c.h.s8.bf16 %v2173
          %v2550 = vunpack.c.h.s8.bf16 %v2174
          %v2551 = vunpack.c.h.s8.bf16 %v2175
          %v2552 = vunpack.c.h.s8.bf16 %v2176
          %v2553 = vunpack.c.h.s8.bf16 %v2177
          %v2554 = vunpack.c.h.s8.bf16 %v2178
          %v2555 = vunpack.c.h.s8.bf16 %v2179
          %v2556 = vunpack.c.l.s8.bf16 %v2180
          %v2557 = vunpack.c.l.s8.bf16 %v2181
          %v2558 = vunpack.c.l.s8.bf16 %v2182
          %v2559 = vunpack.c.l.s8.bf16 %v2183
          %v2560 = vunpack.c.l.s8.bf16 %v2184
          %v2561 = vunpack.c.l.s8.bf16 %v2185
          %v2562 = vunpack.c.l.s8.bf16 %v2186
          %v2563 = vunpack.c.l.s8.bf16 %v2187
          %v2564 = vunpack.c.h.s8.bf16 %v2180
          %v2565 = vunpack.c.h.s8.bf16 %v2181
          %v2566 = vunpack.c.h.s8.bf16 %v2182
          %v2567 = vunpack.c.h.s8.bf16 %v2183
          %v2568 = vunpack.c.h.s8.bf16 %v2184
          %v2569 = vunpack.c.h.s8.bf16 %v2185
          %v2570 = vunpack.c.h.s8.bf16 %v2186
          %v2571 = vunpack.c.h.s8.bf16 %v2187
          %v2572 = vunpack.c.l.s8.bf16 %v2188
          %v2573 = vunpack.c.l.s8.bf16 %v2189
          %v2574 = vunpack.c.l.s8.bf16 %v2190
          %v2575 = vunpack.c.l.s8.bf16 %v2191
          %v2576 = vunpack.c.l.s8.bf16 %v2192
          %v2577 = vunpack.c.l.s8.bf16 %v2193
          %v2578 = vunpack.c.l.s8.bf16 %v2194
          %v2579 = vunpack.c.l.s8.bf16 %v2195
          %v2580 = vunpack.c.h.s8.bf16 %v2188
          %v2581 = vunpack.c.h.s8.bf16 %v2189
          %v2582 = vunpack.c.h.s8.bf16 %v2190
          %v2583 = vunpack.c.h.s8.bf16 %v2191
          %v2584 = vunpack.c.h.s8.bf16 %v2192
          %v2585 = vunpack.c.h.s8.bf16 %v2193
          %v2586 = vunpack.c.h.s8.bf16 %v2194
          %v2587 = vunpack.c.h.s8.bf16 %v2195
          %v2588 = vunpack.c.l.s8.bf16 %v2196
          %v2589 = vunpack.c.l.s8.bf16 %v2197
          %v2590 = vunpack.c.l.s8.bf16 %v2198
          %v2591 = vunpack.c.l.s8.bf16 %v2199
          %v2592 = vunpack.c.l.s8.bf16 %v2200
          %v2593 = vunpack.c.l.s8.bf16 %v2201
          %v2594 = vunpack.c.l.s8.bf16 %v2202
          %v2595 = vunpack.c.l.s8.bf16 %v2203
          %v2596 = vunpack.c.h.s8.bf16 %v2196
          %v2597 = vunpack.c.h.s8.bf16 %v2197
          %v2598 = vunpack.c.h.s8.bf16 %v2198
          %v2599 = vunpack.c.h.s8.bf16 %v2199
          %v2600 = vunpack.c.h.s8.bf16 %v2200
          %v2601 = vunpack.c.h.s8.bf16 %v2201
          %v2602 = vunpack.c.h.s8.bf16 %v2202
          %v2603 = vunpack.c.h.s8.bf16 %v2203
          %v2604 = vunpack.c.l.s8.bf16 %v2204
          %v2605 = vunpack.c.l.s8.bf16 %v2205
          %v2606 = vunpack.c.l.s8.bf16 %v2206
          %v2607 = vunpack.c.l.s8.bf16 %v2207
          %v2608 = vunpack.c.l.s8.bf16 %v2208
          %v2609 = vunpack.c.l.s8.bf16 %v2209
          %v2610 = vunpack.c.l.s8.bf16 %v2210
          %v2611 = vunpack.c.l.s8.bf16 %v2211
          %v2612 = vunpack.c.h.s8.bf16 %v2204
          %v2613 = vunpack.c.h.s8.bf16 %v2205
          %v2614 = vunpack.c.h.s8.bf16 %v2206
          %v2615 = vunpack.c.h.s8.bf16 %v2207
          %v2616 = vunpack.c.h.s8.bf16 %v2208
          %v2617 = vunpack.c.h.s8.bf16 %v2209
          %v2618 = vunpack.c.h.s8.bf16 %v2210
          %v2619 = vunpack.c.h.s8.bf16 %v2211
          %v2620 = vunpack.c.l.s8.bf16 %v2212
          %v2621 = vunpack.c.l.s8.bf16 %v2213
          %v2622 = vunpack.c.l.s8.bf16 %v2214
          %v2623 = vunpack.c.l.s8.bf16 %v2215
          %v2624 = vunpack.c.l.s8.bf16 %v2216
          %v2625 = vunpack.c.l.s8.bf16 %v2217
          %v2626 = vunpack.c.l.s8.bf16 %v2218
          %v2627 = vunpack.c.l.s8.bf16 %v2219
          %v2628 = vunpack.c.h.s8.bf16 %v2212
          %v2629 = vunpack.c.h.s8.bf16 %v2213
          %v2630 = vunpack.c.h.s8.bf16 %v2214
          %v2631 = vunpack.c.h.s8.bf16 %v2215
          %v2632 = vunpack.c.h.s8.bf16 %v2216
          %v2633 = vunpack.c.h.s8.bf16 %v2217
          %v2634 = vunpack.c.h.s8.bf16 %v2218
          %v2635 = vunpack.c.h.s8.bf16 %v2219
          %v2636 = vunpack.c.l.s8.bf16 %v2220
          %v2637 = vunpack.c.l.s8.bf16 %v2221
          %v2638 = vunpack.c.l.s8.bf16 %v2222
          %v2639 = vunpack.c.l.s8.bf16 %v2223
          %v2640 = vunpack.c.l.s8.bf16 %v2224
          %v2641 = vunpack.c.l.s8.bf16 %v2225
          %v2642 = vunpack.c.l.s8.bf16 %v2226
          %v2643 = vunpack.c.l.s8.bf16 %v2227
          %v2644 = vunpack.c.h.s8.bf16 %v2220
          %v2645 = vunpack.c.h.s8.bf16 %v2221
          %v2646 = vunpack.c.h.s8.bf16 %v2222
          %v2647 = vunpack.c.h.s8.bf16 %v2223
          %v2648 = vunpack.c.h.s8.bf16 %v2224
          %v2649 = vunpack.c.h.s8.bf16 %v2225
          %v2650 = vunpack.c.h.s8.bf16 %v2226
          %v2651 = vunpack.c.h.s8.bf16 %v2227
          %v2652 = vunpack.c.l.s8.bf16 %v2228
          %v2653 = vunpack.c.l.s8.bf16 %v2229
          %v2654 = vunpack.c.l.s8.bf16 %v2230
          %v2655 = vunpack.c.l.s8.bf16 %v2231
          %v2656 = vunpack.c.l.s8.bf16 %v2232
          %v2657 = vunpack.c.l.s8.bf16 %v2233
          %v2658 = vunpack.c.l.s8.bf16 %v2234
          %v2659 = vunpack.c.l.s8.bf16 %v2235
          %v2660 = vunpack.c.h.s8.bf16 %v2228
          %v2661 = vunpack.c.h.s8.bf16 %v2229
          %v2662 = vunpack.c.h.s8.bf16 %v2230
          %v2663 = vunpack.c.h.s8.bf16 %v2231
          %v2664 = vunpack.c.h.s8.bf16 %v2232
          %v2665 = vunpack.c.h.s8.bf16 %v2233
          %v2666 = vunpack.c.h.s8.bf16 %v2234
          %v2667 = vunpack.c.h.s8.bf16 %v2235
          %v2668 = vunpack.c.l.s8.bf16 %v2236
          %v2669 = vunpack.c.l.s8.bf16 %v2237
          %v2670 = vunpack.c.l.s8.bf16 %v2238
          %v2671 = vunpack.c.l.s8.bf16 %v2239
          %v2672 = vunpack.c.l.s8.bf16 %v2240
          %v2673 = vunpack.c.l.s8.bf16 %v2241
          %v2674 = vunpack.c.l.s8.bf16 %v2242
          %v2675 = vunpack.c.l.s8.bf16 %v2243
          %v2676 = vunpack.c.h.s8.bf16 %v2236
          %v2677 = vunpack.c.h.s8.bf16 %v2237
          %v2678 = vunpack.c.h.s8.bf16 %v2238
          %v2679 = vunpack.c.h.s8.bf16 %v2239
          %v2680 = vunpack.c.h.s8.bf16 %v2240
          %v2681 = vunpack.c.h.s8.bf16 %v2241
          %v2682 = vunpack.c.h.s8.bf16 %v2242
          %v2683 = vunpack.c.h.s8.bf16 %v2243
          %v2684 = vunpack.c.l.s8.bf16 %v2244
          %v2685 = vunpack.c.l.s8.bf16 %v2245
          %v2686 = vunpack.c.l.s8.bf16 %v2246
          %v2687 = vunpack.c.l.s8.bf16 %v2247
          %v2688 = vunpack.c.l.s8.bf16 %v2248
          %v2689 = vunpack.c.l.s8.bf16 %v2249
          %v2690 = vunpack.c.l.s8.bf16 %v2250
          %v2691 = vunpack.c.l.s8.bf16 %v2251
          %v2692 = vunpack.c.h.s8.bf16 %v2244
          %v2693 = vunpack.c.h.s8.bf16 %v2245
          %v2694 = vunpack.c.h.s8.bf16 %v2246
          %v2695 = vunpack.c.h.s8.bf16 %v2247
          %v2696 = vunpack.c.h.s8.bf16 %v2248
          %v2697 = vunpack.c.h.s8.bf16 %v2249
          %v2698 = vunpack.c.h.s8.bf16 %v2250
          %v2699 = vunpack.c.h.s8.bf16 %v2251
          %v2700 = vunpack.c.l.s8.bf16 %v2252
          %v2701 = vunpack.c.l.s8.bf16 %v2253
          %v2702 = vunpack.c.l.s8.bf16 %v2254
          %v2703 = vunpack.c.l.s8.bf16 %v2255
          %v2704 = vunpack.c.l.s8.bf16 %v2256
          %v2705 = vunpack.c.l.s8.bf16 %v2257
          %v2706 = vunpack.c.l.s8.bf16 %v2258
          %v2707 = vunpack.c.l.s8.bf16 %v2259
          %v2708 = vunpack.c.h.s8.bf16 %v2252
          %v2709 = vunpack.c.h.s8.bf16 %v2253
          %v2710 = vunpack.c.h.s8.bf16 %v2254
          %v2711 = vunpack.c.h.s8.bf16 %v2255
          %v2712 = vunpack.c.h.s8.bf16 %v2256
          %v2713 = vunpack.c.h.s8.bf16 %v2257
          %v2714 = vunpack.c.h.s8.bf16 %v2258
          %v2715 = vunpack.c.h.s8.bf16 %v2259
          %v2716 = vunpack.c.l.s8.bf16 %v2260
          %v2717 = vunpack.c.l.s8.bf16 %v2261
          %v2718 = vunpack.c.l.s8.bf16 %v2262
          %v2719 = vunpack.c.l.s8.bf16 %v2263
          %v2720 = vunpack.c.l.s8.bf16 %v2264
          %v2721 = vunpack.c.l.s8.bf16 %v2265
          %v2722 = vunpack.c.l.s8.bf16 %v2266
          %v2723 = vunpack.c.l.s8.bf16 %v2267
          %v2724 = vunpack.c.h.s8.bf16 %v2260
          %v2725 = vunpack.c.h.s8.bf16 %v2261
          %v2726 = vunpack.c.h.s8.bf16 %v2262
          %v2727 = vunpack.c.h.s8.bf16 %v2263
          %v2728 = vunpack.c.h.s8.bf16 %v2264
          %v2729 = vunpack.c.h.s8.bf16 %v2265
          %v2730 = vunpack.c.h.s8.bf16 %v2266
          %v2731 = vunpack.c.h.s8.bf16 %v2267
          %v2732 = vunpack.c.l.s8.bf16 %v2268
          %v2733 = vunpack.c.l.s8.bf16 %v2269
          %v2734 = vunpack.c.l.s8.bf16 %v2270
          %v2735 = vunpack.c.l.s8.bf16 %v2271
          %v2736 = vunpack.c.l.s8.bf16 %v2272
          %v2737 = vunpack.c.l.s8.bf16 %v2273
          %v2738 = vunpack.c.l.s8.bf16 %v2274
          %v2739 = vunpack.c.l.s8.bf16 %v2275
          %v2740 = vunpack.c.h.s8.bf16 %v2268
          %v2741 = vunpack.c.h.s8.bf16 %v2269
          %v2742 = vunpack.c.h.s8.bf16 %v2270
          %v2743 = vunpack.c.h.s8.bf16 %v2271
          %v2744 = vunpack.c.h.s8.bf16 %v2272
          %v2745 = vunpack.c.h.s8.bf16 %v2273
          %v2746 = vunpack.c.h.s8.bf16 %v2274
          %v2747 = vunpack.c.h.s8.bf16 %v2275
          %v2748 = vunpack.c.l.s8.bf16 %v2276
          %v2749 = vunpack.c.l.s8.bf16 %v2277
          %v2750 = vunpack.c.l.s8.bf16 %v2278
          %v2751 = vunpack.c.l.s8.bf16 %v2279
          %v2752 = vunpack.c.l.s8.bf16 %v2280
          %v2753 = vunpack.c.l.s8.bf16 %v2281
          %v2754 = vunpack.c.l.s8.bf16 %v2282
          %v2755 = vunpack.c.l.s8.bf16 %v2283
          %v2756 = vunpack.c.h.s8.bf16 %v2276
          %v2757 = vunpack.c.h.s8.bf16 %v2277
          %v2758 = vunpack.c.h.s8.bf16 %v2278
          %v2759 = vunpack.c.h.s8.bf16 %v2279
          %v2760 = vunpack.c.h.s8.bf16 %v2280
          %v2761 = vunpack.c.h.s8.bf16 %v2281
          %v2762 = vunpack.c.h.s8.bf16 %v2282
          %v2763 = vunpack.c.h.s8.bf16 %v2283
          %v2764 = vunpack.c.l.s8.bf16 %v2284
          %v2765 = vunpack.c.l.s8.bf16 %v2285
          %v2766 = vunpack.c.l.s8.bf16 %v2286
          %v2767 = vunpack.c.l.s8.bf16 %v2287
          %v2768 = vunpack.c.l.s8.bf16 %v2288
          %v2769 = vunpack.c.l.s8.bf16 %v2289
          %v2770 = vunpack.c.l.s8.bf16 %v2290
          %v2771 = vunpack.c.l.s8.bf16 %v2291
          %v2772 = vunpack.c.h.s8.bf16 %v2284
          %v2773 = vunpack.c.h.s8.bf16 %v2285
          %v2774 = vunpack.c.h.s8.bf16 %v2286
          %v2775 = vunpack.c.h.s8.bf16 %v2287
          %v2776 = vunpack.c.h.s8.bf16 %v2288
          %v2777 = vunpack.c.h.s8.bf16 %v2289
          %v2778 = vunpack.c.h.s8.bf16 %v2290
          %v2779 = vunpack.c.h.s8.bf16 %v2291
          %v2780 = vunpack.c.l.s8.bf16 %v2292
          %v2781 = vunpack.c.l.s8.bf16 %v2293
          %v2782 = vunpack.c.l.s8.bf16 %v2294
          %v2783 = vunpack.c.l.s8.bf16 %v2295
          %v2784 = vunpack.c.l.s8.bf16 %v2296
          %v2785 = vunpack.c.l.s8.bf16 %v2297
          %v2786 = vunpack.c.l.s8.bf16 %v2298
          %v2787 = vunpack.c.l.s8.bf16 %v2299
          %v2788 = vunpack.c.h.s8.bf16 %v2292
          %v2789 = vunpack.c.h.s8.bf16 %v2293
          %v2790 = vunpack.c.h.s8.bf16 %v2294
          %v2791 = vunpack.c.h.s8.bf16 %v2295
          %v2792 = vunpack.c.h.s8.bf16 %v2296
          %v2793 = vunpack.c.h.s8.bf16 %v2297
          %v2794 = vunpack.c.h.s8.bf16 %v2298
          %v2795 = vunpack.c.h.s8.bf16 %v2299
          %v2796 = vunpack.c.l.s8.bf16 %v2300
          %v2797 = vunpack.c.l.s8.bf16 %v2301
          %v2798 = vunpack.c.l.s8.bf16 %v2302
          %v2799 = vunpack.c.l.s8.bf16 %v2303
          %v2800 = vunpack.c.l.s8.bf16 %v2304
          %v2801 = vunpack.c.l.s8.bf16 %v2305
          %v2802 = vunpack.c.l.s8.bf16 %v2306
          %v2803 = vunpack.c.l.s8.bf16 %v2307
          %v2804 = vunpack.c.h.s8.bf16 %v2300
          %v2805 = vunpack.c.h.s8.bf16 %v2301
          %v2806 = vunpack.c.h.s8.bf16 %v2302
          %v2807 = vunpack.c.h.s8.bf16 %v2303
          %v2808 = vunpack.c.h.s8.bf16 %v2304
          %v2809 = vunpack.c.h.s8.bf16 %v2305
          %v2810 = vunpack.c.h.s8.bf16 %v2306
          %v2811 = vunpack.c.h.s8.bf16 %v2307
          %v2812 = vunpack.c.l.s8.bf16 %v2308
          %v2813 = vunpack.c.l.s8.bf16 %v2309
          %v2814 = vunpack.c.l.s8.bf16 %v2310
          %v2815 = vunpack.c.l.s8.bf16 %v2311
          %v2816 = vunpack.c.l.s8.bf16 %v2312
          %v2817 = vunpack.c.l.s8.bf16 %v2313
          %v2818 = vunpack.c.l.s8.bf16 %v2314
          %v2819 = vunpack.c.l.s8.bf16 %v2315
          %v2820 = vunpack.c.h.s8.bf16 %v2308
          %v2821 = vunpack.c.h.s8.bf16 %v2309
          %v2822 = vunpack.c.h.s8.bf16 %v2310
          %v2823 = vunpack.c.h.s8.bf16 %v2311
          %v2824 = vunpack.c.h.s8.bf16 %v2312
          %v2825 = vunpack.c.h.s8.bf16 %v2313
          %v2826 = vunpack.c.h.s8.bf16 %v2314
          %v2827 = vunpack.c.h.s8.bf16 %v2315
          %v2828 = vunpack.c.l.s8.bf16 %v2316
          %v2829 = vunpack.c.l.s8.bf16 %v2317
          %v2830 = vunpack.c.l.s8.bf16 %v2318
          %v2831 = vunpack.c.l.s8.bf16 %v2319
          %v2832 = vunpack.c.l.s8.bf16 %v2320
          %v2833 = vunpack.c.l.s8.bf16 %v2321
          %v2834 = vunpack.c.l.s8.bf16 %v2322
          %v2835 = vunpack.c.l.s8.bf16 %v2323
          %v2836 = vunpack.c.h.s8.bf16 %v2316
          %v2837 = vunpack.c.h.s8.bf16 %v2317
          %v2838 = vunpack.c.h.s8.bf16 %v2318
          %v2839 = vunpack.c.h.s8.bf16 %v2319
          %v2840 = vunpack.c.h.s8.bf16 %v2320
          %v2841 = vunpack.c.h.s8.bf16 %v2321
          %v2842 = vunpack.c.h.s8.bf16 %v2322
          %v2843 = vunpack.c.h.s8.bf16 %v2323
          %v2844 = vunpack.c.l.s8.bf16 %v2324
          %v2845 = vunpack.c.l.s8.bf16 %v2325
          %v2846 = vunpack.c.l.s8.bf16 %v2326
          %v2847 = vunpack.c.l.s8.bf16 %v2327
          %v2848 = vunpack.c.l.s8.bf16 %v2328
          %v2849 = vunpack.c.l.s8.bf16 %v2329
          %v2850 = vunpack.c.l.s8.bf16 %v2330
          %v2851 = vunpack.c.l.s8.bf16 %v2331
          %v2852 = vunpack.c.h.s8.bf16 %v2324
          %v2853 = vunpack.c.h.s8.bf16 %v2325
          %v2854 = vunpack.c.h.s8.bf16 %v2326
          %v2855 = vunpack.c.h.s8.bf16 %v2327
          %v2856 = vunpack.c.h.s8.bf16 %v2328
          %v2857 = vunpack.c.h.s8.bf16 %v2329
          %v2858 = vunpack.c.h.s8.bf16 %v2330
          %v2859 = vunpack.c.h.s8.bf16 %v2331
          %v2860 = vunpack.c.l.s8.bf16 %v2332
          %v2861 = vunpack.c.l.s8.bf16 %v2333
          %v2862 = vunpack.c.l.s8.bf16 %v2334
          %v2863 = vunpack.c.l.s8.bf16 %v2335
          %v2864 = vunpack.c.l.s8.bf16 %v2336
          %v2865 = vunpack.c.l.s8.bf16 %v2337
          %v2866 = vunpack.c.l.s8.bf16 %v2338
          %v2867 = vunpack.c.l.s8.bf16 %v2339
          %v2868 = vunpack.c.h.s8.bf16 %v2332
          %v2869 = vunpack.c.h.s8.bf16 %v2333
          %v2870 = vunpack.c.h.s8.bf16 %v2334
          %v2871 = vunpack.c.h.s8.bf16 %v2335
          %v2872 = vunpack.c.h.s8.bf16 %v2336
          %v2873 = vunpack.c.h.s8.bf16 %v2337
          %v2874 = vunpack.c.h.s8.bf16 %v2338
          %v2875 = vunpack.c.h.s8.bf16 %v2339
          %v2876 = vunpack.c.l.s8.bf16 %v2340
          %v2877 = vunpack.c.l.s8.bf16 %v2341
          %v2878 = vunpack.c.l.s8.bf16 %v2342
          %v2879 = vunpack.c.l.s8.bf16 %v2343
          %v2880 = vunpack.c.l.s8.bf16 %v2344
          %v2881 = vunpack.c.l.s8.bf16 %v2345
          %v2882 = vunpack.c.l.s8.bf16 %v2346
          %v2883 = vunpack.c.l.s8.bf16 %v2347
          %v2884 = vunpack.c.h.s8.bf16 %v2340
          %v2885 = vunpack.c.h.s8.bf16 %v2341
          %v2886 = vunpack.c.h.s8.bf16 %v2342
          %v2887 = vunpack.c.h.s8.bf16 %v2343
          %v2888 = vunpack.c.h.s8.bf16 %v2344
          %v2889 = vunpack.c.h.s8.bf16 %v2345
          %v2890 = vunpack.c.h.s8.bf16 %v2346
          %v2891 = vunpack.c.h.s8.bf16 %v2347
          %v2892 = vunpack.c.l.s8.bf16 %v2348
          %v2893 = vunpack.c.l.s8.bf16 %v2349
          %v2894 = vunpack.c.l.s8.bf16 %v2350
          %v2895 = vunpack.c.l.s8.bf16 %v2351
          %v2896 = vunpack.c.l.s8.bf16 %v2352
          %v2897 = vunpack.c.l.s8.bf16 %v2353
          %v2898 = vunpack.c.l.s8.bf16 %v2354
          %v2899 = vunpack.c.l.s8.bf16 %v2355
          %v2900 = vunpack.c.h.s8.bf16 %v2348
          %v2901 = vunpack.c.h.s8.bf16 %v2349
          %v2902 = vunpack.c.h.s8.bf16 %v2350
          %v2903 = vunpack.c.h.s8.bf16 %v2351
          %v2904 = vunpack.c.h.s8.bf16 %v2352
          %v2905 = vunpack.c.h.s8.bf16 %v2353
          %v2906 = vunpack.c.h.s8.bf16 %v2354
          %v2907 = vunpack.c.h.s8.bf16 %v2355
          %v2908 = vunpack.c.l.s8.bf16 %v2356
          %v2909 = vunpack.c.l.s8.bf16 %v2357
          %v2910 = vunpack.c.l.s8.bf16 %v2358
          %v2911 = vunpack.c.l.s8.bf16 %v2359
          %v2912 = vunpack.c.l.s8.bf16 %v2360
          %v2913 = vunpack.c.l.s8.bf16 %v2361
          %v2914 = vunpack.c.l.s8.bf16 %v2362
          %v2915 = vunpack.c.l.s8.bf16 %v2363
          %v2916 = vunpack.c.h.s8.bf16 %v2356
          %v2917 = vunpack.c.h.s8.bf16 %v2357
          %v2918 = vunpack.c.h.s8.bf16 %v2358
          %v2919 = vunpack.c.h.s8.bf16 %v2359
          %v2920 = vunpack.c.h.s8.bf16 %v2360
          %v2921 = vunpack.c.h.s8.bf16 %v2361
          %v2922 = vunpack.c.h.s8.bf16 %v2362
          %v2923 = vunpack.c.h.s8.bf16 %v2363
          %v2924 = vunpack.c.l.s8.bf16 %v2364
          %v2925 = vunpack.c.l.s8.bf16 %v2365
          %v2926 = vunpack.c.l.s8.bf16 %v2366
          %v2927 = vunpack.c.l.s8.bf16 %v2367
          %v2928 = vunpack.c.l.s8.bf16 %v2368
          %v2929 = vunpack.c.l.s8.bf16 %v2369
          %v2930 = vunpack.c.l.s8.bf16 %v2370
          %v2931 = vunpack.c.l.s8.bf16 %v2371
          %v2932 = vunpack.c.h.s8.bf16 %v2364
          %v2933 = vunpack.c.h.s8.bf16 %v2365
          %v2934 = vunpack.c.h.s8.bf16 %v2366
          %v2935 = vunpack.c.h.s8.bf16 %v2367
          %v2936 = vunpack.c.h.s8.bf16 %v2368
          %v2937 = vunpack.c.h.s8.bf16 %v2369
          %v2938 = vunpack.c.h.s8.bf16 %v2370
          %v2939 = vunpack.c.h.s8.bf16 %v2371
          %v2940 = vunpack.c.l.s8.bf16 %v2372
          %v2941 = vunpack.c.l.s8.bf16 %v2373
          %v2942 = vunpack.c.l.s8.bf16 %v2374
          %v2943 = vunpack.c.l.s8.bf16 %v2375
          %v2944 = vunpack.c.l.s8.bf16 %v2376
          %v2945 = vunpack.c.l.s8.bf16 %v2377
          %v2946 = vunpack.c.l.s8.bf16 %v2378
          %v2947 = vunpack.c.l.s8.bf16 %v2379
          %v2948 = vunpack.c.h.s8.bf16 %v2372
          %v2949 = vunpack.c.h.s8.bf16 %v2373
          %v2950 = vunpack.c.h.s8.bf16 %v2374
          %v2951 = vunpack.c.h.s8.bf16 %v2375
          %v2952 = vunpack.c.h.s8.bf16 %v2376
          %v2953 = vunpack.c.h.s8.bf16 %v2377
          %v2954 = vunpack.c.h.s8.bf16 %v2378
          %v2955 = vunpack.c.h.s8.bf16 %v2379
          %s2956 = sshra.s32 %s2086, 7
          %s2957 = sand.u32 %s2086, 127
          %s2958 = scalar_lea.vmem [#allocation2], %s2956
          %v2959 = vld [vmem:[%s2958] sm:$0xff]
          %v2960 = vld [vmem:[%s2958 + $0x8] sm:$0x1]
          %v2963 = vcombine.high %v2959, %v2959
          %v2965 = vunpack.c.l.s4 1966171168
          %v2966 = vunpack.c.0.s8 %v2965
          %v2967 = vlaneseq
          %v2968 = vshrl.u32 %v2967, 7
          %v2969 = vsub.s32 %v2966, %v2968
          %v2970 = vrot.slane %v2959, %v2969
          %v2972 = vunpack.c.l.s4 1966171168
          %v2973 = vunpack.c.0.s8 %v2972
          %v2974 = vlaneseq
          %v2975 = vshrl.u32 %v2974, 7
          %v2976 = vsub.s32 %v2973, %v2975
          %v2977 = vrot.slane %v2963, %v2976
          %v2978 = vcombine.high %v2970, %v2970
          %v2979 = vcombine.high %v2977, %v2977
          %v2981 = vunpack.c.l.s4 1966171168
          %v2982 = vunpack.c.0.s8 %v2981
          %v2983 = vlaneseq
          %v2984 = vshrl.u32 %v2983, 7
          %v2985 = vsub.s32 %v2982, %v2984
          %v2986 = vrot.slane %v2970, %v2985
          %v2988 = vunpack.c.l.s4 1966171168
          %v2989 = vunpack.c.0.s8 %v2988
          %v2990 = vlaneseq
          %v2991 = vshrl.u32 %v2990, 7
          %v2992 = vsub.s32 %v2989, %v2991
          %v2993 = vrot.slane %v2977, %v2992
          %v2995 = vunpack.c.l.s4 1966171168
          %v2996 = vunpack.c.0.s8 %v2995
          %v2997 = vlaneseq
          %v2998 = vshrl.u32 %v2997, 7
          %v2999 = vsub.s32 %v2996, %v2998
          %v3000 = vrot.slane %v2978, %v2999
          %v3002 = vunpack.c.l.s4 1966171168
          %v3003 = vunpack.c.0.s8 %v3002
          %v3004 = vlaneseq
          %v3005 = vshrl.u32 %v3004, 7
          %v3006 = vsub.s32 %v3003, %v3005
          %v3007 = vrot.slane %v2979, %v3006
          %v3008 = vcombine.high %v2986, %v2986
          %v3009 = vcombine.high %v2993, %v2993
          %v3010 = vcombine.high %v3000, %v3000
          %v3011 = vcombine.high %v3007, %v3007
          %v3013 = vunpack.c.l.s4 1966171168
          %v3014 = vunpack.c.0.s8 %v3013
          %v3015 = vlaneseq
          %v3016 = vshrl.u32 %v3015, 7
          %v3017 = vsub.s32 %v3014, %v3016
          %v3018 = vrot.slane %v2960, %v3017
          %v3020 = vunpack.c.l.s4 1966171168
          %v3021 = vunpack.c.0.s8 %v3020
          %v3022 = vlaneseq
          %v3023 = vshrl.u32 %v3022, 7
          %v3024 = vsub.s32 %v3021, %v3023
          %v3025 = vrot.slane %v3018, %v3024
          %3035 = vmatprep.subr.bf16.mxu0 %v2437
          %3036 = vmatpush1.bf16.msra.mxu0 %v2436
          %3037 = vmatprep.subr.bf16.mxu0 %v2429
          %3038 = vmatpush1.bf16.msra.mxu0 %v2428
          %3039 = vmatprep.subr.bf16.mxu0 %v2421
          %3040 = vmatpush1.bf16.msra.mxu0 %v2420
          %3041 = vmatprep.subr.bf16.mxu0 %v2413
          %3042 = vmatpush1.bf16.msra.mxu0 %v2412
          %3043 = vmatprep.subr.bf16.mxu0 %v2405
          %3044 = vmatpush1.bf16.msra.mxu0 %v2404
          %3045 = vmatprep.subr.bf16.mxu0 %v2397
          %3046 = vmatpush1.bf16.msra.mxu0 %v2396
          %3047 = vmatprep.subr.bf16.mxu0 %v2389
          %3048 = vmatpush1.bf16.msra.mxu0 %v2388
          %3049 = vmatprep.subr.bf16.mxu0 %v2381
          %3050 = vmatpush1.bf16.msra.mxu0 %v2380
          %3051 = vmatprep.subr.bf16.mxu0 %v2501
          %3052 = vmatpush2.bf16.msra.mxu0 %v2500
          %3053 = vmatprep.subr.bf16.mxu0 %v2493
          %3054 = vmatpush2.bf16.msra.mxu0 %v2492
          %3055 = vmatprep.subr.bf16.mxu0 %v2485
          %3056 = vmatpush2.bf16.msra.mxu0 %v2484
          %3057 = vmatprep.subr.bf16.mxu0 %v2477
          %3058 = vmatpush2.bf16.msra.mxu0 %v2476
          %3059 = vmatprep.subr.bf16.mxu0 %v2469
          %3060 = vmatpush2.bf16.msra.mxu0 %v2468
          %3061 = vmatprep.subr.bf16.mxu0 %v2461
          %3062 = vmatpush2.bf16.msra.mxu0 %v2460
          %3063 = vmatprep.subr.bf16.mxu0 %v2453
          %3064 = vmatpush2.bf16.msra.mxu0 %v2452
          %3065 = vmatprep.subr.bf16.mxu0 %v2445
          %3066 = vmatpush2.bf16.msra.mxu0 %v2444
          %3067 = vmatprep.mubr.bf16.mxu0 %v3000
          %3068 = vmatmul.mubr.bf16.gmra.mxu0 %v2986
          %v3069 = vpop.f32.mrf.mxu0
          %v3070 = vadd.f32 0.0, %v3069
          %v3071 = vpop.f32.mrf.mxu0
          %v3072 = vadd.f32 0.0, %v3071
          %v3073 = vpop.f32.mrf.mxu0
          %v3074 = vpop.f32.mrf.mxu0
          %3075 = vdwg.mxu0
          %3076 = vmatprep.subr.bf16.mxu0 %v2565
          %3077 = vmatpush1.bf16.msra.mxu0 %v2564
          %3078 = vmatprep.subr.bf16.mxu0 %v2557
          %3079 = vmatpush1.bf16.msra.mxu0 %v2556
          %3080 = vmatprep.subr.bf16.mxu0 %v2549
          %3081 = vmatpush1.bf16.msra.mxu0 %v2548
          %3082 = vmatprep.subr.bf16.mxu0 %v2541
          %3083 = vmatpush1.bf16.msra.mxu0 %v2540
          %3084 = vmatprep.subr.bf16.mxu0 %v2533
          %3085 = vmatpush1.bf16.msra.mxu0 %v2532
          %3086 = vmatprep.subr.bf16.mxu0 %v2525
          %3087 = vmatpush1.bf16.msra.mxu0 %v2524
          %3088 = vmatprep.subr.bf16.mxu0 %v2517
          %3089 = vmatpush1.bf16.msra.mxu0 %v2516
          %3090 = vmatprep.subr.bf16.mxu0 %v2509
          %3091 = vmatpush1.bf16.msra.mxu0 %v2508
          %3092 = vmatprep.subr.bf16.mxu0 %v2629
          %3093 = vmatpush2.bf16.msra.mxu0 %v2628
          %3094 = vmatprep.subr.bf16.mxu0 %v2621
          %3095 = vmatpush2.bf16.msra.mxu0 %v2620
          %3096 = vmatprep.subr.bf16.mxu0 %v2613
          %3097 = vmatpush2.bf16.msra.mxu0 %v2612
          %3098 = vmatprep.subr.bf16.mxu0 %v2605
          %3099 = vmatpush2.bf16.msra.mxu0 %v2604
          %3100 = vmatprep.subr.bf16.mxu0 %v2597
          %3101 = vmatpush2.bf16.msra.mxu0 %v2596
          %3102 = vmatprep.subr.bf16.mxu0 %v2589
          %3103 = vmatpush2.bf16.msra.mxu0 %v2588
          %3104 = vmatprep.subr.bf16.mxu0 %v2581
          %3105 = vmatpush2.bf16.msra.mxu0 %v2580
          %3106 = vmatprep.subr.bf16.mxu0 %v2573
          %3107 = vmatpush2.bf16.msra.mxu0 %v2572
          %3108 = vmatprep.mubr.bf16.mxu0 %v3010
          %3109 = vmatmul.mubr.bf16.gmra.mxu0 %v3008
          %v3110 = vpop.f32.mrf.mxu0
          %v3111 = vadd.f32 %v3070, %v3110
          %v3112 = vpop.f32.mrf.mxu0
          %v3113 = vadd.f32 %v3072, %v3112
          %v3114 = vpop.f32.mrf.mxu0
          %v3115 = vpop.f32.mrf.mxu0
          %3116 = vdwg.mxu0
          %3117 = vmatprep.subr.bf16.mxu0 %v2693
          %3118 = vmatpush1.bf16.msra.mxu0 %v2692
          %3119 = vmatprep.subr.bf16.mxu0 %v2685
          %3120 = vmatpush1.bf16.msra.mxu0 %v2684
          %3121 = vmatprep.subr.bf16.mxu0 %v2677
          %3122 = vmatpush1.bf16.msra.mxu0 %v2676
          %3123 = vmatprep.subr.bf16.mxu0 %v2669
          %3124 = vmatpush1.bf16.msra.mxu0 %v2668
          %3125 = vmatprep.subr.bf16.mxu0 %v2661
          %3126 = vmatpush1.bf16.msra.mxu0 %v2660
          %3127 = vmatprep.subr.bf16.mxu0 %v2653
          %3128 = vmatpush1.bf16.msra.mxu0 %v2652
          %3129 = vmatprep.subr.bf16.mxu0 %v2645
          %3130 = vmatpush1.bf16.msra.mxu0 %v2644
          %3131 = vmatprep.subr.bf16.mxu0 %v2637
          %3132 = vmatpush1.bf16.msra.mxu0 %v2636
          %3133 = vmatprep.subr.bf16.mxu0 %v2757
          %3134 = vmatpush2.bf16.msra.mxu0 %v2756
          %3135 = vmatprep.subr.bf16.mxu0 %v2749
          %3136 = vmatpush2.bf16.msra.mxu0 %v2748
          %3137 = vmatprep.subr.bf16.mxu0 %v2741
          %3138 = vmatpush2.bf16.msra.mxu0 %v2740
          %3139 = vmatprep.subr.bf16.mxu0 %v2733
          %3140 = vmatpush2.bf16.msra.mxu0 %v2732
          %3141 = vmatprep.subr.bf16.mxu0 %v2725
          %3142 = vmatpush2.bf16.msra.mxu0 %v2724
          %3143 = vmatprep.subr.bf16.mxu0 %v2717
          %3144 = vmatpush2.bf16.msra.mxu0 %v2716
          %3145 = vmatprep.subr.bf16.mxu0 %v2709
          %3146 = vmatpush2.bf16.msra.mxu0 %v2708
          %3147 = vmatprep.subr.bf16.mxu0 %v2701
          %3148 = vmatpush2.bf16.msra.mxu0 %v2700
          %3149 = vmatprep.mubr.bf16.mxu0 %v3007
          %3150 = vmatmul.mubr.bf16.gmra.mxu0 %v2993
          %v3151 = vpop.f32.mrf.mxu0
          %v3152 = vadd.f32 %v3111, %v3151
          %v3153 = vpop.f32.mrf.mxu0
          %v3154 = vadd.f32 %v3113, %v3153
          %v3155 = vpop.f32.mrf.mxu0
          %v3156 = vpop.f32.mrf.mxu0
          %3157 = vdwg.mxu0
          %3158 = vmatprep.subr.bf16.mxu0 %v2821
          %3159 = vmatpush1.bf16.msra.mxu0 %v2820
          %3160 = vmatprep.subr.bf16.mxu0 %v2813
          %3161 = vmatpush1.bf16.msra.mxu0 %v2812
          %3162 = vmatprep.subr.bf16.mxu0 %v2805
          %3163 = vmatpush1.bf16.msra.mxu0 %v2804
          %3164 = vmatprep.subr.bf16.mxu0 %v2797
          %3165 = vmatpush1.bf16.msra.mxu0 %v2796
          %3166 = vmatprep.subr.bf16.mxu0 %v2789
          %3167 = vmatpush1.bf16.msra.mxu0 %v2788
          %3168 = vmatprep.subr.bf16.mxu0 %v2781
          %3169 = vmatpush1.bf16.msra.mxu0 %v2780
          %3170 = vmatprep.subr.bf16.mxu0 %v2773
          %3171 = vmatpush1.bf16.msra.mxu0 %v2772
          %3172 = vmatprep.subr.bf16.mxu0 %v2765
          %3173 = vmatpush1.bf16.msra.mxu0 %v2764
          %3174 = vmatprep.subr.bf16.mxu0 %v2885
          %3175 = vmatpush2.bf16.msra.mxu0 %v2884
          %3176 = vmatprep.subr.bf16.mxu0 %v2877
          %3177 = vmatpush2.bf16.msra.mxu0 %v2876
          %3178 = vmatprep.subr.bf16.mxu0 %v2869
          %3179 = vmatpush2.bf16.msra.mxu0 %v2868
          %3180 = vmatprep.subr.bf16.mxu0 %v2861
          %3181 = vmatpush2.bf16.msra.mxu0 %v2860
          %3182 = vmatprep.subr.bf16.mxu0 %v2853
          %3183 = vmatpush2.bf16.msra.mxu0 %v2852
          %3184 = vmatprep.subr.bf16.mxu0 %v2845
          %3185 = vmatpush2.bf16.msra.mxu0 %v2844
          %3186 = vmatprep.subr.bf16.mxu0 %v2837
          %3187 = vmatpush2.bf16.msra.mxu0 %v2836
          %3188 = vmatprep.subr.bf16.mxu0 %v2829
          %3189 = vmatpush2.bf16.msra.mxu0 %v2828
          %3190 = vmatprep.mubr.bf16.mxu0 %v3011
          %3191 = vmatmul.mubr.bf16.gmra.mxu0 %v3009
          %v3192 = vpop.f32.mrf.mxu0
          %v3193 = vadd.f32 %v3152, %v3192
          %v3194 = vpop.f32.mrf.mxu0
          %v3195 = vadd.f32 %v3154, %v3194
          %v3196 = vpop.f32.mrf.mxu0
          %v3197 = vpop.f32.mrf.mxu0
          %3198 = vdwg.mxu0
          %3199 = vmatprep.subr.bf16.mxu0 %v2949
          %3200 = vmatpush1.bf16.msra.mxu0 %v2948
          %3201 = vmatprep.subr.bf16.mxu0 %v2941
          %3202 = vmatpush1.bf16.msra.mxu0 %v2940
          %3203 = vmatprep.subr.bf16.mxu0 %v2933
          %3204 = vmatpush1.bf16.msra.mxu0 %v2932
          %3205 = vmatprep.subr.bf16.mxu0 %v2925
          %3206 = vmatpush1.bf16.msra.mxu0 %v2924
          %3207 = vmatprep.subr.bf16.mxu0 %v2917
          %3208 = vmatpush1.bf16.msra.mxu0 %v2916
          %3209 = vmatprep.subr.bf16.mxu0 %v2909
          %3210 = vmatpush1.bf16.msra.mxu0 %v2908
          %3211 = vmatprep.subr.bf16.mxu0 %v2901
          %3212 = vmatpush1.bf16.msra.mxu0 %v2900
          %3213 = vmatprep.subr.bf16.mxu0 %v2893
          %3214 = vmatpush1.bf16.msra.mxu0 %v2892
          %3215 = vmatprep.subr.bf16.mxu0 0
          %3216 = vmatpush2.bf16.msra.mxu0 0
          %3217 = vmatprep.subr.bf16.mxu0 0
          %3218 = vmatpush2.bf16.msra.mxu0 0
          %3219 = vmatprep.subr.bf16.mxu0 0
          %3220 = vmatpush2.bf16.msra.mxu0 0
          %3221 = vmatprep.subr.bf16.mxu0 0
          %3222 = vmatpush2.bf16.msra.mxu0 0
          %3223 = vmatprep.subr.bf16.mxu0 0
          %3224 = vmatpush2.bf16.msra.mxu0 0
          %3225 = vmatprep.subr.bf16.mxu0 0
          %3226 = vmatpush2.bf16.msra.mxu0 0
          %3227 = vmatprep.subr.bf16.mxu0 0
          %3228 = vmatpush2.bf16.msra.mxu0 0
          %3229 = vmatprep.subr.bf16.mxu0 0
          %3230 = vmatpush2.bf16.msra.mxu0 0
          %3231 = vmatprep.mubr.bf16.mxu0 0
          %3232 = vmatmul.mubr.bf16.gmra.mxu0 %v3025
          %v3233 = vpop.f32.mrf.mxu0
          %v3234 = vadd.f32 %v3193, %v3233
          %v3235 = vpop.f32.mrf.mxu0
          %v3236 = vadd.f32 %v3195, %v3235
          %v3237 = vpop.f32.mrf.mxu0
          %v3238 = vpop.f32.mrf.mxu0
          %3239 = vdwg.mxu0
          %3240 = vmatprep.subr.bf16.mxu0 %v2439
          %3241 = vmatpush1.bf16.msra.mxu0 %v2438
          %3242 = vmatprep.subr.bf16.mxu0 %v2431
          %3243 = vmatpush1.bf16.msra.mxu0 %v2430
          %3244 = vmatprep.subr.bf16.mxu0 %v2423
          %3245 = vmatpush1.bf16.msra.mxu0 %v2422
          %3246 = vmatprep.subr.bf16.mxu0 %v2415
          %3247 = vmatpush1.bf16.msra.mxu0 %v2414
          %3248 = vmatprep.subr.bf16.mxu0 %v2407
          %3249 = vmatpush1.bf16.msra.mxu0 %v2406
          %3250 = vmatprep.subr.bf16.mxu0 %v2399
          %3251 = vmatpush1.bf16.msra.mxu0 %v2398
          %3252 = vmatprep.subr.bf16.mxu0 %v2391
          %3253 = vmatpush1.bf16.msra.mxu0 %v2390
          %3254 = vmatprep.subr.bf16.mxu0 %v2383
          %3255 = vmatpush1.bf16.msra.mxu0 %v2382
          %3256 = vmatprep.subr.bf16.mxu0 %v2503
          %3257 = vmatpush2.bf16.msra.mxu0 %v2502
          %3258 = vmatprep.subr.bf16.mxu0 %v2495
          %3259 = vmatpush2.bf16.msra.mxu0 %v2494
          %3260 = vmatprep.subr.bf16.mxu0 %v2487
          %3261 = vmatpush2.bf16.msra.mxu0 %v2486
          %3262 = vmatprep.subr.bf16.mxu0 %v2479
          %3263 = vmatpush2.bf16.msra.mxu0 %v2478
          %3264 = vmatprep.subr.bf16.mxu0 %v2471
          %3265 = vmatpush2.bf16.msra.mxu0 %v2470
          %3266 = vmatprep.subr.bf16.mxu0 %v2463
          %3267 = vmatpush2.bf16.msra.mxu0 %v2462
          %3268 = vmatprep.subr.bf16.mxu0 %v2455
          %3269 = vmatpush2.bf16.msra.mxu0 %v2454
          %3270 = vmatprep.subr.bf16.mxu0 %v2447
          %3271 = vmatpush2.bf16.msra.mxu0 %v2446
          %3272 = vmatprep.mubr.bf16.mxu0 %v3000
          %3273 = vmatmul.mubr.bf16.gmra.mxu0 %v2986
          %v3274 = vpop.f32.mrf.mxu0
          %v3275 = vadd.f32 0.0, %v3274
          %v3276 = vpop.f32.mrf.mxu0
          %v3277 = vadd.f32 0.0, %v3276
          %v3278 = vpop.f32.mrf.mxu0
          %v3279 = vpop.f32.mrf.mxu0
          %3280 = vdwg.mxu0
          %3281 = vmatprep.subr.bf16.mxu0 %v2567
          %3282 = vmatpush1.bf16.msra.mxu0 %v2566
          %3283 = vmatprep.subr.bf16.mxu0 %v2559
          %3284 = vmatpush1.bf16.msra.mxu0 %v2558
          %3285 = vmatprep.subr.bf16.mxu0 %v2551
          %3286 = vmatpush1.bf16.msra.mxu0 %v2550
          %3287 = vmatprep.subr.bf16.mxu0 %v2543
          %3288 = vmatpush1.bf16.msra.mxu0 %v2542
          %3289 = vmatprep.subr.bf16.mxu0 %v2535
          %3290 = vmatpush1.bf16.msra.mxu0 %v2534
          %3291 = vmatprep.subr.bf16.mxu0 %v2527
          %3292 = vmatpush1.bf16.msra.mxu0 %v2526
          %3293 = vmatprep.subr.bf16.mxu0 %v2519
          %3294 = vmatpush1.bf16.msra.mxu0 %v2518
          %3295 = vmatprep.subr.bf16.mxu0 %v2511
          %3296 = vmatpush1.bf16.msra.mxu0 %v2510
          %3297 = vmatprep.subr.bf16.mxu0 %v2631
          %3298 = vmatpush2.bf16.msra.mxu0 %v2630
          %3299 = vmatprep.subr.bf16.mxu0 %v2623
          %3300 = vmatpush2.bf16.msra.mxu0 %v2622
          %3301 = vmatprep.subr.bf16.mxu0 %v2615
          %3302 = vmatpush2.bf16.msra.mxu0 %v2614
          %3303 = vmatprep.subr.bf16.mxu0 %v2607
          %3304 = vmatpush2.bf16.msra.mxu0 %v2606
          %3305 = vmatprep.subr.bf16.mxu0 %v2599
          %3306 = vmatpush2.bf16.msra.mxu0 %v2598
          %3307 = vmatprep.subr.bf16.mxu0 %v2591
          %3308 = vmatpush2.bf16.msra.mxu0 %v2590
          %3309 = vmatprep.subr.bf16.mxu0 %v2583
          %3310 = vmatpush2.bf16.msra.mxu0 %v2582
          %3311 = vmatprep.subr.bf16.mxu0 %v2575
          %3312 = vmatpush2.bf16.msra.mxu0 %v2574
          %3313 = vmatprep.mubr.bf16.mxu0 %v3010
          %3314 = vmatmul.mubr.bf16.gmra.mxu0 %v3008
          %v3315 = vpop.f32.mrf.mxu0
          %v3316 = vadd.f32 %v3275, %v3315
          %v3317 = vpop.f32.mrf.mxu0
          %v3318 = vadd.f32 %v3277, %v3317
          %v3319 = vpop.f32.mrf.mxu0
          %v3320 = vpop.f32.mrf.mxu0
          %3321 = vdwg.mxu0
          %3322 = vmatprep.subr.bf16.mxu0 %v2695
          %3323 = vmatpush1.bf16.msra.mxu0 %v2694
          %3324 = vmatprep.subr.bf16.mxu0 %v2687
          %3325 = vmatpush1.bf16.msra.mxu0 %v2686
          %3326 = vmatprep.subr.bf16.mxu0 %v2679
          %3327 = vmatpush1.bf16.msra.mxu0 %v2678
          %3328 = vmatprep.subr.bf16.mxu0 %v2671
          %3329 = vmatpush1.bf16.msra.mxu0 %v2670
          %3330 = vmatprep.subr.bf16.mxu0 %v2663
          %3331 = vmatpush1.bf16.msra.mxu0 %v2662
          %3332 = vmatprep.subr.bf16.mxu0 %v2655
          %3333 = vmatpush1.bf16.msra.mxu0 %v2654
          %3334 = vmatprep.subr.bf16.mxu0 %v2647
          %3335 = vmatpush1.bf16.msra.mxu0 %v2646
          %3336 = vmatprep.subr.bf16.mxu0 %v2639
          %3337 = vmatpush1.bf16.msra.mxu0 %v2638
          %3338 = vmatprep.subr.bf16.mxu0 %v2759
          %3339 = vmatpush2.bf16.msra.mxu0 %v2758
          %3340 = vmatprep.subr.bf16.mxu0 %v2751
          %3341 = vmatpush2.bf16.msra.mxu0 %v2750
          %3342 = vmatprep.subr.bf16.mxu0 %v2743
          %3343 = vmatpush2.bf16.msra.mxu0 %v2742
          %3344 = vmatprep.subr.bf16.mxu0 %v2735
          %3345 = vmatpush2.bf16.msra.mxu0 %v2734
          %3346 = vmatprep.subr.bf16.mxu0 %v2727
          %3347 = vmatpush2.bf16.msra.mxu0 %v2726
          %3348 = vmatprep.subr.bf16.mxu0 %v2719
          %3349 = vmatpush2.bf16.msra.mxu0 %v2718
          %3350 = vmatprep.subr.bf16.mxu0 %v2711
          %3351 = vmatpush2.bf16.msra.mxu0 %v2710
          %3352 = vmatprep.subr.bf16.mxu0 %v2703
          %3353 = vmatpush2.bf16.msra.mxu0 %v2702
          %3354 = vmatprep.mubr.bf16.mxu0 %v3007
          %3355 = vmatmul.mubr.bf16.gmra.mxu0 %v2993
          %v3356 = vpop.f32.mrf.mxu0
          %v3357 = vadd.f32 %v3316, %v3356
          %v3358 = vpop.f32.mrf.mxu0
          %v3359 = vadd.f32 %v3318, %v3358
          %v3360 = vpop.f32.mrf.mxu0
          %v3361 = vpop.f32.mrf.mxu0
          %3362 = vdwg.mxu0
          %3363 = vmatprep.subr.bf16.mxu0 %v2823
          %3364 = vmatpush1.bf16.msra.mxu0 %v2822
          %3365 = vmatprep.subr.bf16.mxu0 %v2815
          %3366 = vmatpush1.bf16.msra.mxu0 %v2814
          %3367 = vmatprep.subr.bf16.mxu0 %v2807
          %3368 = vmatpush1.bf16.msra.mxu0 %v2806
          %3369 = vmatprep.subr.bf16.mxu0 %v2799
          %3370 = vmatpush1.bf16.msra.mxu0 %v2798
          %3371 = vmatprep.subr.bf16.mxu0 %v2791
          %3372 = vmatpush1.bf16.msra.mxu0 %v2790
          %3373 = vmatprep.subr.bf16.mxu0 %v2783
          %3374 = vmatpush1.bf16.msra.mxu0 %v2782
          %3375 = vmatprep.subr.bf16.mxu0 %v2775
          %3376 = vmatpush1.bf16.msra.mxu0 %v2774
          %3377 = vmatprep.subr.bf16.mxu0 %v2767
          %3378 = vmatpush1.bf16.msra.mxu0 %v2766
          %3379 = vmatprep.subr.bf16.mxu0 %v2887
          %3380 = vmatpush2.bf16.msra.mxu0 %v2886
          %3381 = vmatprep.subr.bf16.mxu0 %v2879
          %3382 = vmatpush2.bf16.msra.mxu0 %v2878
          %3383 = vmatprep.subr.bf16.mxu0 %v2871
          %3384 = vmatpush2.bf16.msra.mxu0 %v2870
          %3385 = vmatprep.subr.bf16.mxu0 %v2863
          %3386 = vmatpush2.bf16.msra.mxu0 %v2862
          %3387 = vmatprep.subr.bf16.mxu0 %v2855
          %3388 = vmatpush2.bf16.msra.mxu0 %v2854
          %3389 = vmatprep.subr.bf16.mxu0 %v2847
          %3390 = vmatpush2.bf16.msra.mxu0 %v2846
          %3391 = vmatprep.subr.bf16.mxu0 %v2839
          %3392 = vmatpush2.bf16.msra.mxu0 %v2838
          %3393 = vmatprep.subr.bf16.mxu0 %v2831
          %3394 = vmatpush2.bf16.msra.mxu0 %v2830
          %3395 = vmatprep.mubr.bf16.mxu0 %v3011
          %3396 = vmatmul.mubr.bf16.gmra.mxu0 %v3009
          %v3397 = vpop.f32.mrf.mxu0
          %v3398 = vadd.f32 %v3357, %v3397
          %v3399 = vpop.f32.mrf.mxu0
          %v3400 = vadd.f32 %v3359, %v3399
          %v3401 = vpop.f32.mrf.mxu0
          %v3402 = vpop.f32.mrf.mxu0
          %3403 = vdwg.mxu0
          %3404 = vmatprep.subr.bf16.mxu0 %v2951
          %3405 = vmatpush1.bf16.msra.mxu0 %v2950
          %3406 = vmatprep.subr.bf16.mxu0 %v2943
          %3407 = vmatpush1.bf16.msra.mxu0 %v2942
          %3408 = vmatprep.subr.bf16.mxu0 %v2935
          %3409 = vmatpush1.bf16.msra.mxu0 %v2934
          %3410 = vmatprep.subr.bf16.mxu0 %v2927
          %3411 = vmatpush1.bf16.msra.mxu0 %v2926
          %3412 = vmatprep.subr.bf16.mxu0 %v2919
          %3413 = vmatpush1.bf16.msra.mxu0 %v2918
          %3414 = vmatprep.subr.bf16.mxu0 %v2911
          %3415 = vmatpush1.bf16.msra.mxu0 %v2910
          %3416 = vmatprep.subr.bf16.mxu0 %v2903
          %3417 = vmatpush1.bf16.msra.mxu0 %v2902
          %3418 = vmatprep.subr.bf16.mxu0 %v2895
          %3419 = vmatpush1.bf16.msra.mxu0 %v2894
          %3420 = vmatprep.subr.bf16.mxu0 0
          %3421 = vmatpush2.bf16.msra.mxu0 0
          %3422 = vmatprep.subr.bf16.mxu0 0
          %3423 = vmatpush2.bf16.msra.mxu0 0
          %3424 = vmatprep.subr.bf16.mxu0 0
          %3425 = vmatpush2.bf16.msra.mxu0 0
          %3426 = vmatprep.subr.bf16.mxu0 0
          %3427 = vmatpush2.bf16.msra.mxu0 0
          %3428 = vmatprep.subr.bf16.mxu0 0
          %3429 = vmatpush2.bf16.msra.mxu0 0
          %3430 = vmatprep.subr.bf16.mxu0 0
          %3431 = vmatpush2.bf16.msra.mxu0 0
          %3432 = vmatprep.subr.bf16.mxu0 0
          %3433 = vmatpush2.bf16.msra.mxu0 0
          %3434 = vmatprep.subr.bf16.mxu0 0
          %3435 = vmatpush2.bf16.msra.mxu0 0
          %3436 = vmatprep.mubr.bf16.mxu0 0
          %3437 = vmatmul.mubr.bf16.gmra.mxu0 %v3025
          %v3438 = vpop.f32.mrf.mxu0
          %v3439 = vadd.f32 %v3398, %v3438
          %v3440 = vpop.f32.mrf.mxu0
          %v3441 = vadd.f32 %v3400, %v3440
          %v3442 = vpop.f32.mrf.mxu0
          %v3443 = vpop.f32.mrf.mxu0
          %3444 = vdwg.mxu0
          %3445 = vmatprep.subr.bf16.mxu0 %v2441
          %3446 = vmatpush1.bf16.msra.mxu0 %v2440
          %3447 = vmatprep.subr.bf16.mxu0 %v2433
          %3448 = vmatpush1.bf16.msra.mxu0 %v2432
          %3449 = vmatprep.subr.bf16.mxu0 %v2425
          %3450 = vmatpush1.bf16.msra.mxu0 %v2424
          %3451 = vmatprep.subr.bf16.mxu0 %v2417
          %3452 = vmatpush1.bf16.msra.mxu0 %v2416
          %3453 = vmatprep.subr.bf16.mxu0 %v2409
          %3454 = vmatpush1.bf16.msra.mxu0 %v2408
          %3455 = vmatprep.subr.bf16.mxu0 %v2401
          %3456 = vmatpush1.bf16.msra.mxu0 %v2400
          %3457 = vmatprep.subr.bf16.mxu0 %v2393
          %3458 = vmatpush1.bf16.msra.mxu0 %v2392
          %3459 = vmatprep.subr.bf16.mxu0 %v2385
          %3460 = vmatpush1.bf16.msra.mxu0 %v2384
          %3461 = vmatprep.subr.bf16.mxu0 %v2505
          %3462 = vmatpush2.bf16.msra.mxu0 %v2504
          %3463 = vmatprep.subr.bf16.mxu0 %v2497
          %3464 = vmatpush2.bf16.msra.mxu0 %v2496
          %3465 = vmatprep.subr.bf16.mxu0 %v2489
          %3466 = vmatpush2.bf16.msra.mxu0 %v2488
          %3467 = vmatprep.subr.bf16.mxu0 %v2481
          %3468 = vmatpush2.bf16.msra.mxu0 %v2480
          %3469 = vmatprep.subr.bf16.mxu0 %v2473
          %3470 = vmatpush2.bf16.msra.mxu0 %v2472
          %3471 = vmatprep.subr.bf16.mxu0 %v2465
          %3472 = vmatpush2.bf16.msra.mxu0 %v2464
          %3473 = vmatprep.subr.bf16.mxu0 %v2457
          %3474 = vmatpush2.bf16.msra.mxu0 %v2456
          %3475 = vmatprep.subr.bf16.mxu0 %v2449
          %3476 = vmatpush2.bf16.msra.mxu0 %v2448
          %3477 = vmatprep.mubr.bf16.mxu0 %v3000
          %3478 = vmatmul.mubr.bf16.gmra.mxu0 %v2986
          %v3479 = vpop.f32.mrf.mxu0
          %v3480 = vadd.f32 0.0, %v3479
          %v3481 = vpop.f32.mrf.mxu0
          %v3482 = vadd.f32 0.0, %v3481
          %v3483 = vpop.f32.mrf.mxu0
          %v3484 = vpop.f32.mrf.mxu0
          %3485 = vdwg.mxu0
          %3486 = vmatprep.subr.bf16.mxu0 %v2569
          %3487 = vmatpush1.bf16.msra.mxu0 %v2568
          %3488 = vmatprep.subr.bf16.mxu0 %v2561
          %3489 = vmatpush1.bf16.msra.mxu0 %v2560
          %3490 = vmatprep.subr.bf16.mxu0 %v2553
          %3491 = vmatpush1.bf16.msra.mxu0 %v2552
          %3492 = vmatprep.subr.bf16.mxu0 %v2545
          %3493 = vmatpush1.bf16.msra.mxu0 %v2544
          %3494 = vmatprep.subr.bf16.mxu0 %v2537
          %3495 = vmatpush1.bf16.msra.mxu0 %v2536
          %3496 = vmatprep.subr.bf16.mxu0 %v2529
          %3497 = vmatpush1.bf16.msra.mxu0 %v2528
          %3498 = vmatprep.subr.bf16.mxu0 %v2521
          %3499 = vmatpush1.bf16.msra.mxu0 %v2520
          %3500 = vmatprep.subr.bf16.mxu0 %v2513
          %3501 = vmatpush1.bf16.msra.mxu0 %v2512
          %3502 = vmatprep.subr.bf16.mxu0 %v2633
          %3503 = vmatpush2.bf16.msra.mxu0 %v2632
          %3504 = vmatprep.subr.bf16.mxu0 %v2625
          %3505 = vmatpush2.bf16.msra.mxu0 %v2624
          %3506 = vmatprep.subr.bf16.mxu0 %v2617
          %3507 = vmatpush2.bf16.msra.mxu0 %v2616
          %3508 = vmatprep.subr.bf16.mxu0 %v2609
          %3509 = vmatpush2.bf16.msra.mxu0 %v2608
          %3510 = vmatprep.subr.bf16.mxu0 %v2601
          %3511 = vmatpush2.bf16.msra.mxu0 %v2600
          %3512 = vmatprep.subr.bf16.mxu0 %v2593
          %3513 = vmatpush2.bf16.msra.mxu0 %v2592
          %3514 = vmatprep.subr.bf16.mxu0 %v2585
          %3515 = vmatpush2.bf16.msra.mxu0 %v2584
          %3516 = vmatprep.subr.bf16.mxu0 %v2577
          %3517 = vmatpush2.bf16.msra.mxu0 %v2576
          %3518 = vmatprep.mubr.bf16.mxu0 %v3010
          %3519 = vmatmul.mubr.bf16.gmra.mxu0 %v3008
          %v3520 = vpop.f32.mrf.mxu0
          %v3521 = vadd.f32 %v3480, %v3520
          %v3522 = vpop.f32.mrf.mxu0
          %v3523 = vadd.f32 %v3482, %v3522
          %v3524 = vpop.f32.mrf.mxu0
          %v3525 = vpop.f32.mrf.mxu0
          %3526 = vdwg.mxu0
          %3527 = vmatprep.subr.bf16.mxu0 %v2697
          %3528 = vmatpush1.bf16.msra.mxu0 %v2696
          %3529 = vmatprep.subr.bf16.mxu0 %v2689
          %3530 = vmatpush1.bf16.msra.mxu0 %v2688
          %3531 = vmatprep.subr.bf16.mxu0 %v2681
          %3532 = vmatpush1.bf16.msra.mxu0 %v2680
          %3533 = vmatprep.subr.bf16.mxu0 %v2673
          %3534 = vmatpush1.bf16.msra.mxu0 %v2672
          %3535 = vmatprep.subr.bf16.mxu0 %v2665
          %3536 = vmatpush1.bf16.msra.mxu0 %v2664
          %3537 = vmatprep.subr.bf16.mxu0 %v2657
          %3538 = vmatpush1.bf16.msra.mxu0 %v2656
          %3539 = vmatprep.subr.bf16.mxu0 %v2649
          %3540 = vmatpush1.bf16.msra.mxu0 %v2648
          %3541 = vmatprep.subr.bf16.mxu0 %v2641
          %3542 = vmatpush1.bf16.msra.mxu0 %v2640
          %3543 = vmatprep.subr.bf16.mxu0 %v2761
          %3544 = vmatpush2.bf16.msra.mxu0 %v2760
          %3545 = vmatprep.subr.bf16.mxu0 %v2753
          %3546 = vmatpush2.bf16.msra.mxu0 %v2752
          %3547 = vmatprep.subr.bf16.mxu0 %v2745
          %3548 = vmatpush2.bf16.msra.mxu0 %v2744
          %3549 = vmatprep.subr.bf16.mxu0 %v2737
          %3550 = vmatpush2.bf16.msra.mxu0 %v2736
          %3551 = vmatprep.subr.bf16.mxu0 %v2729
          %3552 = vmatpush2.bf16.msra.mxu0 %v2728
          %3553 = vmatprep.subr.bf16.mxu0 %v2721
          %3554 = vmatpush2.bf16.msra.mxu0 %v2720
          %3555 = vmatprep.subr.bf16.mxu0 %v2713
          %3556 = vmatpush2.bf16.msra.mxu0 %v2712
          %3557 = vmatprep.subr.bf16.mxu0 %v2705
          %3558 = vmatpush2.bf16.msra.mxu0 %v2704
          %3559 = vmatprep.mubr.bf16.mxu0 %v3007
          %3560 = vmatmul.mubr.bf16.gmra.mxu0 %v2993
          %v3561 = vpop.f32.mrf.mxu0
          %v3562 = vadd.f32 %v3521, %v3561
          %v3563 = vpop.f32.mrf.mxu0
          %v3564 = vadd.f32 %v3523, %v3563
          %v3565 = vpop.f32.mrf.mxu0
          %v3566 = vpop.f32.mrf.mxu0
          %3567 = vdwg.mxu0
          %3568 = vmatprep.subr.bf16.mxu0 %v2825
          %3569 = vmatpush1.bf16.msra.mxu0 %v2824
          %3570 = vmatprep.subr.bf16.mxu0 %v2817
          %3571 = vmatpush1.bf16.msra.mxu0 %v2816
          %3572 = vmatprep.subr.bf16.mxu0 %v2809
          %3573 = vmatpush1.bf16.msra.mxu0 %v2808
          %3574 = vmatprep.subr.bf16.mxu0 %v2801
          %3575 = vmatpush1.bf16.msra.mxu0 %v2800
          %3576 = vmatprep.subr.bf16.mxu0 %v2793
          %3577 = vmatpush1.bf16.msra.mxu0 %v2792
          %3578 = vmatprep.subr.bf16.mxu0 %v2785
          %3579 = vmatpush1.bf16.msra.mxu0 %v2784
          %3580 = vmatprep.subr.bf16.mxu0 %v2777
          %3581 = vmatpush1.bf16.msra.mxu0 %v2776
          %3582 = vmatprep.subr.bf16.mxu0 %v2769
          %3583 = vmatpush1.bf16.msra.mxu0 %v2768
          %3584 = vmatprep.subr.bf16.mxu0 %v2889
          %3585 = vmatpush2.bf16.msra.mxu0 %v2888
          %3586 = vmatprep.subr.bf16.mxu0 %v2881
          %3587 = vmatpush2.bf16.msra.mxu0 %v2880
          %3588 = vmatprep.subr.bf16.mxu0 %v2873
          %3589 = vmatpush2.bf16.msra.mxu0 %v2872
          %3590 = vmatprep.subr.bf16.mxu0 %v2865
          %3591 = vmatpush2.bf16.msra.mxu0 %v2864
          %3592 = vmatprep.subr.bf16.mxu0 %v2857
          %3593 = vmatpush2.bf16.msra.mxu0 %v2856
          %3594 = vmatprep.subr.bf16.mxu0 %v2849
          %3595 = vmatpush2.bf16.msra.mxu0 %v2848
          %3596 = vmatprep.subr.bf16.mxu0 %v2841
          %3597 = vmatpush2.bf16.msra.mxu0 %v2840
          %3598 = vmatprep.subr.bf16.mxu0 %v2833
          %3599 = vmatpush2.bf16.msra.mxu0 %v2832
          %3600 = vmatprep.mubr.bf16.mxu0 %v3011
          %3601 = vmatmul.mubr.bf16.gmra.mxu0 %v3009
          %v3602 = vpop.f32.mrf.mxu0
          %v3603 = vadd.f32 %v3562, %v3602
          %v3604 = vpop.f32.mrf.mxu0
          %v3605 = vadd.f32 %v3564, %v3604
          %v3606 = vpop.f32.mrf.mxu0
          %v3607 = vpop.f32.mrf.mxu0
          %3608 = vdwg.mxu0
          %3609 = vmatprep.subr.bf16.mxu0 %v2953
          %3610 = vmatpush1.bf16.msra.mxu0 %v2952
          %3611 = vmatprep.subr.bf16.mxu0 %v2945
          %3612 = vmatpush1.bf16.msra.mxu0 %v2944
          %3613 = vmatprep.subr.bf16.mxu0 %v2937
          %3614 = vmatpush1.bf16.msra.mxu0 %v2936
          %3615 = vmatprep.subr.bf16.mxu0 %v2929
          %3616 = vmatpush1.bf16.msra.mxu0 %v2928
          %3617 = vmatprep.subr.bf16.mxu0 %v2921
          %3618 = vmatpush1.bf16.msra.mxu0 %v2920
          %3619 = vmatprep.subr.bf16.mxu0 %v2913
          %3620 = vmatpush1.bf16.msra.mxu0 %v2912
          %3621 = vmatprep.subr.bf16.mxu0 %v2905
          %3622 = vmatpush1.bf16.msra.mxu0 %v2904
          %3623 = vmatprep.subr.bf16.mxu0 %v2897
          %3624 = vmatpush1.bf16.msra.mxu0 %v2896
          %3625 = vmatprep.subr.bf16.mxu0 0
          %3626 = vmatpush2.bf16.msra.mxu0 0
          %3627 = vmatprep.subr.bf16.mxu0 0
          %3628 = vmatpush2.bf16.msra.mxu0 0
          %3629 = vmatprep.subr.bf16.mxu0 0
          %3630 = vmatpush2.bf16.msra.mxu0 0
          %3631 = vmatprep.subr.bf16.mxu0 0
          %3632 = vmatpush2.bf16.msra.mxu0 0
          %3633 = vmatprep.subr.bf16.mxu0 0
          %3634 = vmatpush2.bf16.msra.mxu0 0
          %3635 = vmatprep.subr.bf16.mxu0 0
          %3636 = vmatpush2.bf16.msra.mxu0 0
          %3637 = vmatprep.subr.bf16.mxu0 0
          %3638 = vmatpush2.bf16.msra.mxu0 0
          %3639 = vmatprep.subr.bf16.mxu0 0
          %3640 = vmatpush2.bf16.msra.mxu0 0
          %3641 = vmatprep.mubr.bf16.mxu0 0
          %3642 = vmatmul.mubr.bf16.gmra.mxu0 %v3025
          %v3643 = vpop.f32.mrf.mxu0
          %v3644 = vadd.f32 %v3603, %v3643
          %v3645 = vpop.f32.mrf.mxu0
          %v3646 = vadd.f32 %v3605, %v3645
          %v3647 = vpop.f32.mrf.mxu0
          %v3648 = vpop.f32.mrf.mxu0
          %3649 = vdwg.mxu0
          %3650 = vmatprep.subr.bf16.mxu0 %v2443
          %3651 = vmatpush1.bf16.msra.mxu0 %v2442
          %3652 = vmatprep.subr.bf16.mxu0 %v2435
          %3653 = vmatpush1.bf16.msra.mxu0 %v2434
          %3654 = vmatprep.subr.bf16.mxu0 %v2427
          %3655 = vmatpush1.bf16.msra.mxu0 %v2426
          %3656 = vmatprep.subr.bf16.mxu0 %v2419
          %3657 = vmatpush1.bf16.msra.mxu0 %v2418
          %3658 = vmatprep.subr.bf16.mxu0 %v2411
          %3659 = vmatpush1.bf16.msra.mxu0 %v2410
          %3660 = vmatprep.subr.bf16.mxu0 %v2403
          %3661 = vmatpush1.bf16.msra.mxu0 %v2402
          %3662 = vmatprep.subr.bf16.mxu0 %v2395
          %3663 = vmatpush1.bf16.msra.mxu0 %v2394
          %3664 = vmatprep.subr.bf16.mxu0 %v2387
          %3665 = vmatpush1.bf16.msra.mxu0 %v2386
          %3666 = vmatprep.subr.bf16.mxu0 %v2507
          %3667 = vmatpush2.bf16.msra.mxu0 %v2506
          %3668 = vmatprep.subr.bf16.mxu0 %v2499
          %3669 = vmatpush2.bf16.msra.mxu0 %v2498
          %3670 = vmatprep.subr.bf16.mxu0 %v2491
          %3671 = vmatpush2.bf16.msra.mxu0 %v2490
          %3672 = vmatprep.subr.bf16.mxu0 %v2483
          %3673 = vmatpush2.bf16.msra.mxu0 %v2482
          %3674 = vmatprep.subr.bf16.mxu0 %v2475
          %3675 = vmatpush2.bf16.msra.mxu0 %v2474
          %3676 = vmatprep.subr.bf16.mxu0 %v2467
          %3677 = vmatpush2.bf16.msra.mxu0 %v2466
          %3678 = vmatprep.subr.bf16.mxu0 %v2459
          %3679 = vmatpush2.bf16.msra.mxu0 %v2458
          %3680 = vmatprep.subr.bf16.mxu0 %v2451
          %3681 = vmatpush2.bf16.msra.mxu0 %v2450
          %3682 = vmatprep.mubr.bf16.mxu0 %v3000
          %3683 = vmatmul.mubr.bf16.gmra.mxu0 %v2986
          %v3684 = vpop.f32.mrf.mxu0
          %v3685 = vadd.f32 0.0, %v3684
          %v3686 = vpop.f32.mrf.mxu0
          %v3687 = vadd.f32 0.0, %v3686
          %v3688 = vpop.f32.mrf.mxu0
          %v3689 = vpop.f32.mrf.mxu0
          %3690 = vdwg.mxu0
          %3691 = vmatprep.subr.bf16.mxu0 %v2571
          %3692 = vmatpush1.bf16.msra.mxu0 %v2570
          %3693 = vmatprep.subr.bf16.mxu0 %v2563
          %3694 = vmatpush1.bf16.msra.mxu0 %v2562
          %3695 = vmatprep.subr.bf16.mxu0 %v2555
          %3696 = vmatpush1.bf16.msra.mxu0 %v2554
          %3697 = vmatprep.subr.bf16.mxu0 %v2547
          %3698 = vmatpush1.bf16.msra.mxu0 %v2546
          %3699 = vmatprep.subr.bf16.mxu0 %v2539
          %3700 = vmatpush1.bf16.msra.mxu0 %v2538
          %3701 = vmatprep.subr.bf16.mxu0 %v2531
          %3702 = vmatpush1.bf16.msra.mxu0 %v2530
          %3703 = vmatprep.subr.bf16.mxu0 %v2523
          %3704 = vmatpush1.bf16.msra.mxu0 %v2522
          %3705 = vmatprep.subr.bf16.mxu0 %v2515
          %3706 = vmatpush1.bf16.msra.mxu0 %v2514
          %3707 = vmatprep.subr.bf16.mxu0 %v2635
          %3708 = vmatpush2.bf16.msra.mxu0 %v2634
          %3709 = vmatprep.subr.bf16.mxu0 %v2627
          %3710 = vmatpush2.bf16.msra.mxu0 %v2626
          %3711 = vmatprep.subr.bf16.mxu0 %v2619
          %3712 = vmatpush2.bf16.msra.mxu0 %v2618
          %3713 = vmatprep.subr.bf16.mxu0 %v2611
          %3714 = vmatpush2.bf16.msra.mxu0 %v2610
          %3715 = vmatprep.subr.bf16.mxu0 %v2603
          %3716 = vmatpush2.bf16.msra.mxu0 %v2602
          %3717 = vmatprep.subr.bf16.mxu0 %v2595
          %3718 = vmatpush2.bf16.msra.mxu0 %v2594
          %3719 = vmatprep.subr.bf16.mxu0 %v2587
          %3720 = vmatpush2.bf16.msra.mxu0 %v2586
          %3721 = vmatprep.subr.bf16.mxu0 %v2579
          %3722 = vmatpush2.bf16.msra.mxu0 %v2578
          %3723 = vmatprep.mubr.bf16.mxu0 %v3010
          %3724 = vmatmul.mubr.bf16.gmra.mxu0 %v3008
          %v3725 = vpop.f32.mrf.mxu0
          %v3726 = vadd.f32 %v3685, %v3725
          %v3727 = vpop.f32.mrf.mxu0
          %v3728 = vadd.f32 %v3687, %v3727
          %v3729 = vpop.f32.mrf.mxu0
          %v3730 = vpop.f32.mrf.mxu0
          %3731 = vdwg.mxu0
          %3732 = vmatprep.subr.bf16.mxu0 %v2699
          %3733 = vmatpush1.bf16.msra.mxu0 %v2698
          %3734 = vmatprep.subr.bf16.mxu0 %v2691
          %3735 = vmatpush1.bf16.msra.mxu0 %v2690
          %3736 = vmatprep.subr.bf16.mxu0 %v2683
          %3737 = vmatpush1.bf16.msra.mxu0 %v2682
          %3738 = vmatprep.subr.bf16.mxu0 %v2675
          %3739 = vmatpush1.bf16.msra.mxu0 %v2674
          %3740 = vmatprep.subr.bf16.mxu0 %v2667
          %3741 = vmatpush1.bf16.msra.mxu0 %v2666
          %3742 = vmatprep.subr.bf16.mxu0 %v2659
          %3743 = vmatpush1.bf16.msra.mxu0 %v2658
          %3744 = vmatprep.subr.bf16.mxu0 %v2651
          %3745 = vmatpush1.bf16.msra.mxu0 %v2650
          %3746 = vmatprep.subr.bf16.mxu0 %v2643
          %3747 = vmatpush1.bf16.msra.mxu0 %v2642
          %3748 = vmatprep.subr.bf16.mxu0 %v2763
          %3749 = vmatpush2.bf16.msra.mxu0 %v2762
          %3750 = vmatprep.subr.bf16.mxu0 %v2755
          %3751 = vmatpush2.bf16.msra.mxu0 %v2754
          %3752 = vmatprep.subr.bf16.mxu0 %v2747
          %3753 = vmatpush2.bf16.msra.mxu0 %v2746
          %3754 = vmatprep.subr.bf16.mxu0 %v2739
          %3755 = vmatpush2.bf16.msra.mxu0 %v2738
          %3756 = vmatprep.subr.bf16.mxu0 %v2731
          %3757 = vmatpush2.bf16.msra.mxu0 %v2730
          %3758 = vmatprep.subr.bf16.mxu0 %v2723
          %3759 = vmatpush2.bf16.msra.mxu0 %v2722
          %3760 = vmatprep.subr.bf16.mxu0 %v2715
          %3761 = vmatpush2.bf16.msra.mxu0 %v2714
          %3762 = vmatprep.subr.bf16.mxu0 %v2707
          %3763 = vmatpush2.bf16.msra.mxu0 %v2706
          %3764 = vmatprep.mubr.bf16.mxu0 %v3007
          %3765 = vmatmul.mubr.bf16.gmra.mxu0 %v2993
          %v3766 = vpop.f32.mrf.mxu0
          %v3767 = vadd.f32 %v3726, %v3766
          %v3768 = vpop.f32.mrf.mxu0
          %v3769 = vadd.f32 %v3728, %v3768
          %v3770 = vpop.f32.mrf.mxu0
          %v3771 = vpop.f32.mrf.mxu0
          %3772 = vdwg.mxu0
          %3773 = vmatprep.subr.bf16.mxu0 %v2827
          %3774 = vmatpush1.bf16.msra.mxu0 %v2826
          %3775 = vmatprep.subr.bf16.mxu0 %v2819
          %3776 = vmatpush1.bf16.msra.mxu0 %v2818
          %3777 = vmatprep.subr.bf16.mxu0 %v2811
          %3778 = vmatpush1.bf16.msra.mxu0 %v2810
          %3779 = vmatprep.subr.bf16.mxu0 %v2803
          %3780 = vmatpush1.bf16.msra.mxu0 %v2802
          %3781 = vmatprep.subr.bf16.mxu0 %v2795
          %3782 = vmatpush1.bf16.msra.mxu0 %v2794
          %3783 = vmatprep.subr.bf16.mxu0 %v2787
          %3784 = vmatpush1.bf16.msra.mxu0 %v2786
          %3785 = vmatprep.subr.bf16.mxu0 %v2779
          %3786 = vmatpush1.bf16.msra.mxu0 %v2778
          %3787 = vmatprep.subr.bf16.mxu0 %v2771
          %3788 = vmatpush1.bf16.msra.mxu0 %v2770
          %3789 = vmatprep.subr.bf16.mxu0 %v2891
          %3790 = vmatpush2.bf16.msra.mxu0 %v2890
          %3791 = vmatprep.subr.bf16.mxu0 %v2883
          %3792 = vmatpush2.bf16.msra.mxu0 %v2882
          %3793 = vmatprep.subr.bf16.mxu0 %v2875
          %3794 = vmatpush2.bf16.msra.mxu0 %v2874
          %3795 = vmatprep.subr.bf16.mxu0 %v2867
          %3796 = vmatpush2.bf16.msra.mxu0 %v2866
          %3797 = vmatprep.subr.bf16.mxu0 %v2859
          %3798 = vmatpush2.bf16.msra.mxu0 %v2858
          %3799 = vmatprep.subr.bf16.mxu0 %v2851
          %3800 = vmatpush2.bf16.msra.mxu0 %v2850
          %3801 = vmatprep.subr.bf16.mxu0 %v2843
          %3802 = vmatpush2.bf16.msra.mxu0 %v2842
          %3803 = vmatprep.subr.bf16.mxu0 %v2835
          %3804 = vmatpush2.bf16.msra.mxu0 %v2834
          %3805 = vmatprep.mubr.bf16.mxu0 %v3011
          %3806 = vmatmul.mubr.bf16.gmra.mxu0 %v3009
          %v3807 = vpop.f32.mrf.mxu0
          %v3808 = vadd.f32 %v3767, %v3807
          %v3809 = vpop.f32.mrf.mxu0
          %v3810 = vadd.f32 %v3769, %v3809
          %v3811 = vpop.f32.mrf.mxu0
          %v3812 = vpop.f32.mrf.mxu0
          %3813 = vdwg.mxu0
          %3814 = vmatprep.subr.bf16.mxu0 %v2955
          %3815 = vmatpush1.bf16.msra.mxu0 %v2954
          %3816 = vmatprep.subr.bf16.mxu0 %v2947
          %3817 = vmatpush1.bf16.msra.mxu0 %v2946
          %3818 = vmatprep.subr.bf16.mxu0 %v2939
          %3819 = vmatpush1.bf16.msra.mxu0 %v2938
          %3820 = vmatprep.subr.bf16.mxu0 %v2931
          %3821 = vmatpush1.bf16.msra.mxu0 %v2930
          %3822 = vmatprep.subr.bf16.mxu0 %v2923
          %3823 = vmatpush1.bf16.msra.mxu0 %v2922
          %3824 = vmatprep.subr.bf16.mxu0 %v2915
          %3825 = vmatpush1.bf16.msra.mxu0 %v2914
          %3826 = vmatprep.subr.bf16.mxu0 %v2907
          %3827 = vmatpush1.bf16.msra.mxu0 %v2906
          %3828 = vmatprep.subr.bf16.mxu0 %v2899
          %3829 = vmatpush1.bf16.msra.mxu0 %v2898
          %3830 = vmatprep.subr.bf16.mxu0 0
          %3831 = vmatpush2.bf16.msra.mxu0 0
          %3832 = vmatprep.subr.bf16.mxu0 0
          %3833 = vmatpush2.bf16.msra.mxu0 0
          %3834 = vmatprep.subr.bf16.mxu0 0
          %3835 = vmatpush2.bf16.msra.mxu0 0
          %3836 = vmatprep.subr.bf16.mxu0 0
          %3837 = vmatpush2.bf16.msra.mxu0 0
          %3838 = vmatprep.subr.bf16.mxu0 0
          %3839 = vmatpush2.bf16.msra.mxu0 0
          %3840 = vmatprep.subr.bf16.mxu0 0
          %3841 = vmatpush2.bf16.msra.mxu0 0
          %3842 = vmatprep.subr.bf16.mxu0 0
          %3843 = vmatpush2.bf16.msra.mxu0 0
          %3844 = vmatprep.subr.bf16.mxu0 0
          %3845 = vmatpush2.bf16.msra.mxu0 0
          %3846 = vmatprep.mubr.bf16.mxu0 0
          %3847 = vmatmul.mubr.bf16.gmra.mxu0 %v3025
          %v3848 = vpop.f32.mrf.mxu0
          %v3849 = vadd.f32 %v3808, %v3848
          %v3850 = vpop.f32.mrf.mxu0
          %v3851 = vadd.f32 %v3810, %v3850
          %v3852 = vpop.f32.mrf.mxu0
          %v3853 = vpop.f32.mrf.mxu0
          %3854 = vdwg.mxu0
          %v3855 = vadd.f32 %v2078, %v3234
          %v3856 = vadd.f32 %v2079, %v3236
          %v3857 = vadd.f32 %v2080, %v3439
          %v3858 = vadd.f32 %v2081, %v3441
          %v3859 = vadd.f32 %v2082, %v3644
          %v3860 = vadd.f32 %v2083, %v3646
          %v3861 = vadd.f32 %v2084, %v3849
          %v3862 = vadd.f32 %v2085, %v3851
        $region69: #{net_forward.2} parent=43 // loop_footer
          %s2077 = sadd.s32 1, %s2073
        $region70: #{net_forward.2} parent=43 // loop_footer_branch
          %2072 = sbr.rel target = $region66
        $region71: #{net_forward.2} parent=43 // loop_exit
          _
        %v3863 = vld [vmem:[%s314] sm:$0xff]
        %v3865 = vlaneseq
        %v3866 = vshrl.u32 %v3865, 7
        %v3867 = vsub.s32 0, %v3866
        %v3868 = vrot.slane %v3863, %v3867
        %v3869 = vlaneseq
        %v3870 = vshrl.u32 %v3869, 7
        %v3871 = vsub.s32 1, %v3870
        %v3872 = vrot.slane %v3863, %v3871
        %v3873 = vlaneseq
        %v3874 = vshrl.u32 %v3873, 7
        %v3875 = vsub.s32 2, %v3874
        %v3876 = vrot.slane %v3863, %v3875
        %v3877 = vlaneseq
        %v3878 = vshrl.u32 %v3877, 7
        %v3879 = vsub.s32 3, %v3878
        %v3880 = vrot.slane %v3863, %v3879
        %v3881 = vlaneseq
        %v3882 = vshrl.u32 %v3881, 7
        %v3883 = vsub.s32 4, %v3882
        %v3884 = vrot.slane %v3863, %v3883
        %v3885 = vlaneseq
        %v3886 = vshrl.u32 %v3885, 7
        %v3887 = vsub.s32 5, %v3886
        %v3888 = vrot.slane %v3863, %v3887
        %v3889 = vlaneseq
        %v3890 = vshrl.u32 %v3889, 7
        %v3891 = vsub.s32 6, %v3890
        %v3892 = vrot.slane %v3863, %v3891
        %v3893 = vlaneseq
        %v3894 = vshrl.u32 %v3893, 7
        %v3895 = vsub.s32 7, %v3894
        %v3896 = vrot.slane %v3863, %v3895
        %v3905 = vmul.f32 %v2078, %v3868
        %v3906 = vmul.f32 %v2079, %v3872
        %v3907 = vmul.f32 %v2080, %v3876
        %v3908 = vmul.f32 %v2081, %v3880
        %v3909 = vmul.f32 %v2082, %v3884
        %v3910 = vmul.f32 %v2083, %v3888
        %v3911 = vmul.f32 %v2084, %v3892
        %v3912 = vmul.f32 %v2085, %v3896
        %v3913 = vld [vmem:[%s323] sm:$0xff]
        %v3915 = vlaneseq
        %v3916 = vshrl.u32 %v3915, 7
        %v3917 = vsub.s32 0, %v3916
        %v3918 = vrot.slane %v3913, %v3917
        %v3919 = vlaneseq
        %v3920 = vshrl.u32 %v3919, 7
        %v3921 = vsub.s32 1, %v3920
        %v3922 = vrot.slane %v3913, %v3921
        %v3923 = vlaneseq
        %v3924 = vshrl.u32 %v3923, 7
        %v3925 = vsub.s32 2, %v3924
        %v3926 = vrot.slane %v3913, %v3925
        %v3927 = vlaneseq
        %v3928 = vshrl.u32 %v3927, 7
        %v3929 = vsub.s32 3, %v3928
        %v3930 = vrot.slane %v3913, %v3929
        %v3931 = vlaneseq
        %v3932 = vshrl.u32 %v3931, 7
        %v3933 = vsub.s32 4, %v3932
        %v3934 = vrot.slane %v3913, %v3933
        %v3935 = vlaneseq
        %v3936 = vshrl.u32 %v3935, 7
        %v3937 = vsub.s32 5, %v3936
        %v3938 = vrot.slane %v3913, %v3937
        %v3939 = vlaneseq
        %v3940 = vshrl.u32 %v3939, 7
        %v3941 = vsub.s32 6, %v3940
        %v3942 = vrot.slane %v3913, %v3941
        %v3943 = vlaneseq
        %v3944 = vshrl.u32 %v3943, 7
        %v3945 = vsub.s32 7, %v3944
        %v3946 = vrot.slane %v3913, %v3945
        %v3955 = vadd.f32 %v3905, %v3918
        %v3956 = vadd.f32 %v3906, %v3922
        %v3957 = vadd.f32 %v3907, %v3926
        %v3958 = vadd.f32 %v3908, %v3930
        %v3959 = vadd.f32 %v3909, %v3934
        %v3960 = vadd.f32 %v3910, %v3938
        %v3961 = vadd.f32 %v3911, %v3942
        %v3962 = vadd.f32 %v3912, %v3946
        %v3963 = vmax.f32 %v3955, 0.0
        %v3964 = vmax.f32 %v3956, 0.0
        %v3965 = vmax.f32 %v3957, 0.0
        %v3966 = vmax.f32 %v3958, 0.0
        %v3967 = vmax.f32 %v3959, 0.0
        %v3968 = vmax.f32 %v3960, 0.0
        %v3969 = vmax.f32 %v3961, 0.0
        %v3970 = vmax.f32 %v3962, 0.0
        %v3971 = vpack.c.bf16 %v3963, %v3963
        %v3972 = vpack.c.bf16 %v3964, %v3964
        %v3973 = vpack.c.bf16 %v3965, %v3965
        %v3974 = vpack.c.bf16 %v3966, %v3966
        %v3975 = vpack.c.bf16 %v3967, %v3967
        %v3976 = vpack.c.bf16 %v3968, %v3968
        %v3977 = vpack.c.bf16 %v3969, %v3969
        %v3978 = vpack.c.bf16 %v3970, %v3970
        %v3987 = vcombine.low %v3971, %v3972
        %v3988 = vcombine.low %v3973, %v3974
        %v3989 = vcombine.low %v3975, %v3976
        %v3990 = vcombine.low %v3977, %v3978
        %v3992 = vunpack.c.l.s4 1966171168
        %v3993 = vunpack.c.0.s8 %v3992
        %v3994 = vlaneseq
        %v3995 = vshrl.u32 %v3994, 7
        %v3996 = vsub.s32 %v3993, %v3995
        %v3997 = vrot.slane %v3987, %v3996
        %v3999 = vunpack.c.l.s4 1966171168
        %v4000 = vunpack.c.0.s8 %v3999
        %v4001 = vlaneseq
        %v4002 = vshrl.u32 %v4001, 7
        %v4003 = vsub.s32 %v4000, %v4002
        %v4004 = vrot.slane %v3988, %v4003
        %v4006 = vunpack.c.l.s4 1966171168
        %v4007 = vunpack.c.0.s8 %v4006
        %v4008 = vlaneseq
        %v4009 = vshrl.u32 %v4008, 7
        %v4010 = vsub.s32 %v4007, %v4009
        %v4011 = vrot.slane %v3989, %v4010
        %v4013 = vunpack.c.l.s4 1966171168
        %v4014 = vunpack.c.0.s8 %v4013
        %v4015 = vlaneseq
        %v4016 = vshrl.u32 %v4015, 7
        %v4017 = vsub.s32 %v4014, %v4016
        %v4018 = vrot.slane %v3990, %v4017
        %v4019 = vcombine.low %v3997, %v4004
        %v4020 = vcombine.low %v4011, %v4018
        %v4022 = vunpack.c.l.s4 1966171168
        %v4023 = vunpack.c.0.s8 %v4022
        %v4024 = vlaneseq
        %v4025 = vshrl.u32 %v4024, 7
        %v4026 = vsub.s32 %v4023, %v4025
        %v4027 = vrot.slane %v4019, %v4026
        %v4029 = vunpack.c.l.s4 1966171168
        %v4030 = vunpack.c.0.s8 %v4029
        %v4031 = vlaneseq
        %v4032 = vshrl.u32 %v4031, 7
        %v4033 = vsub.s32 %v4030, %v4032
        %v4034 = vrot.slane %v4020, %v4033
        %v4035 = vcombine.low %v4027, %v4034
        %4037 = vst [vmem:[%s366] sm:$0xff] %v4035
        %s4038 = smul.u32 8, %s19
        %p4039 = scmp.lt.s32.totalorder %s4038, 15
        %s4040 = scalar_select %p4039, %s4038, 15
        %s4041 = scalar_lea.vmem %s6, %s4040
        // Predicated region
        $region72: #{net_forward.2} parent=43 // pred_check
          %p4042 = pneg %p178
        $region73: #{net_forward.2} parent=43 // pred_check_branch
          %4044 = sbr.rel (%p4042) target = $region75
        $region74: #{net_forward.2} parent=43 // pred_region
          %s4045 = smul.u32 8, %s19
        $region75: #{net_forward.2} parent=43 // pred_fallthru
          _
      $region44: #{net_forward.2} parent=5 // pred_fallthru
        _
      %p4046 = scmp.le.s32.totalorder 2, %s14
      // Predicated region
      $region76: #{net_forward.2} parent=5 // pred_check
        %p4047 = pneg %p4046
      $region77: #{net_forward.2} parent=5 // pred_check_branch
        %4049 = sbr.rel (%p4047) target = $region79
      $region78: #{net_forward.2} parent=5 // pred_region
        %s4050 = ssub.s32 %s14, 2
        // Predicated region
        $region80: #{net_forward.2} parent=78 // pred_check
          %p4051 = pneg %p184
        $region81: #{net_forward.2} parent=78 // pred_check_branch
          %4053 = sbr.rel (%p4051) target = $region83
        $region82: #{net_forward.2} parent=78 // pred_region
          %s4054 = smul.u32 8, %s20
          %p4055 = scmp.lt.s32.totalorder %s4054, 15
          %s4056 = scalar_select %p4055, %s4054, 15
          %s4057 = scalar_lea.vmem %s6, %s4056
        $region83: #{net_forward.2} parent=78 // pred_fallthru
          _
      $region79: #{net_forward.2} parent=5 // pred_fallthru
        _
    $region6: #{net_forward.2} parent=1 // loop_footer
      %s18 = sadd.s32 1, %s14
    $region7: #{net_forward.2} parent=1 // loop_footer_branch
      %13 = sbr.rel target = $region3
    $region8: #{net_forward.2} parent=1 // loop_exit
      _
    %4058 = vsyncpa [#allocation4], 1
    %s4059 = scalar_lea.sflag [#allocation4], 1
    %4060 = vsyncpa %s4059, 1
    %4061 = vsyncpa [#allocation6], 1

</llo_original>
